<compile_context>
chip_gen: v7x
topology: tpu7x:2x2x1
jax: 0.10.0
libtpu: 0.0.40
codegen_flags: <defaults>
</compile_context>

<pallas_src>
import functools

import jax
import jax.numpy as jnp
from jax import lax
from jax.experimental import pallas as pl
from jax.experimental.pallas import tpu as pltpu


# ----------------------------------------------------------------------------
# Helpers
# ----------------------------------------------------------------------------
def _round_up(x, m):
    return (x + m - 1) // m * m


def _pick_tile(padded_dim, candidates):
    """Largest candidate tile that divides padded_dim (padded_dim % 128 == 0)."""
    for t in candidates:
        if padded_dim % t == 0:
            return t
    return padded_dim


# ----------------------------------------------------------------------------
# Pallas kernel: tiled (X @ W) + shift, optional ReLU, f32 VMEM accumulator
# ----------------------------------------------------------------------------
def _matmul_shift_kernel(x_ref, w_ref, shift_ref, o_ref, acc_ref, *, apply_relu):
    @pl.when(pl.program_id(2) == 0)
    def _init():
        acc_ref[...] = jnp.zeros_like(acc_ref)

    acc_ref[...] += jnp.dot(
        x_ref[...], w_ref[...], preferred_element_type=jnp.float32
    )

    @pl.when(pl.program_id(2) == pl.num_programs(2) - 1)
    def _epilogue():
        y = acc_ref[...] + shift_ref[...]      # folded BN shift (or bias)
        if apply_relu:
            y = jnp.maximum(y, 0.0)
        o_ref[...] = y.astype(o_ref.dtype)


def fused_matmul_shift_relu(x2d, w2d, shift, *, apply_relu, out_dtype):
    """y = maybe_relu(x2d @ w2d + shift).

    x2d: (M, K)  -> cast to bf16
    w2d: (K, N)  -> BN scale already folded in; cast to bf16
    shift: (N,)  -> float32
    Returns (M, N) in out_dtype.
    """
    M, K = x2d.shape
    K2, N = w2d.shape
    assert K == K2

    # Pad every dim to a multiple of 128: lane-dense stores on N, (8,128)-clean
    # loads on M/K, and MXU-friendly tiles. Zero padding is exact for matmul.
    Mp = _round_up(M, 128)
    Kp = _round_up(K, 128)
    Np = _round_up(N, 128)
    tm = _pick_tile(Mp, (512, 256, 128))
    tk = _pick_tile(Kp, (512, 256, 128))
    tn = _pick_tile(Np, (256, 128))

    xp = jnp.pad(x2d.astype(jnp.bfloat16), ((0, Mp - M), (0, Kp - K)))
    wp = jnp.pad(w2d.astype(jnp.bfloat16), ((0, Kp - K), (0, Np - N)))
    sp = jnp.pad(shift.astype(jnp.float32), (0, Np - N)).reshape(1, Np)

    grid = (Mp // tm, Np // tn, Kp // tk)
    kern = functools.partial(_matmul_shift_kernel, apply_relu=apply_relu)
    out_bytes = jnp.dtype(out_dtype).itemsize

    out = pl.pallas_call(
        kern,
        out_shape=jax.ShapeDtypeStruct((Mp, Np), out_dtype),
        grid_spec=pltpu.PrefetchScalarGridSpec(
            num_scalar_prefetch=0,
            grid=grid,
            in_specs=[
                pl.BlockSpec((tm, tk), lambda i, j, k: (i, k)),
                pl.BlockSpec((tk, tn), lambda i, j, k: (k, j)),
                pl.BlockSpec((1, tn), lambda i, j, k: (0, j)),
            ],
            out_specs=pl.BlockSpec((tm, tn), lambda i, j, k: (i, j)),
            scratch_shapes=[pltpu.VMEM((tm, tn), jnp.float32)],
        ),
        compiler_params=pltpu.CompilerParams(
            dimension_semantics=("parallel", "parallel", "arbitrary"),
            vmem_limit_bytes=64 * 1024 * 1024,
        ),
        cost_estimate=pl.CostEstimate(
            flops=2 * Mp * Np * Kp,
            transcendentals=0,
            bytes_accessed=Mp * Kp * 2 + Kp * Np * 2 + Mp * Np * out_bytes,
        ),
    )(xp, wp, sp)
    return out[:M, :N]


# ----------------------------------------------------------------------------
# Glue: im2col for 3x3 / stride 2 / pad 1 conv (NHWC, bf16)
# ----------------------------------------------------------------------------
def im2col_s2p1k3(x_nhwc):
    B, H, W, C = x_nhwc.shape
    Ho, Wo = H // 2, W // 2
    xp = jnp.pad(x_nhwc, ((0, 0), (1, 1), (1, 1), (0, 0)))
    cols = []
    for kh in range(3):
        for kw in range(3):
            cols.append(xp[:, kh:kh + 2 * Ho:2, kw:kw + 2 * Wo:2, :])  # (B,Ho,Wo,C)
    patches = jnp.stack(cols, axis=3)                                  # (B,Ho,Wo,9,C)
    return patches.reshape(B * Ho * Wo, 9 * C), (B, Ho, Wo)


# ----------------------------------------------------------------------------
# Parameter init (deterministic, matches PyTorch module's shapes)
# ----------------------------------------------------------------------------
def init_convstem_params(key, embed_dim):
    assert embed_dim % 8 == 0
    stem = []
    cin, cout = 3, embed_dim // 8
    keys = jax.random.split(key, 14)
    ki = 0
    for _ in range(4):
        w = 0.1 * jax.random.normal(keys[ki], (cout, cin, 3, 3), jnp.float32); ki += 1
        gamma = 1.0 + 0.1 * jax.random.normal(keys[ki], (cout,), jnp.float32); ki += 1
        beta = 0.1 * jax.random.normal(keys[ki], (cout,), jnp.float32); ki += 1
        stem.append(dict(
            w=w, gamma=gamma, beta=beta,
            mean=jnp.zeros((cout,), jnp.float32),
            var=jnp.ones((cout,), jnp.float32),
        ))
        cin, cout = cout, cout * 2
    proj_w = 0.1 * jax.random.normal(keys[ki], (embed_dim, cin, 1, 1), jnp.float32); ki += 1
    proj_b = 0.01 * jax.random.normal(keys[ki], (embed_dim,), jnp.float32)
    return dict(stem=stem, proj_w=proj_w, proj_b=proj_b)


# ----------------------------------------------------------------------------
# ConvStem forward (Pallas path)
# ----------------------------------------------------------------------------
def convstem_forward(x_nchw, params, embed_dim, img_size, flatten=True):
    B, C, H, W = x_nchw.shape
    assert H == img_size and W == img_size, "Input image size doesn't match model."
    eps = 1e-5
    # NCHW -> NHWC once at the boundary; all internal activations in bf16.
    x = jnp.transpose(x_nchw, (0, 2, 3, 1)).astype(jnp.bfloat16)

    for layer in params["stem"]:
        cols, (b, ho, wo) = im2col_s2p1k3(x)
        cout = layer["w"].shape[0]
        # (Cout, Cin, 3, 3) -> (kh, kw, Cin, Cout) -> (9*Cin, Cout)
        w2d = jnp.transpose(layer["w"], (2, 3, 1, 0)).reshape(-1, cout)
        scale = layer["gamma"] / jnp.sqrt(layer["var"] + eps)
        shift = layer["beta"] - layer["mean"] * scale
        w2d = w2d * scale[None, :]          # fold BN scale into weights (f32)
        y = fused_matmul_shift_relu(cols, w2d, shift,
                                    apply_relu=True, out_dtype=jnp.bfloat16)
        x = y.reshape(b, ho, wo, cout)

    # final 1x1 conv with bias (no BN / ReLU), f32 output
    Bf, Hf, Wf, Cf = x.shape
    w2d = jnp.transpose(params["proj_w"][:, :, 0, 0], (1, 0))  # (Cf, embed_dim)
    y = fused_matmul_shift_relu(x.reshape(Bf * Hf * Wf, Cf), w2d, params["proj_b"],
                                apply_relu=False, out_dtype=jnp.float32)
    out = y.reshape(Bf, Hf * Wf, embed_dim)  # == flatten(2).transpose(1,2)
    # norm_layer=None -> nn.Identity
    if not flatten:
        out = jnp.transpose(out.reshape(Bf, Hf, Wf, embed_dim), (0, 3, 1, 2))
    return out


# ----------------------------------------------------------------------------
# Pure-JAX f32 reference (for the correctness check)
# ----------------------------------------------------------------------------
def convstem_ref(x_nchw, params, embed_dim):
    eps = 1e-5
    x = x_nchw
    for layer in params["stem"]:
        x = lax.conv_general_dilated(x, layer["w"], (2, 2), ((1, 1), (1, 1)),
                                     dimension_numbers=("NCHW", "OIHW", "NCHW"))
        scale = layer["gamma"] / jnp.sqrt(layer["var"] + eps)
        shift = layer["beta"] - layer["mean"] * scale
        x = jnp.maximum(x * scale[None, :, None, None] + shift[None, :, None, None], 0.0)
    x = lax.conv_general_dilated(x, params["proj_w"], (1, 1), ((0, 0), (0, 0)),
                                 dimension_numbers=("NCHW", "OIHW", "NCHW"))
    x = x + params["proj_b"][None, :, None, None]
    B, C, H, W = x.shape
    return jnp.transpose(x.reshape(B, C, H * W), (0, 2, 1))


if __name__ == "__main__":
    # Small shapes consistent with the module: patch_size is fixed at 16, so
    # img_size must be a multiple of 16; in_chans is hard-wired to 3.
    B, IN_CHANS, IMG = 2, 3, 32
    EMBED_DIM = 64  # divisible by 8

    root = jax.random.PRNGKey(0)
    k_x, k_p = jax.random.split(root)
    x = jax.random.normal(k_x, (B, IN_CHANS, IMG, IMG), jnp.float32)
    params = init_convstem_params(k_p, EMBED_DIM)

    fwd = jax.jit(functools.partial(convstem_forward,
                                    embed_dim=EMBED_DIM, img_size=IMG))
    out = jax.block_until_ready(fwd(x, params))

    expected_patches = (IMG // 16) * (IMG // 16)
    assert out.shape == (B, expected_patches, EMBED_DIM), out.shape

    ref = jax.block_until_ready(convstem_ref(x, params, EMBED_DIM))
    # bf16 activations/weights through 5 layers -> allow ~5% of output scale.
    max_ref = float(jnp.maximum(1.0, jnp.max(jnp.abs(ref))))
    err = float(jnp.max(jnp.abs(out - ref)))
    assert err < 5e-2 * max_ref, (err, 5e-2 * max_ref)

    print("KERNEL_OK")
</pallas_src>

<mosaic_0001>
module attributes {stable_mosaic.version = 11 : i64} {
  func.func @_matmul_shift_kernel(%arg0: i32, %arg1: i32, %arg2: i32, %arg3: memref<512x128xbf16, #tpu.memory_space<vmem>>, %arg4: memref<128x128xbf16, #tpu.memory_space<vmem>>, %arg5: memref<1x128xf32, #tpu.memory_space<vmem>>, %arg6: memref<512x128xbf16, #tpu.memory_space<vmem>>, %arg7: memref<512x128xf32, #tpu.memory_space<vmem>>) attributes {dimension_semantics = [#tpu.dimension_semantics<parallel>, #tpu.dimension_semantics<parallel>, #tpu.dimension_semantics<arbitrary>], iteration_bounds = array<i64: 1, 1, 1>, scalar_prefetch = 0 : i64, scratch_operands = 1 : i64, tpu.core_type = #tpu.core_type<tc>, window_params = [{transform_indices = @transform_0, window_bounds = array<i64: 512, 128>}, {transform_indices = @transform_1, window_bounds = array<i64: 128, 128>}, {transform_indices = @transform_2, window_bounds = array<i64: 1, 128>}, {transform_indices = @transform_3, window_bounds = array<i64: 512, 128>}]} {
    %c0_i32 = arith.constant 0 : i32
    %0 = arith.cmpi eq, %arg2, %c0_i32 : i32
    %1 = arith.extui %0 : i1 to i32
    %c0_i32_0 = arith.constant 0 : i32
    %2 = arith.cmpi ne, %1, %c0_i32_0 : i32
    scf.if %2 {
      %cst_10 = arith.constant 0.000000e+00 : f32
      %12 = vector.broadcast %cst_10 : f32 to vector<512x128xf32>
      %c0_11 = arith.constant 0 : index
      %c0_12 = arith.constant 0 : index
      %13 = vector.load %arg7[%c0_11, %c0_12] : memref<512x128xf32, #tpu.memory_space<vmem>>, vector<512x128xf32>
      tpu.vector_store %arg7[%c0_11, %c0_12], %12 {strides = array<i32>} : memref<512x128xf32, #tpu.memory_space<vmem>>, vector<512x128xf32>,
    } else {
    }
    %c0 = arith.constant 0 : index
    %c0_1 = arith.constant 0 : index
    %3 = vector.load %arg7[%c0, %c0_1] : memref<512x128xf32, #tpu.memory_space<vmem>>, vector<512x128xf32>
    %c0_2 = arith.constant 0 : index
    %c0_3 = arith.constant 0 : index
    %4 = vector.load %arg3[%c0_2, %c0_3] : memref<512x128xbf16, #tpu.memory_space<vmem>>, vector<512x128xbf16>
    %c0_4 = arith.constant 0 : index
    %c0_5 = arith.constant 0 : index
    %5 = vector.load %arg4[%c0_4, %c0_5] : memref<128x128xbf16, #tpu.memory_space<vmem>>, vector<128x128xbf16>
    %cst = arith.constant dense<0.000000e+00> : vector<512x128xf32>
    %6 = tpu.matmul %4, %5, %cst {dimension_numbers = #tpu.dot_dimension_numbers<[1], [0], [0], [1], [0, 0, 1, 1], [], []>} : vector<512x128xbf16>, vector<128x128xbf16>, vector<512x128xf32> -> vector<512x128xf32>
    %7 = arith.addf %3, %6 : vector<512x128xf32>
    %c0_6 = arith.constant 0 : index
    %c0_7 = arith.constant 0 : index
    %8 = vector.load %arg7[%c0_6, %c0_7] : memref<512x128xf32, #tpu.memory_space<vmem>>, vector<512x128xf32>
    tpu.vector_store %arg7[%c0_6, %c0_7], %7 {strides = array<i32>} : memref<512x128xf32, #tpu.memory_space<vmem>>, vector<512x128xf32>,
    %c0_i32_8 = arith.constant 0 : i32
    %9 = arith.cmpi eq, %arg2, %c0_i32_8 : i32
    %10 = arith.extui %9 : i1 to i32
    %c0_i32_9 = arith.constant 0 : i32
    %11 = arith.cmpi ne, %10, %c0_i32_9 : i32
    scf.if %11 {
      %c0_10 = arith.constant 0 : index
      %c0_11 = arith.constant 0 : index
      %12 = vector.load %arg7[%c0_10, %c0_11] : memref<512x128xf32, #tpu.memory_space<vmem>>, vector<512x128xf32>
      %c0_12 = arith.constant 0 : index
      %c0_13 = arith.constant 0 : index
      %13 = vector.load %arg5[%c0_12, %c0_13] : memref<1x128xf32, #tpu.memory_space<vmem>>, vector<1x128xf32>
      %14 = vector.broadcast %13 : vector<1x128xf32> to vector<512x128xf32>
      %15 = arith.addf %12, %14 : vector<512x128xf32>
      %cst_14 = arith.constant 0.000000e+00 : f32
      %16 = vector.broadcast %cst_14 : f32 to vector<512x128xf32>
      %17 = arith.maximumf %15, %16 : vector<512x128xf32>
      %18 = arith.truncf %17 : vector<512x128xf32> to vector<512x128xbf16>
      %c0_15 = arith.constant 0 : index
      %c0_16 = arith.constant 0 : index
      %19 = vector.load %arg6[%c0_15, %c0_16] : memref<512x128xbf16, #tpu.memory_space<vmem>>, vector<512x128xbf16>
      tpu.vector_store %arg6[%c0_15, %c0_16], %18 {strides = array<i32>} : memref<512x128xbf16, #tpu.memory_space<vmem>>, vector<512x128xbf16>,
    } else {
    }
    return
  }
  func.func @transform_0(%arg0: i32, %arg1: i32, %arg2: i32) -> (i32, i32) {
    %c0_i32 = arith.constant 0 : i32
    return %arg0, %arg2 : i32, i32
  }
  func.func @transform_1(%arg0: i32, %arg1: i32, %arg2: i32) -> (i32, i32) {
    %c0_i32 = arith.constant 0 : i32
    return %arg2, %arg1 : i32, i32
  }
  func.func @transform_2(%arg0: i32, %arg1: i32, %arg2: i32) -> (i32, i32) {
    %c0_i32 = arith.constant 0 : i32
    %c0_i32_0 = arith.constant 0 : i32
    return %c0_i32, %arg1 : i32, i32
  }
  func.func @transform_3(%arg0: i32, %arg1: i32, %arg2: i32) -> (i32, i32) {
    %c0_i32 = arith.constant 0 : i32
    return %arg0, %arg1 : i32, i32
  }
}

module attributes {stable_mosaic.version = 11 : i64} {
  func.func @_matmul_shift_kernel(%arg0: i32, %arg1: i32, %arg2: i32, %arg3: memref<128x128xbf16, #tpu.memory_space<vmem>>, %arg4: memref<128x128xbf16, #tpu.memory_space<vmem>>, %arg5: memref<1x128xf32, #tpu.memory_space<vmem>>, %arg6: memref<128x128xbf16, #tpu.memory_space<vmem>>, %arg7: memref<128x128xf32, #tpu.memory_space<vmem>>) attributes {dimension_semantics = [#tpu.dimension_semantics<parallel>, #tpu.dimension_semantics<parallel>, #tpu.dimension_semantics<arbitrary>], iteration_bounds = array<i64: 1, 1, 1>, scalar_prefetch = 0 : i64, scratch_operands = 1 : i64, tpu.core_type = #tpu.core_type<tc>, window_params = [{transform_indices = @transform_0, window_bounds = array<i64: 128, 128>}, {transform_indices = @transform_1, window_bounds = array<i64: 128, 128>}, {transform_indices = @transform_2, window_bounds = array<i64: 1, 128>}, {transform_indices = @transform_3, window_bounds = array<i64: 128, 128>}]} {
    %c0_i32 = arith.constant 0 : i32
    %0 = arith.cmpi eq, %arg2, %c0_i32 : i32
    %1 = arith.extui %0 : i1 to i32
    %c0_i32_0 = arith.constant 0 : i32
    %2 = arith.cmpi ne, %1, %c0_i32_0 : i32
    scf.if %2 {
      %cst_10 = arith.constant 0.000000e+00 : f32
      %12 = vector.broadcast %cst_10 : f32 to vector<128x128xf32>
      %c0_11 = arith.constant 0 : index
      %c0_12 = arith.constant 0 : index
      %13 = vector.load %arg7[%c0_11, %c0_12] : memref<128x128xf32, #tpu.memory_space<vmem>>, vector<128x128xf32>
      tpu.vector_store %arg7[%c0_11, %c0_12], %12 {strides = array<i32>} : memref<128x128xf32, #tpu.memory_space<vmem>>, vector<128x128xf32>,
    } else {
    }
    %c0 = arith.constant 0 : index
    %c0_1 = arith.constant 0 : index
    %3 = vector.load %arg7[%c0, %c0_1] : memref<128x128xf32, #tpu.memory_space<vmem>>, vector<128x128xf32>
    %c0_2 = arith.constant 0 : index
    %c0_3 = arith.constant 0 : index
    %4 = vector.load %arg3[%c0_2, %c0_3] : memref<128x128xbf16, #tpu.memory_space<vmem>>, vector<128x128xbf16>
    %c0_4 = arith.constant 0 : index
    %c0_5 = arith.constant 0 : index
    %5 = vector.load %arg4[%c0_4, %c0_5] : memref<128x128xbf16, #tpu.memory_space<vmem>>, vector<128x128xbf16>
    %cst = arith.constant dense<0.000000e+00> : vector<128x128xf32>
    %6 = tpu.matmul %4, %5, %cst {dimension_numbers = #tpu.dot_dimension_numbers<[1], [0], [0], [1], [0, 0, 1, 1], [], []>} : vector<128x128xbf16>, vector<128x128xbf16>, vector<128x128xf32> -> vector<128x128xf32>
    %7 = arith.addf %3, %6 : vector<128x128xf32>
    %c0_6 = arith.constant 0 : index
    %c0_7 = arith.constant 0 : index
    %8 = vector.load %arg7[%c0_6, %c0_7] : memref<128x128xf32, #tpu.memory_space<vmem>>, vector<128x128xf32>
    tpu.vector_store %arg7[%c0_6, %c0_7], %7 {strides = array<i32>} : memref<128x128xf32, #tpu.memory_space<vmem>>, vector<128x128xf32>,
    %c0_i32_8 = arith.constant 0 : i32
    %9 = arith.cmpi eq, %arg2, %c0_i32_8 : i32
    %10 = arith.extui %9 : i1 to i32
    %c0_i32_9 = arith.constant 0 : i32
    %11 = arith.cmpi ne, %10, %c0_i32_9 : i32
    scf.if %11 {
      %c0_10 = arith.constant 0 : index
      %c0_11 = arith.constant 0 : index
      %12 = vector.load %arg7[%c0_10, %c0_11] : memref<128x128xf32, #tpu.memory_space<vmem>>, vector<128x128xf32>
      %c0_12 = arith.constant 0 : index
      %c0_13 = arith.constant 0 : index
      %13 = vector.load %arg5[%c0_12, %c0_13] : memref<1x128xf32, #tpu.memory_space<vmem>>, vector<1x128xf32>
      %14 = vector.broadcast %13 : vector<1x128xf32> to vector<128x128xf32>
      %15 = arith.addf %12, %14 : vector<128x128xf32>
      %cst_14 = arith.constant 0.000000e+00 : f32
      %16 = vector.broadcast %cst_14 : f32 to vector<128x128xf32>
      %17 = arith.maximumf %15, %16 : vector<128x128xf32>
      %18 = arith.truncf %17 : vector<128x128xf32> to vector<128x128xbf16>
      %c0_15 = arith.constant 0 : index
      %c0_16 = arith.constant 0 : index
      %19 = vector.load %arg6[%c0_15, %c0_16] : memref<128x128xbf16, #tpu.memory_space<vmem>>, vector<128x128xbf16>
      tpu.vector_store %arg6[%c0_15, %c0_16], %18 {strides = array<i32>} : memref<128x128xbf16, #tpu.memory_space<vmem>>, vector<128x128xbf16>,
    } else {
    }
    return
  }
  func.func @transform_0(%arg0: i32, %arg1: i32, %arg2: i32) -> (i32, i32) {
    %c0_i32 = arith.constant 0 : i32
    return %arg0, %arg2 : i32, i32
  }
  func.func @transform_1(%arg0: i32, %arg1: i32, %arg2: i32) -> (i32, i32) {
    %c0_i32 = arith.constant 0 : i32
    return %arg2, %arg1 : i32, i32
  }
  func.func @transform_2(%arg0: i32, %arg1: i32, %arg2: i32) -> (i32, i32) {
    %c0_i32 = arith.constant 0 : i32
    %c0_i32_0 = arith.constant 0 : i32
    return %c0_i32, %arg1 : i32, i32
  }
  func.func @transform_3(%arg0: i32, %arg1: i32, %arg2: i32) -> (i32, i32) {
    %c0_i32 = arith.constant 0 : i32
    return %arg0, %arg1 : i32, i32
  }
}

module attributes {stable_mosaic.version = 11 : i64} {
  func.func @_matmul_shift_kernel(%arg0: i32, %arg1: i32, %arg2: i32, %arg3: memref<128x256xbf16, #tpu.memory_space<vmem>>, %arg4: memref<256x128xbf16, #tpu.memory_space<vmem>>, %arg5: memref<1x128xf32, #tpu.memory_space<vmem>>, %arg6: memref<128x128xbf16, #tpu.memory_space<vmem>>, %arg7: memref<128x128xf32, #tpu.memory_space<vmem>>) attributes {dimension_semantics = [#tpu.dimension_semantics<parallel>, #tpu.dimension_semantics<parallel>, #tpu.dimension_semantics<arbitrary>], iteration_bounds = array<i64: 1, 1, 1>, scalar_prefetch = 0 : i64, scratch_operands = 1 : i64, tpu.core_type = #tpu.core_type<tc>, window_params = [{transform_indices = @transform_0, window_bounds = array<i64: 128, 256>}, {transform_indices = @transform_1, window_bounds = array<i64: 256, 128>}, {transform_indices = @transform_2, window_bounds = array<i64: 1, 128>}, {transform_indices = @transform_3, window_bounds = array<i64: 128, 128>}]} {
    %c0_i32 = arith.constant 0 : i32
    %0 = arith.cmpi eq, %arg2, %c0_i32 : i32
    %1 = arith.extui %0 : i1 to i32
    %c0_i32_0 = arith.constant 0 : i32
    %2 = arith.cmpi ne, %1, %c0_i32_0 : i32
    scf.if %2 {
      %cst_10 = arith.constant 0.000000e+00 : f32
      %12 = vector.broadcast %cst_10 : f32 to vector<128x128xf32>
      %c0_11 = arith.constant 0 : index
      %c0_12 = arith.constant 0 : index
      %13 = vector.load %arg7[%c0_11, %c0_12] : memref<128x128xf32, #tpu.memory_space<vmem>>, vector<128x128xf32>
      tpu.vector_store %arg7[%c0_11, %c0_12], %12 {strides = array<i32>} : memref<128x128xf32, #tpu.memory_space<vmem>>, vector<128x128xf32>,
    } else {
    }
    %c0 = arith.constant 0 : index
    %c0_1 = arith.constant 0 : index
    %3 = vector.load %arg7[%c0, %c0_1] : memref<128x128xf32, #tpu.memory_space<vmem>>, vector<128x128xf32>
    %c0_2 = arith.constant 0 : index
    %c0_3 = arith.constant 0 : index
    %4 = vector.load %arg3[%c0_2, %c0_3] : memref<128x256xbf16, #tpu.memory_space<vmem>>, vector<128x256xbf16>
    %c0_4 = arith.constant 0 : index
    %c0_5 = arith.constant 0 : index
    %5 = vector.load %arg4[%c0_4, %c0_5] : memref<256x128xbf16, #tpu.memory_space<vmem>>, vector<256x128xbf16>
    %cst = arith.constant dense<0.000000e+00> : vector<128x128xf32>
    %6 = tpu.matmul %4, %5, %cst {dimension_numbers = #tpu.dot_dimension_numbers<[1], [0], [0], [1], [0, 0, 1, 1], [], []>} : vector<128x256xbf16>, vector<256x128xbf16>, vector<128x128xf32> -> vector<128x128xf32>
    %7 = arith.addf %3, %6 : vector<128x128xf32>
    %c0_6 = arith.constant 0 : index
    %c0_7 = arith.constant 0 : index
    %8 = vector.load %arg7[%c0_6, %c0_7] : memref<128x128xf32, #tpu.memory_space<vmem>>, vector<128x128xf32>
    tpu.vector_store %arg7[%c0_6, %c0_7], %7 {strides = array<i32>} : memref<128x128xf32, #tpu.memory_space<vmem>>, vector<128x128xf32>,
    %c0_i32_8 = arith.constant 0 : i32
    %9 = arith.cmpi eq, %arg2, %c0_i32_8 : i32
    %10 = arith.extui %9 : i1 to i32
    %c0_i32_9 = arith.constant 0 : i32
    %11 = arith.cmpi ne, %10, %c0_i32_9 : i32
    scf.if %11 {
      %c0_10 = arith.constant 0 : index
      %c0_11 = arith.constant 0 : index
      %12 = vector.load %arg7[%c0_10, %c0_11] : memref<128x128xf32, #tpu.memory_space<vmem>>, vector<128x128xf32>
      %c0_12 = arith.constant 0 : index
      %c0_13 = arith.constant 0 : index
      %13 = vector.load %arg5[%c0_12, %c0_13] : memref<1x128xf32, #tpu.memory_space<vmem>>, vector<1x128xf32>
      %14 = vector.broadcast %13 : vector<1x128xf32> to vector<128x128xf32>
      %15 = arith.addf %12, %14 : vector<128x128xf32>
      %cst_14 = arith.constant 0.000000e+00 : f32
      %16 = vector.broadcast %cst_14 : f32 to vector<128x128xf32>
      %17 = arith.maximumf %15, %16 : vector<128x128xf32>
      %18 = arith.truncf %17 : vector<128x128xf32> to vector<128x128xbf16>
      %c0_15 = arith.constant 0 : index
      %c0_16 = arith.constant 0 : index
      %19 = vector.load %arg6[%c0_15, %c0_16] : memref<128x128xbf16, #tpu.memory_space<vmem>>, vector<128x128xbf16>
      tpu.vector_store %arg6[%c0_15, %c0_16], %18 {strides = array<i32>} : memref<128x128xbf16, #tpu.memory_space<vmem>>, vector<128x128xbf16>,
    } else {
    }
    return
  }
  func.func @transform_0(%arg0: i32, %arg1: i32, %arg2: i32) -> (i32, i32) {
    %c0_i32 = arith.constant 0 : i32
    return %arg0, %arg2 : i32, i32
  }
  func.func @transform_1(%arg0: i32, %arg1: i32, %arg2: i32) -> (i32, i32) {
    %c0_i32 = arith.constant 0 : i32
    return %arg2, %arg1 : i32, i32
  }
  func.func @transform_2(%arg0: i32, %arg1: i32, %arg2: i32) -> (i32, i32) {
    %c0_i32 = arith.constant 0 : i32
    %c0_i32_0 = arith.constant 0 : i32
    return %c0_i32, %arg1 : i32, i32
  }
  func.func @transform_3(%arg0: i32, %arg1: i32, %arg2: i32) -> (i32, i32) {
    %c0_i32 = arith.constant 0 : i32
    return %arg0, %arg1 : i32, i32
  }
}

module attributes {stable_mosaic.version = 11 : i64} {
  func.func @_matmul_shift_kernel(%arg0: i32, %arg1: i32, %arg2: i32, %arg3: memref<128x128xbf16, #tpu.memory_space<vmem>>, %arg4: memref<128x128xbf16, #tpu.memory_space<vmem>>, %arg5: memref<1x128xf32, #tpu.memory_space<vmem>>, %arg6: memref<128x128xbf16, #tpu.memory_space<vmem>>, %arg7: memref<128x128xf32, #tpu.memory_space<vmem>>) attributes {dimension_semantics = [#tpu.dimension_semantics<parallel>, #tpu.dimension_semantics<parallel>, #tpu.dimension_semantics<arbitrary>], iteration_bounds = array<i64: 1, 1, 3>, scalar_prefetch = 0 : i64, scratch_operands = 1 : i64, tpu.core_type = #tpu.core_type<tc>, window_params = [{transform_indices = @transform_0, window_bounds = array<i64: 128, 128>}, {transform_indices = @transform_1, window_bounds = array<i64: 128, 128>}, {transform_indices = @transform_2, window_bounds = array<i64: 1, 128>}, {transform_indices = @transform_3, window_bounds = array<i64: 128, 128>}]} {
    %c0_i32 = arith.constant 0 : i32
    %0 = arith.cmpi eq, %arg2, %c0_i32 : i32
    %1 = arith.extui %0 : i1 to i32
    %c0_i32_0 = arith.constant 0 : i32
    %2 = arith.cmpi ne, %1, %c0_i32_0 : i32
    scf.if %2 {
      %cst_9 = arith.constant 0.000000e+00 : f32
      %12 = vector.broadcast %cst_9 : f32 to vector<128x128xf32>
      %c0_10 = arith.constant 0 : index
      %c0_11 = arith.constant 0 : index
      %13 = vector.load %arg7[%c0_10, %c0_11] : memref<128x128xf32, #tpu.memory_space<vmem>>, vector<128x128xf32>
      tpu.vector_store %arg7[%c0_10, %c0_11], %12 {strides = array<i32>} : memref<128x128xf32, #tpu.memory_space<vmem>>, vector<128x128xf32>,
    } else {
    }
    %c0 = arith.constant 0 : index
    %c0_1 = arith.constant 0 : index
    %3 = vector.load %arg7[%c0, %c0_1] : memref<128x128xf32, #tpu.memory_space<vmem>>, vector<128x128xf32>
    %c0_2 = arith.constant 0 : index
    %c0_3 = arith.constant 0 : index
    %4 = vector.load %arg3[%c0_2, %c0_3] : memref<128x128xbf16, #tpu.memory_space<vmem>>, vector<128x128xbf16>
    %c0_4 = arith.constant 0 : index
    %c0_5 = arith.constant 0 : index
    %5 = vector.load %arg4[%c0_4, %c0_5] : memref<128x128xbf16, #tpu.memory_space<vmem>>, vector<128x128xbf16>
    %cst = arith.constant dense<0.000000e+00> : vector<128x128xf32>
    %6 = tpu.matmul %4, %5, %cst {dimension_numbers = #tpu.dot_dimension_numbers<[1], [0], [0], [1], [0, 0, 1, 1], [], []>} : vector<128x128xbf16>, vector<128x128xbf16>, vector<128x128xf32> -> vector<128x128xf32>
    %7 = arith.addf %3, %6 : vector<128x128xf32>
    %c0_6 = arith.constant 0 : index
    %c0_7 = arith.constant 0 : index
    %8 = vector.load %arg7[%c0_6, %c0_7] : memref<128x128xf32, #tpu.memory_space<vmem>>, vector<128x128xf32>
    tpu.vector_store %arg7[%c0_6, %c0_7], %7 {strides = array<i32>} : memref<128x128xf32, #tpu.memory_space<vmem>>, vector<128x128xf32>,
    %c2_i32 = arith.constant 2 : i32
    %9 = arith.cmpi eq, %arg2, %c2_i32 : i32
    %10 = arith.extui %9 : i1 to i32
    %c0_i32_8 = arith.constant 0 : i32
    %11 = arith.cmpi ne, %10, %c0_i32_8 : i32
    scf.if %11 {
      %c0_9 = arith.constant 0 : index
      %c0_10 = arith.constant 0 : index
      %12 = vector.load %arg7[%c0_9, %c0_10] : memref<128x128xf32, #tpu.memory_space<vmem>>, vector<128x128xf32>
      %c0_11 = arith.constant 0 : index
      %c0_12 = arith.constant 0 : index
      %13 = vector.load %arg5[%c0_11, %c0_12] : memref<1x128xf32, #tpu.memory_space<vmem>>, vector<1x128xf32>
      %14 = vector.broadcast %13 : vector<1x128xf32> to vector<128x128xf32>
      %15 = arith.addf %12, %14 : vector<128x128xf32>
      %cst_13 = arith.constant 0.000000e+00 : f32
      %16 = vector.broadcast %cst_13 : f32 to vector<128x128xf32>
      %17 = arith.maximumf %15, %16 : vector<128x128xf32>
      %18 = arith.truncf %17 : vector<128x128xf32> to vector<128x128xbf16>
      %c0_14 = arith.constant 0 : index
      %c0_15 = arith.constant 0 : index
      %19 = vector.load %arg6[%c0_14, %c0_15] : memref<128x128xbf16, #tpu.memory_space<vmem>>, vector<128x128xbf16>
      tpu.vector_store %arg6[%c0_14, %c0_15], %18 {strides = array<i32>} : memref<128x128xbf16, #tpu.memory_space<vmem>>, vector<128x128xbf16>,
    } else {
    }
    return
  }
  func.func @transform_0(%arg0: i32, %arg1: i32, %arg2: i32) -> (i32, i32) {
    %c0_i32 = arith.constant 0 : i32
    return %arg0, %arg2 : i32, i32
  }
  func.func @transform_1(%arg0: i32, %arg1: i32, %arg2: i32) -> (i32, i32) {
    %c0_i32 = arith.constant 0 : i32
    return %arg2, %arg1 : i32, i32
  }
  func.func @transform_2(%arg0: i32, %arg1: i32, %arg2: i32) -> (i32, i32) {
    %c0_i32 = arith.constant 0 : i32
    %c0_i32_0 = arith.constant 0 : i32
    return %c0_i32, %arg1 : i32, i32
  }
  func.func @transform_3(%arg0: i32, %arg1: i32, %arg2: i32) -> (i32, i32) {
    %c0_i32 = arith.constant 0 : i32
    return %arg0, %arg1 : i32, i32
  }
}

module attributes {stable_mosaic.version = 11 : i64} {
  func.func @_matmul_shift_kernel(%arg0: i32, %arg1: i32, %arg2: i32, %arg3: memref<128x128xbf16, #tpu.memory_space<vmem>>, %arg4: memref<128x128xbf16, #tpu.memory_space<vmem>>, %arg5: memref<1x128xf32, #tpu.memory_space<vmem>>, %arg6: memref<128x128xf32, #tpu.memory_space<vmem>>, %arg7: memref<128x128xf32, #tpu.memory_space<vmem>>) attributes {dimension_semantics = [#tpu.dimension_semantics<parallel>, #tpu.dimension_semantics<parallel>, #tpu.dimension_semantics<arbitrary>], iteration_bounds = array<i64: 1, 1, 1>, scalar_prefetch = 0 : i64, scratch_operands = 1 : i64, tpu.core_type = #tpu.core_type<tc>, window_params = [{transform_indices = @transform_0, window_bounds = array<i64: 128, 128>}, {transform_indices = @transform_1, window_bounds = array<i64: 128, 128>}, {transform_indices = @transform_2, window_bounds = array<i64: 1, 128>}, {transform_indices = @transform_3, window_bounds = array<i64: 128, 128>}]} {
    %c0_i32 = arith.constant 0 : i32
    %0 = arith.cmpi eq, %arg2, %c0_i32 : i32
    %1 = arith.extui %0 : i1 to i32
    %c0_i32_0 = arith.constant 0 : i32
    %2 = arith.cmpi ne, %1, %c0_i32_0 : i32
    scf.if %2 {
      %cst_10 = arith.constant 0.000000e+00 : f32
      %12 = vector.broadcast %cst_10 : f32 to vector<128x128xf32>
      %c0_11 = arith.constant 0 : index
      %c0_12 = arith.constant 0 : index
      %13 = vector.load %arg7[%c0_11, %c0_12] : memref<128x128xf32, #tpu.memory_space<vmem>>, vector<128x128xf32>
      tpu.vector_store %arg7[%c0_11, %c0_12], %12 {strides = array<i32>} : memref<128x128xf32, #tpu.memory_space<vmem>>, vector<128x128xf32>,
    } else {
    }
    %c0 = arith.constant 0 : index
    %c0_1 = arith.constant 0 : index
    %3 = vector.load %arg7[%c0, %c0_1] : memref<128x128xf32, #tpu.memory_space<vmem>>, vector<128x128xf32>
    %c0_2 = arith.constant 0 : index
    %c0_3 = arith.constant 0 : index
    %4 = vector.load %arg3[%c0_2, %c0_3] : memref<128x128xbf16, #tpu.memory_space<vmem>>, vector<128x128xbf16>
    %c0_4 = arith.constant 0 : index
    %c0_5 = arith.constant 0 : index
    %5 = vector.load %arg4[%c0_4, %c0_5] : memref<128x128xbf16, #tpu.memory_space<vmem>>, vector<128x128xbf16>
    %cst = arith.constant dense<0.000000e+00> : vector<128x128xf32>
    %6 = tpu.matmul %4, %5, %cst {dimension_numbers = #tpu.dot_dimension_numbers<[1], [0], [0], [1], [0, 0, 1, 1], [], []>} : vector<128x128xbf16>, vector<128x128xbf16>, vector<128x128xf32> -> vector<128x128xf32>
    %7 = arith.addf %3, %6 : vector<128x128xf32>
    %c0_6 = arith.constant 0 : index
    %c0_7 = arith.constant 0 : index
    %8 = vector.load %arg7[%c0_6, %c0_7] : memref<128x128xf32, #tpu.memory_space<vmem>>, vector<128x128xf32>
    tpu.vector_store %arg7[%c0_6, %c0_7], %7 {strides = array<i32>} : memref<128x128xf32, #tpu.memory_space<vmem>>, vector<128x128xf32>,
    %c0_i32_8 = arith.constant 0 : i32
    %9 = arith.cmpi eq, %arg2, %c0_i32_8 : i32
    %10 = arith.extui %9 : i1 to i32
    %c0_i32_9 = arith.constant 0 : i32
    %11 = arith.cmpi ne, %10, %c0_i32_9 : i32
    scf.if %11 {
      %c0_10 = arith.constant 0 : index
      %c0_11 = arith.constant 0 : index
      %12 = vector.load %arg7[%c0_10, %c0_11] : memref<128x128xf32, #tpu.memory_space<vmem>>, vector<128x128xf32>
      %c0_12 = arith.constant 0 : index
      %c0_13 = arith.constant 0 : index
      %13 = vector.load %arg5[%c0_12, %c0_13] : memref<1x128xf32, #tpu.memory_space<vmem>>, vector<1x128xf32>
      %14 = vector.broadcast %13 : vector<1x128xf32> to vector<128x128xf32>
      %15 = arith.addf %12, %14 : vector<128x128xf32>
      %c0_14 = arith.constant 0 : index
      %c0_15 = arith.constant 0 : index
      %16 = vector.load %arg6[%c0_14, %c0_15] : memref<128x128xf32, #tpu.memory_space<vmem>>, vector<128x128xf32>
      tpu.vector_store %arg6[%c0_14, %c0_15], %15 {strides = array<i32>} : memref<128x128xf32, #tpu.memory_space<vmem>>, vector<128x128xf32>,
    } else {
    }
    return
  }
  func.func @transform_0(%arg0: i32, %arg1: i32, %arg2: i32) -> (i32, i32) {
    %c0_i32 = arith.constant 0 : i32
    return %arg0, %arg2 : i32, i32
  }
  func.func @transform_1(%arg0: i32, %arg1: i32, %arg2: i32) -> (i32, i32) {
    %c0_i32 = arith.constant 0 : i32
    return %arg2, %arg1 : i32, i32
  }
  func.func @transform_2(%arg0: i32, %arg1: i32, %arg2: i32) -> (i32, i32) {
    %c0_i32 = arith.constant 0 : i32
    %c0_i32_0 = arith.constant 0 : i32
    return %c0_i32, %arg1 : i32, i32
  }
  func.func @transform_3(%arg0: i32, %arg1: i32, %arg2: i32) -> (i32, i32) {
    %c0_i32 = arith.constant 0 : i32
    return %arg0, %arg1 : i32, i32
  }
}

</mosaic_0001>

<llo_original>
// kernel: convstem_forward.5
$region0: #{convstem_forward.5}
  #allocation0 [shape = 'u32[]', space=smem, size = 0x4, offset = 0x4, fixed_abs, tag = 'smem constant byte address 0x4 - core index']
  #allocation1 [shape = 'u32[144,128]{1,0:T(1,128)}', space=vmem, size = 0x12000, scoped, tag = 'internal scratch']
  #allocation2 [shape = 'f32[512,128]{1,0:T(8,128)}', space=vmem, size = 0x40000, scoped, tag = 'scratch operand']
  %s0 = inlined_call_operand.hbm [shape: bf16[512,128], index: 0, kind: input, shape index: {}]
  %s1 = inlined_call_operand.hbm [shape: bf16[128,128], index: 1, kind: input, shape index: {}]
  %s2 = inlined_call_operand.hbm [shape: f32[1,128], index: 2, kind: input, shape index: {}]
  %s3 = inlined_call_operand.hbm [shape: bf16[512,128], index: 3, kind: output, shape index: {}]
  %s4 = sld [smem:[#allocation0]]
  $region42: #{convstem_forward.5} parent=0
    _
  %s6 = ssub.s32 1, %s4
  %s7 = scalar_select 0, %s6, %s4
  $region1: #{convstem_forward.5} parent=0
    #allocation3 [shape = 'u8[131072]{0}', space=vmem, size = 0x20000, scoped, tag = 'input window, operand 0, single buffered']
    #allocation4 [shape = 's32[1]{0}', space=sflag, size = 0x4, scoped, tag = 'scoped memory for convstem_forward.5']
    #allocation5 [shape = 's32[1]{0}', space=sflag, size = 0x4, scoped, tag = 'scoped memory for convstem_forward.5']
    #allocation6 [shape = 'u8[32768]{0}', space=vmem, size = 0x8000, scoped, tag = 'input window, operand 1, single buffered']
    #allocation7 [shape = 's32[1]{0}', space=sflag, size = 0x4, scoped, tag = 'scoped memory for convstem_forward.5']
    #allocation8 [shape = 'u8[512]{0}', space=vmem, size = 0x400, scoped, tag = 'input window, operand 2, single buffered']
    #allocation9 [shape = 'u8[131072]{0}', space=vmem, size = 0x20000, scoped, tag = 'output window, operand 0, single buffered']
    %8 = vsyncpa [#allocation4], 0
    %9 = vsyncpa [#allocation7], 0
    %10 = vsyncpa [#allocation5], 0
    // Predicated region
    $region2: #{convstem_forward.5} parent=1 // pred_check
      _
    $region3: #{convstem_forward.5} parent=1 // pred_check_branch
      %12 = sbr.rel (0) target = $region5
    $region4: #{convstem_forward.5} parent=1 // pred_region
      %s14 = ssub.s32 4096, 4096
      %15 = vsyncadd [#allocation4], %s14
      %s16 = sshll.u32 [#allocation3], 4
      %s17 = int_to_ptr.vmem [resolvable:$true] %s16
      %22 = dma.hbm_to_vmem [thread:$0]  %s0, 4096, %s17, [#allocation4], 64, 64, 4
    $region5: #{convstem_forward.5} parent=1 // pred_fallthru
      _
    // Predicated region
    $region6: #{convstem_forward.5} parent=1 // pred_check
      _
    $region7: #{convstem_forward.5} parent=1 // pred_check_branch
      %24 = sbr.rel (0) target = $region9
    $region8: #{convstem_forward.5} parent=1 // pred_region
      %s26 = ssub.s32 1024, 1024
      %27 = vsyncadd [#allocation7], %s26
      %s28 = sshll.u32 [#allocation6], 4
      %s29 = int_to_ptr.vmem [resolvable:$true] %s28
      %34 = dma.hbm_to_vmem [thread:$0]  %s1, 1024, %s29, [#allocation7], 64, 64, 4
    $region9: #{convstem_forward.5} parent=1 // pred_fallthru
      _
    // Predicated region
    $region10: #{convstem_forward.5} parent=1 // pred_check
      _
    $region11: #{convstem_forward.5} parent=1 // pred_check_branch
      %36 = sbr.rel (0) target = $region13
    $region12: #{convstem_forward.5} parent=1 // pred_region
      %s38 = ssub.s32 16, 16
      %39 = vsyncadd [#allocation7], %s38
      %s41 = sshll.u32 [#allocation8], 4
      %s42 = int_to_ptr.vmem [resolvable:$true] %s41
      %44 = dma.hbm_to_vmem [thread:$0]  %s2, 16, %s42, [#allocation7]
    $region13: #{convstem_forward.5} parent=1 // pred_fallthru
      _
    // Predicated region
    $region14: #{convstem_forward.5} parent=1 // pred_check
      _
    $region15: #{convstem_forward.5} parent=1 // pred_check_branch
      %46 = sbr.rel (0) target = $region17
    $region16: #{convstem_forward.5} parent=1 // pred_region
      %47 = dma.done [#allocation4], 4096
    $region17: #{convstem_forward.5} parent=1 // pred_fallthru
      _
    // Predicated region
    $region18: #{convstem_forward.5} parent=1 // pred_check
      _
    $region19: #{convstem_forward.5} parent=1 // pred_check_branch
      %49 = sbr.rel (0) target = $region21
    $region20: #{convstem_forward.5} parent=1 // pred_region
      %50 = dma.done [#allocation7], 1024
    $region21: #{convstem_forward.5} parent=1 // pred_fallthru
      _
    // Predicated region
    $region22: #{convstem_forward.5} parent=1 // pred_check
      _
    $region23: #{convstem_forward.5} parent=1 // pred_check_branch
      %52 = sbr.rel (0) target = $region25
    $region24: #{convstem_forward.5} parent=1 // pred_region
      %53 = dma.done [#allocation7], 16
    $region25: #{convstem_forward.5} parent=1 // pred_fallthru
      _
    %p55 = scmp.eq.s32.totalorder 0, 0
    // Predicated region
    $region26: #{convstem_forward.5} parent=1 // pred_check
      %p56 = pneg %p55
    $region27: #{convstem_forward.5} parent=1 // pred_check_branch
      %58 = sbr.rel (%p56) target = $region29
    $region28: #{convstem_forward.5} parent=1 // pred_region
      %59 = vst [vmem:[#allocation2] sm:$0xff] 0.0
      %60 = vst [vmem:[#allocation2 + $0x8] sm:$0xff] 0.0
      %61 = vst [vmem:[#allocation2 + $0x10] sm:$0xff] 0.0
      %62 = vst [vmem:[#allocation2 + $0x18] sm:$0xff] 0.0
      %63 = vst [vmem:[#allocation2 + $0x20] sm:$0xff] 0.0
      %64 = vst [vmem:[#allocation2 + $0x28] sm:$0xff] 0.0
      %65 = vst [vmem:[#allocation2 + $0x30] sm:$0xff] 0.0
      %66 = vst [vmem:[#allocation2 + $0x38] sm:$0xff] 0.0
      %67 = vst [vmem:[#allocation2 + $0x40] sm:$0xff] 0.0
      %68 = vst [vmem:[#allocation2 + $0x48] sm:$0xff] 0.0
      %69 = vst [vmem:[#allocation2 + $0x50] sm:$0xff] 0.0
      %70 = vst [vmem:[#allocation2 + $0x58] sm:$0xff] 0.0
      %71 = vst [vmem:[#allocation2 + $0x60] sm:$0xff] 0.0
      %72 = vst [vmem:[#allocation2 + $0x68] sm:$0xff] 0.0
      %73 = vst [vmem:[#allocation2 + $0x70] sm:$0xff] 0.0
      %74 = vst [vmem:[#allocation2 + $0x78] sm:$0xff] 0.0
      %75 = vst [vmem:[#allocation2 + $0x80] sm:$0xff] 0.0
      %76 = vst [vmem:[#allocation2 + $0x88] sm:$0xff] 0.0
      %77 = vst [vmem:[#allocation2 + $0x90] sm:$0xff] 0.0
      %78 = vst [vmem:[#allocation2 + $0x98] sm:$0xff] 0.0
      %79 = vst [vmem:[#allocation2 + $0xa0] sm:$0xff] 0.0
      %80 = vst [vmem:[#allocation2 + $0xa8] sm:$0xff] 0.0
      %81 = vst [vmem:[#allocation2 + $0xb0] sm:$0xff] 0.0
      %82 = vst [vmem:[#allocation2 + $0xb8] sm:$0xff] 0.0
      %83 = vst [vmem:[#allocation2 + $0xc0] sm:$0xff] 0.0
      %84 = vst [vmem:[#allocation2 + $0xc8] sm:$0xff] 0.0
      %85 = vst [vmem:[#allocation2 + $0xd0] sm:$0xff] 0.0
      %86 = vst [vmem:[#allocation2 + $0xd8] sm:$0xff] 0.0
      %87 = vst [vmem:[#allocation2 + $0xe0] sm:$0xff] 0.0
      %88 = vst [vmem:[#allocation2 + $0xe8] sm:$0xff] 0.0
      %89 = vst [vmem:[#allocation2 + $0xf0] sm:$0xff] 0.0
      %90 = vst [vmem:[#allocation2 + $0xf8] sm:$0xff] 0.0
      %91 = vst [vmem:[#allocation2 + $0x100] sm:$0xff] 0.0
      %92 = vst [vmem:[#allocation2 + $0x108] sm:$0xff] 0.0
      %93 = vst [vmem:[#allocation2 + $0x110] sm:$0xff] 0.0
      %94 = vst [vmem:[#allocation2 + $0x118] sm:$0xff] 0.0
      %95 = vst [vmem:[#allocation2 + $0x120] sm:$0xff] 0.0
      %96 = vst [vmem:[#allocation2 + $0x128] sm:$0xff] 0.0
      %97 = vst [vmem:[#allocation2 + $0x130] sm:$0xff] 0.0
      %98 = vst [vmem:[#allocation2 + $0x138] sm:$0xff] 0.0
      %99 = vst [vmem:[#allocation2 + $0x140] sm:$0xff] 0.0
      %100 = vst [vmem:[#allocation2 + $0x148] sm:$0xff] 0.0
      %101 = vst [vmem:[#allocation2 + $0x150] sm:$0xff] 0.0
      %102 = vst [vmem:[#allocation2 + $0x158] sm:$0xff] 0.0
      %103 = vst [vmem:[#allocation2 + $0x160] sm:$0xff] 0.0
      %104 = vst [vmem:[#allocation2 + $0x168] sm:$0xff] 0.0
      %105 = vst [vmem:[#allocation2 + $0x170] sm:$0xff] 0.0
      %106 = vst [vmem:[#allocation2 + $0x178] sm:$0xff] 0.0
      %107 = vst [vmem:[#allocation2 + $0x180] sm:$0xff] 0.0
      %108 = vst [vmem:[#allocation2 + $0x188] sm:$0xff] 0.0
      %109 = vst [vmem:[#allocation2 + $0x190] sm:$0xff] 0.0
      %110 = vst [vmem:[#allocation2 + $0x198] sm:$0xff] 0.0
      %111 = vst [vmem:[#allocation2 + $0x1a0] sm:$0xff] 0.0
      %112 = vst [vmem:[#allocation2 + $0x1a8] sm:$0xff] 0.0
      %113 = vst [vmem:[#allocation2 + $0x1b0] sm:$0xff] 0.0
      %114 = vst [vmem:[#allocation2 + $0x1b8] sm:$0xff] 0.0
      %115 = vst [vmem:[#allocation2 + $0x1c0] sm:$0xff] 0.0
      %116 = vst [vmem:[#allocation2 + $0x1c8] sm:$0xff] 0.0
      %117 = vst [vmem:[#allocation2 + $0x1d0] sm:$0xff] 0.0
      %118 = vst [vmem:[#allocation2 + $0x1d8] sm:$0xff] 0.0
      %119 = vst [vmem:[#allocation2 + $0x1e0] sm:$0xff] 0.0
      %120 = vst [vmem:[#allocation2 + $0x1e8] sm:$0xff] 0.0
      %121 = vst [vmem:[#allocation2 + $0x1f0] sm:$0xff] 0.0
      %122 = vst [vmem:[#allocation2 + $0x1f8] sm:$0xff] 0.0
    $region29: #{convstem_forward.5} parent=1 // pred_fallthru
      _
    %v123 = vld [vmem:[#allocation2] sm:$0xff]
    %v124 = vld [vmem:[#allocation2 + $0x8] sm:$0xff]
    %v125 = vld [vmem:[#allocation2 + $0x10] sm:$0xff]
    %v126 = vld [vmem:[#allocation2 + $0x18] sm:$0xff]
    %v127 = vld [vmem:[#allocation2 + $0x20] sm:$0xff]
    %v128 = vld [vmem:[#allocation2 + $0x28] sm:$0xff]
    %v129 = vld [vmem:[#allocation2 + $0x30] sm:$0xff]
    %v130 = vld [vmem:[#allocation2 + $0x38] sm:$0xff]
    %v131 = vld [vmem:[#allocation2 + $0x40] sm:$0xff]
    %v132 = vld [vmem:[#allocation2 + $0x48] sm:$0xff]
    %v133 = vld [vmem:[#allocation2 + $0x50] sm:$0xff]
    %v134 = vld [vmem:[#allocation2 + $0x58] sm:$0xff]
    %v135 = vld [vmem:[#allocation2 + $0x60] sm:$0xff]
    %v136 = vld [vmem:[#allocation2 + $0x68] sm:$0xff]
    %v137 = vld [vmem:[#allocation2 + $0x70] sm:$0xff]
    %v138 = vld [vmem:[#allocation2 + $0x78] sm:$0xff]
    %v139 = vld [vmem:[#allocation2 + $0x80] sm:$0xff]
    %v140 = vld [vmem:[#allocation2 + $0x88] sm:$0xff]
    %v141 = vld [vmem:[#allocation2 + $0x90] sm:$0xff]
    %v142 = vld [vmem:[#allocation2 + $0x98] sm:$0xff]
    %v143 = vld [vmem:[#allocation2 + $0xa0] sm:$0xff]
    %v144 = vld [vmem:[#allocation2 + $0xa8] sm:$0xff]
    %v145 = vld [vmem:[#allocation2 + $0xb0] sm:$0xff]
    %v146 = vld [vmem:[#allocation2 + $0xb8] sm:$0xff]
    %v147 = vld [vmem:[#allocation2 + $0xc0] sm:$0xff]
    %v148 = vld [vmem:[#allocation2 + $0xc8] sm:$0xff]
    %v149 = vld [vmem:[#allocation2 + $0xd0] sm:$0xff]
    %v150 = vld [vmem:[#allocation2 + $0xd8] sm:$0xff]
    %v151 = vld [vmem:[#allocation2 + $0xe0] sm:$0xff]
    %v152 = vld [vmem:[#allocation2 + $0xe8] sm:$0xff]
    %v153 = vld [vmem:[#allocation2 + $0xf0] sm:$0xff]
    %v154 = vld [vmem:[#allocation2 + $0xf8] sm:$0xff]
    %v155 = vld [vmem:[#allocation2 + $0x100] sm:$0xff]
    %v156 = vld [vmem:[#allocation2 + $0x108] sm:$0xff]
    %v157 = vld [vmem:[#allocation2 + $0x110] sm:$0xff]
    %v158 = vld [vmem:[#allocation2 + $0x118] sm:$0xff]
    %v159 = vld [vmem:[#allocation2 + $0x120] sm:$0xff]
    %v160 = vld [vmem:[#allocation2 + $0x128] sm:$0xff]
    %v161 = vld [vmem:[#allocation2 + $0x130] sm:$0xff]
    %v162 = vld [vmem:[#allocation2 + $0x138] sm:$0xff]
    %v163 = vld [vmem:[#allocation2 + $0x140] sm:$0xff]
    %v164 = vld [vmem:[#allocation2 + $0x148] sm:$0xff]
    %v165 = vld [vmem:[#allocation2 + $0x150] sm:$0xff]
    %v166 = vld [vmem:[#allocation2 + $0x158] sm:$0xff]
    %v167 = vld [vmem:[#allocation2 + $0x160] sm:$0xff]
    %v168 = vld [vmem:[#allocation2 + $0x168] sm:$0xff]
    %v169 = vld [vmem:[#allocation2 + $0x170] sm:$0xff]
    %v170 = vld [vmem:[#allocation2 + $0x178] sm:$0xff]
    %v171 = vld [vmem:[#allocation2 + $0x180] sm:$0xff]
    %v172 = vld [vmem:[#allocation2 + $0x188] sm:$0xff]
    %v173 = vld [vmem:[#allocation2 + $0x190] sm:$0xff]
    %v174 = vld [vmem:[#allocation2 + $0x198] sm:$0xff]
    %v175 = vld [vmem:[#allocation2 + $0x1a0] sm:$0xff]
    %v176 = vld [vmem:[#allocation2 + $0x1a8] sm:$0xff]
    %v177 = vld [vmem:[#allocation2 + $0x1b0] sm:$0xff]
    %v178 = vld [vmem:[#allocation2 + $0x1b8] sm:$0xff]
    %v179 = vld [vmem:[#allocation2 + $0x1c0] sm:$0xff]
    %v180 = vld [vmem:[#allocation2 + $0x1c8] sm:$0xff]
    %v181 = vld [vmem:[#allocation2 + $0x1d0] sm:$0xff]
    %v182 = vld [vmem:[#allocation2 + $0x1d8] sm:$0xff]
    %v183 = vld [vmem:[#allocation2 + $0x1e0] sm:$0xff]
    %v184 = vld [vmem:[#allocation2 + $0x1e8] sm:$0xff]
    %v185 = vld [vmem:[#allocation2 + $0x1f0] sm:$0xff]
    %v186 = vld [vmem:[#allocation2 + $0x1f8] sm:$0xff]
    %v187 = vld [vmem:[#allocation3] sm:$0xf]
    %v188 = vld [vmem:[#allocation3 + $0x4] sm:$0xf]
    %v189 = vld [vmem:[#allocation3 + $0x8] sm:$0xf]
    %v190 = vld [vmem:[#allocation3 + $0xc] sm:$0xf]
    %v191 = vld [vmem:[#allocation3 + $0x10] sm:$0xf]
    %v192 = vld [vmem:[#allocation3 + $0x14] sm:$0xf]
    %v193 = vld [vmem:[#allocation3 + $0x18] sm:$0xf]
    %v194 = vld [vmem:[#allocation3 + $0x1c] sm:$0xf]
    %v195 = vld [vmem:[#allocation3 + $0x20] sm:$0xf]
    %v196 = vld [vmem:[#allocation3 + $0x24] sm:$0xf]
    %v197 = vld [vmem:[#allocation3 + $0x28] sm:$0xf]
    %v198 = vld [vmem:[#allocation3 + $0x2c] sm:$0xf]
    %v199 = vld [vmem:[#allocation3 + $0x30] sm:$0xf]
    %v200 = vld [vmem:[#allocation3 + $0x34] sm:$0xf]
    %v201 = vld [vmem:[#allocation3 + $0x38] sm:$0xf]
    %v202 = vld [vmem:[#allocation3 + $0x3c] sm:$0xf]
    %v203 = vld [vmem:[#allocation3 + $0x40] sm:$0xf]
    %v204 = vld [vmem:[#allocation3 + $0x44] sm:$0xf]
    %v205 = vld [vmem:[#allocation3 + $0x48] sm:$0xf]
    %v206 = vld [vmem:[#allocation3 + $0x4c] sm:$0xf]
    %v207 = vld [vmem:[#allocation3 + $0x50] sm:$0xf]
    %v208 = vld [vmem:[#allocation3 + $0x54] sm:$0xf]
    %v209 = vld [vmem:[#allocation3 + $0x58] sm:$0xf]
    %v210 = vld [vmem:[#allocation3 + $0x5c] sm:$0xf]
    %v211 = vld [vmem:[#allocation3 + $0x60] sm:$0xf]
    %v212 = vld [vmem:[#allocation3 + $0x64] sm:$0xf]
    %v213 = vld [vmem:[#allocation3 + $0x68] sm:$0xf]
    %v214 = vld [vmem:[#allocation3 + $0x6c] sm:$0xf]
    %v215 = vld [vmem:[#allocation3 + $0x70] sm:$0xf]
    %v216 = vld [vmem:[#allocation3 + $0x74] sm:$0xf]
    %v217 = vld [vmem:[#allocation3 + $0x78] sm:$0xf]
    %v218 = vld [vmem:[#allocation3 + $0x7c] sm:$0xf]
    %v219 = vld [vmem:[#allocation3 + $0x80] sm:$0xf]
    %v220 = vld [vmem:[#allocation3 + $0x84] sm:$0xf]
    %v221 = vld [vmem:[#allocation3 + $0x88] sm:$0xf]
    %v222 = vld [vmem:[#allocation3 + $0x8c] sm:$0xf]
    %v223 = vld [vmem:[#allocation3 + $0x90] sm:$0xf]
    %v224 = vld [vmem:[#allocation3 + $0x94] sm:$0xf]
    %v225 = vld [vmem:[#allocation3 + $0x98] sm:$0xf]
    %v226 = vld [vmem:[#allocation3 + $0x9c] sm:$0xf]
    %v227 = vld [vmem:[#allocation3 + $0xa0] sm:$0xf]
    %v228 = vld [vmem:[#allocation3 + $0xa4] sm:$0xf]
    %v229 = vld [vmem:[#allocation3 + $0xa8] sm:$0xf]
    %v230 = vld [vmem:[#allocation3 + $0xac] sm:$0xf]
    %v231 = vld [vmem:[#allocation3 + $0xb0] sm:$0xf]
    %v232 = vld [vmem:[#allocation3 + $0xb4] sm:$0xf]
    %v233 = vld [vmem:[#allocation3 + $0xb8] sm:$0xf]
    %v234 = vld [vmem:[#allocation3 + $0xbc] sm:$0xf]
    %v235 = vld [vmem:[#allocation3 + $0xc0] sm:$0xf]
    %v236 = vld [vmem:[#allocation3 + $0xc4] sm:$0xf]
    %v237 = vld [vmem:[#allocation3 + $0xc8] sm:$0xf]
    %v238 = vld [vmem:[#allocation3 + $0xcc] sm:$0xf]
    %v239 = vld [vmem:[#allocation3 + $0xd0] sm:$0xf]
    %v240 = vld [vmem:[#allocation3 + $0xd4] sm:$0xf]
    %v241 = vld [vmem:[#allocation3 + $0xd8] sm:$0xf]
    %v242 = vld [vmem:[#allocation3 + $0xdc] sm:$0xf]
    %v243 = vld [vmem:[#allocation3 + $0xe0] sm:$0xf]
    %v244 = vld [vmem:[#allocation3 + $0xe4] sm:$0xf]
    %v245 = vld [vmem:[#allocation3 + $0xe8] sm:$0xf]
    %v246 = vld [vmem:[#allocation3 + $0xec] sm:$0xf]
    %v247 = vld [vmem:[#allocation3 + $0xf0] sm:$0xf]
    %v248 = vld [vmem:[#allocation3 + $0xf4] sm:$0xf]
    %v249 = vld [vmem:[#allocation3 + $0xf8] sm:$0xf]
    %v250 = vld [vmem:[#allocation3 + $0xfc] sm:$0xf]
    %v251 = vld [vmem:[#allocation6] sm:$0xf]
    %v252 = vld [vmem:[#allocation6 + $0x4] sm:$0xf]
    %v253 = vld [vmem:[#allocation6 + $0x8] sm:$0xf]
    %v254 = vld [vmem:[#allocation6 + $0xc] sm:$0xf]
    %v255 = vld [vmem:[#allocation6 + $0x10] sm:$0xf]
    %v256 = vld [vmem:[#allocation6 + $0x14] sm:$0xf]
    %v257 = vld [vmem:[#allocation6 + $0x18] sm:$0xf]
    %v258 = vld [vmem:[#allocation6 + $0x1c] sm:$0xf]
    %v259 = vld [vmem:[#allocation6 + $0x20] sm:$0xf]
    %v260 = vld [vmem:[#allocation6 + $0x24] sm:$0xf]
    %v261 = vld [vmem:[#allocation6 + $0x28] sm:$0xf]
    %v262 = vld [vmem:[#allocation6 + $0x2c] sm:$0xf]
    %v263 = vld [vmem:[#allocation6 + $0x30] sm:$0xf]
    %v264 = vld [vmem:[#allocation6 + $0x34] sm:$0xf]
    %v265 = vld [vmem:[#allocation6 + $0x38] sm:$0xf]
    %v266 = vld [vmem:[#allocation6 + $0x3c] sm:$0xf]
    %v331 = vunpack.c.l.b16 %v187
    %v332 = vunpack.c.l.b16 %v188
    %v333 = vunpack.c.l.b16 %v189
    %v334 = vunpack.c.l.b16 %v190
    %v335 = vunpack.c.l.b16 %v191
    %v336 = vunpack.c.l.b16 %v192
    %v337 = vunpack.c.l.b16 %v193
    %v338 = vunpack.c.l.b16 %v194
    %v339 = vunpack.c.l.b16 %v195
    %v340 = vunpack.c.l.b16 %v196
    %v341 = vunpack.c.l.b16 %v197
    %v342 = vunpack.c.l.b16 %v198
    %v343 = vunpack.c.l.b16 %v199
    %v344 = vunpack.c.l.b16 %v200
    %v345 = vunpack.c.l.b16 %v201
    %v346 = vunpack.c.l.b16 %v202
    %v347 = vunpack.c.l.b16 %v203
    %v348 = vunpack.c.l.b16 %v204
    %v349 = vunpack.c.l.b16 %v205
    %v350 = vunpack.c.l.b16 %v206
    %v351 = vunpack.c.l.b16 %v207
    %v352 = vunpack.c.l.b16 %v208
    %v353 = vunpack.c.l.b16 %v209
    %v354 = vunpack.c.l.b16 %v210
    %v355 = vunpack.c.l.b16 %v211
    %v356 = vunpack.c.l.b16 %v212
    %v357 = vunpack.c.l.b16 %v213
    %v358 = vunpack.c.l.b16 %v214
    %v359 = vunpack.c.l.b16 %v215
    %v360 = vunpack.c.l.b16 %v216
    %v361 = vunpack.c.l.b16 %v217
    %v362 = vunpack.c.l.b16 %v218
    %v363 = vunpack.c.l.b16 %v219
    %v364 = vunpack.c.l.b16 %v220
    %v365 = vunpack.c.l.b16 %v221
    %v366 = vunpack.c.l.b16 %v222
    %v367 = vunpack.c.l.b16 %v223
    %v368 = vunpack.c.l.b16 %v224
    %v369 = vunpack.c.l.b16 %v225
    %v370 = vunpack.c.l.b16 %v226
    %v371 = vunpack.c.l.b16 %v227
    %v372 = vunpack.c.l.b16 %v228
    %v373 = vunpack.c.l.b16 %v229
    %v374 = vunpack.c.l.b16 %v230
    %v375 = vunpack.c.l.b16 %v231
    %v376 = vunpack.c.l.b16 %v232
    %v377 = vunpack.c.l.b16 %v233
    %v378 = vunpack.c.l.b16 %v234
    %v379 = vunpack.c.l.b16 %v235
    %v380 = vunpack.c.l.b16 %v236
    %v381 = vunpack.c.l.b16 %v237
    %v382 = vunpack.c.l.b16 %v238
    %v383 = vunpack.c.l.b16 %v239
    %v384 = vunpack.c.l.b16 %v240
    %v385 = vunpack.c.l.b16 %v241
    %v386 = vunpack.c.l.b16 %v242
    %v387 = vunpack.c.l.b16 %v243
    %v388 = vunpack.c.l.b16 %v244
    %v389 = vunpack.c.l.b16 %v245
    %v390 = vunpack.c.l.b16 %v246
    %v391 = vunpack.c.l.b16 %v247
    %v392 = vunpack.c.l.b16 %v248
    %v393 = vunpack.c.l.b16 %v249
    %v394 = vunpack.c.l.b16 %v250
    %v395 = vpack.c.b16 %v332, %v331
    %v396 = vpack.c.b16 %v334, %v333
    %v397 = vpack.c.b16 %v336, %v335
    %v398 = vpack.c.b16 %v338, %v337
    %v399 = vpack.c.b16 %v340, %v339
    %v400 = vpack.c.b16 %v342, %v341
    %v401 = vpack.c.b16 %v344, %v343
    %v402 = vpack.c.b16 %v346, %v345
    %v403 = vpack.c.b16 %v348, %v347
    %v404 = vpack.c.b16 %v350, %v349
    %v405 = vpack.c.b16 %v352, %v351
    %v406 = vpack.c.b16 %v354, %v353
    %v407 = vpack.c.b16 %v356, %v355
    %v408 = vpack.c.b16 %v358, %v357
    %v409 = vpack.c.b16 %v360, %v359
    %v410 = vpack.c.b16 %v362, %v361
    %v411 = vpack.c.b16 %v364, %v363
    %v412 = vpack.c.b16 %v366, %v365
    %v413 = vpack.c.b16 %v368, %v367
    %v414 = vpack.c.b16 %v370, %v369
    %v415 = vpack.c.b16 %v372, %v371
    %v416 = vpack.c.b16 %v374, %v373
    %v417 = vpack.c.b16 %v376, %v375
    %v418 = vpack.c.b16 %v378, %v377
    %v419 = vpack.c.b16 %v380, %v379
    %v420 = vpack.c.b16 %v382, %v381
    %v421 = vpack.c.b16 %v384, %v383
    %v422 = vpack.c.b16 %v386, %v385
    %v423 = vpack.c.b16 %v388, %v387
    %v424 = vpack.c.b16 %v390, %v389
    %v425 = vpack.c.b16 %v392, %v391
    %v426 = vpack.c.b16 %v394, %v393
    %v475 = vunpack.c.l.b16 %v251
    %v476 = vunpack.c.l.b16 %v252
    %v477 = vunpack.c.l.b16 %v253
    %v478 = vunpack.c.l.b16 %v254
    %v479 = vunpack.c.l.b16 %v255
    %v480 = vunpack.c.l.b16 %v256
    %v481 = vunpack.c.l.b16 %v257
    %v482 = vunpack.c.l.b16 %v258
    %v483 = vunpack.c.l.b16 %v259
    %v484 = vunpack.c.l.b16 %v260
    %v485 = vunpack.c.l.b16 %v261
    %v486 = vunpack.c.l.b16 %v262
    %v487 = vunpack.c.l.b16 %v263
    %v488 = vunpack.c.l.b16 %v264
    %v489 = vunpack.c.l.b16 %v265
    %v490 = vunpack.c.l.b16 %v266
    %v491 = vpack.c.b16 %v476, %v475
    %v492 = vpack.c.b16 %v478, %v477
    %v493 = vpack.c.b16 %v480, %v479
    %v494 = vpack.c.b16 %v482, %v481
    %v495 = vpack.c.b16 %v484, %v483
    %v496 = vpack.c.b16 %v486, %v485
    %v497 = vpack.c.b16 %v488, %v487
    %v498 = vpack.c.b16 %v490, %v489
    %507 = vmatprep.subr.bf16.mxu0 0
    %508 = vmatpush1.bf16.msra.mxu0 %v491
    %509 = vmatprep.subr.bf16.mxu0 0
    %510 = vmatpush1.bf16.msra.mxu0 %v492
    %511 = vmatprep.subr.bf16.mxu0 0
    %512 = vmatpush1.bf16.msra.mxu0 %v493
    %513 = vmatprep.subr.bf16.mxu0 0
    %514 = vmatpush1.bf16.msra.mxu0 %v494
    %515 = vmatprep.subr.bf16.mxu0 0
    %516 = vmatpush1.bf16.msra.mxu0 %v495
    %517 = vmatprep.subr.bf16.mxu0 0
    %518 = vmatpush1.bf16.msra.mxu0 %v496
    %519 = vmatprep.subr.bf16.mxu0 0
    %520 = vmatpush1.bf16.msra.mxu0 %v497
    %521 = vmatprep.subr.bf16.mxu0 0
    %522 = vmatpush1.bf16.msra.mxu0 %v498
    %523 = vmatprep.subr.bf16.mxu0 0
    %524 = vmatpush1.bf16.msra.mxu0 0
    %525 = vmatprep.subr.bf16.mxu0 0
    %526 = vmatpush1.bf16.msra.mxu0 0
    %527 = vmatprep.subr.bf16.mxu0 0
    %528 = vmatpush1.bf16.msra.mxu0 0
    %529 = vmatprep.subr.bf16.mxu0 0
    %530 = vmatpush1.bf16.msra.mxu0 0
    %531 = vmatprep.subr.bf16.mxu0 0
    %532 = vmatpush1.bf16.msra.mxu0 0
    %533 = vmatprep.subr.bf16.mxu0 0
    %534 = vmatpush1.bf16.msra.mxu0 0
    %535 = vmatprep.subr.bf16.mxu0 0
    %536 = vmatpush1.bf16.msra.mxu0 0
    %537 = vmatprep.subr.bf16.mxu0 0
    %538 = vmatpush1.bf16.msra.mxu0 0
    %539 = vmatprep.mubr.bf16.mxu0 0
    %540 = vmatmul.mubr.bf16.gmra.mrb[0].mxu0 %v395
    %v541 = vpop.f32.mrb[0].mxu0
    %v542 = vadd.f32 0.0, %v541
    %v543 = vpop.f32.mrb[0].mxu0
    %v544 = vpop.f32.mrb[0].mxu0
    %v545 = vadd.f32 0.0, %v544
    %v546 = vpop.f32.mrb[0].mxu0
    %547 = vmatprep.mubr.bf16.mxu0 0
    %548 = vmatmul.mubr.bf16.gmra.mrb[0].mxu0 %v396
    %v549 = vpop.f32.mrb[0].mxu0
    %v550 = vadd.f32 0.0, %v549
    %v551 = vpop.f32.mrb[0].mxu0
    %v552 = vpop.f32.mrb[0].mxu0
    %v553 = vadd.f32 0.0, %v552
    %v554 = vpop.f32.mrb[0].mxu0
    %555 = vmatprep.mubr.bf16.mxu0 0
    %556 = vmatmul.mubr.bf16.gmra.mrb[0].mxu0 %v397
    %v557 = vpop.f32.mrb[0].mxu0
    %v558 = vadd.f32 0.0, %v557
    %v559 = vpop.f32.mrb[0].mxu0
    %v560 = vpop.f32.mrb[0].mxu0
    %v561 = vadd.f32 0.0, %v560
    %v562 = vpop.f32.mrb[0].mxu0
    %563 = vmatprep.mubr.bf16.mxu0 0
    %564 = vmatmul.mubr.bf16.gmra.mrb[0].mxu0 %v398
    %v565 = vpop.f32.mrb[0].mxu0
    %v566 = vadd.f32 0.0, %v565
    %v567 = vpop.f32.mrb[0].mxu0
    %v568 = vpop.f32.mrb[0].mxu0
    %v569 = vadd.f32 0.0, %v568
    %v570 = vpop.f32.mrb[0].mxu0
    %571 = vmatprep.mubr.bf16.mxu0 0
    %572 = vmatmul.mubr.bf16.gmra.mrb[0].mxu0 %v399
    %v573 = vpop.f32.mrb[0].mxu0
    %v574 = vadd.f32 0.0, %v573
    %v575 = vpop.f32.mrb[0].mxu0
    %v576 = vpop.f32.mrb[0].mxu0
    %v577 = vadd.f32 0.0, %v576
    %v578 = vpop.f32.mrb[0].mxu0
    %579 = vmatprep.mubr.bf16.mxu0 0
    %580 = vmatmul.mubr.bf16.gmra.mrb[0].mxu0 %v400
    %v581 = vpop.f32.mrb[0].mxu0
    %v582 = vadd.f32 0.0, %v581
    %v583 = vpop.f32.mrb[0].mxu0
    %v584 = vpop.f32.mrb[0].mxu0
    %v585 = vadd.f32 0.0, %v584
    %v586 = vpop.f32.mrb[0].mxu0
    %587 = vmatprep.mubr.bf16.mxu0 0
    %588 = vmatmul.mubr.bf16.gmra.mrb[0].mxu0 %v401
    %v589 = vpop.f32.mrb[0].mxu0
    %v590 = vadd.f32 0.0, %v589
    %v591 = vpop.f32.mrb[0].mxu0
    %v592 = vpop.f32.mrb[0].mxu0
    %v593 = vadd.f32 0.0, %v592
    %v594 = vpop.f32.mrb[0].mxu0
    %595 = vmatprep.mubr.bf16.mxu0 0
    %596 = vmatmul.mubr.bf16.gmra.mrb[0].mxu0 %v402
    %v597 = vpop.f32.mrb[0].mxu0
    %v598 = vadd.f32 0.0, %v597
    %v599 = vpop.f32.mrb[0].mxu0
    %v600 = vpop.f32.mrb[0].mxu0
    %v601 = vadd.f32 0.0, %v600
    %v602 = vpop.f32.mrb[0].mxu0
    %603 = vmatprep.mubr.bf16.mxu0 0
    %604 = vmatmul.mubr.bf16.gmra.mrb[0].mxu0 %v403
    %v605 = vpop.f32.mrb[0].mxu0
    %v606 = vadd.f32 0.0, %v605
    %v607 = vpop.f32.mrb[0].mxu0
    %v608 = vpop.f32.mrb[0].mxu0
    %v609 = vadd.f32 0.0, %v608
    %v610 = vpop.f32.mrb[0].mxu0
    %611 = vmatprep.mubr.bf16.mxu0 0
    %612 = vmatmul.mubr.bf16.gmra.mrb[0].mxu0 %v404
    %v613 = vpop.f32.mrb[0].mxu0
    %v614 = vadd.f32 0.0, %v613
    %v615 = vpop.f32.mrb[0].mxu0
    %v616 = vpop.f32.mrb[0].mxu0
    %v617 = vadd.f32 0.0, %v616
    %v618 = vpop.f32.mrb[0].mxu0
    %619 = vmatprep.mubr.bf16.mxu0 0
    %620 = vmatmul.mubr.bf16.gmra.mrb[0].mxu0 %v405
    %v621 = vpop.f32.mrb[0].mxu0
    %v622 = vadd.f32 0.0, %v621
    %v623 = vpop.f32.mrb[0].mxu0
    %v624 = vpop.f32.mrb[0].mxu0
    %v625 = vadd.f32 0.0, %v624
    %v626 = vpop.f32.mrb[0].mxu0
    %627 = vmatprep.mubr.bf16.mxu0 0
    %628 = vmatmul.mubr.bf16.gmra.mrb[0].mxu0 %v406
    %v629 = vpop.f32.mrb[0].mxu0
    %v630 = vadd.f32 0.0, %v629
    %v631 = vpop.f32.mrb[0].mxu0
    %v632 = vpop.f32.mrb[0].mxu0
    %v633 = vadd.f32 0.0, %v632
    %v634 = vpop.f32.mrb[0].mxu0
    %635 = vmatprep.mubr.bf16.mxu0 0
    %636 = vmatmul.mubr.bf16.gmra.mrb[0].mxu0 %v407
    %v637 = vpop.f32.mrb[0].mxu0
    %v638 = vadd.f32 0.0, %v637
    %v639 = vpop.f32.mrb[0].mxu0
    %v640 = vpop.f32.mrb[0].mxu0
    %v641 = vadd.f32 0.0, %v640
    %v642 = vpop.f32.mrb[0].mxu0
    %643 = vmatprep.mubr.bf16.mxu0 0
    %644 = vmatmul.mubr.bf16.gmra.mrb[0].mxu0 %v408
    %v645 = vpop.f32.mrb[0].mxu0
    %v646 = vadd.f32 0.0, %v645
    %v647 = vpop.f32.mrb[0].mxu0
    %v648 = vpop.f32.mrb[0].mxu0
    %v649 = vadd.f32 0.0, %v648
    %v650 = vpop.f32.mrb[0].mxu0
    %651 = vmatprep.mubr.bf16.mxu0 0
    %652 = vmatmul.mubr.bf16.gmra.mrb[0].mxu0 %v409
    %v653 = vpop.f32.mrb[0].mxu0
    %v654 = vadd.f32 0.0, %v653
    %v655 = vpop.f32.mrb[0].mxu0
    %v656 = vpop.f32.mrb[0].mxu0
    %v657 = vadd.f32 0.0, %v656
    %v658 = vpop.f32.mrb[0].mxu0
    %659 = vmatprep.mubr.bf16.mxu0 0
    %660 = vmatmul.mubr.bf16.gmra.mrb[0].mxu0 %v410
    %v661 = vpop.f32.mrb[0].mxu0
    %v662 = vadd.f32 0.0, %v661
    %v663 = vpop.f32.mrb[0].mxu0
    %v664 = vpop.f32.mrb[0].mxu0
    %v665 = vadd.f32 0.0, %v664
    %v666 = vpop.f32.mrb[0].mxu0
    %667 = vmatprep.mubr.bf16.mxu0 0
    %668 = vmatmul.mubr.bf16.gmra.mrb[0].mxu0 %v411
    %v669 = vpop.f32.mrb[0].mxu0
    %v670 = vadd.f32 0.0, %v669
    %v671 = vpop.f32.mrb[0].mxu0
    %v672 = vpop.f32.mrb[0].mxu0
    %v673 = vadd.f32 0.0, %v672
    %v674 = vpop.f32.mrb[0].mxu0
    %675 = vmatprep.mubr.bf16.mxu0 0
    %676 = vmatmul.mubr.bf16.gmra.mrb[0].mxu0 %v412
    %v677 = vpop.f32.mrb[0].mxu0
    %v678 = vadd.f32 0.0, %v677
    %v679 = vpop.f32.mrb[0].mxu0
    %v680 = vpop.f32.mrb[0].mxu0
    %v681 = vadd.f32 0.0, %v680
    %v682 = vpop.f32.mrb[0].mxu0
    %683 = vmatprep.mubr.bf16.mxu0 0
    %684 = vmatmul.mubr.bf16.gmra.mrb[0].mxu0 %v413
    %v685 = vpop.f32.mrb[0].mxu0
    %v686 = vadd.f32 0.0, %v685
    %v687 = vpop.f32.mrb[0].mxu0
    %v688 = vpop.f32.mrb[0].mxu0
    %v689 = vadd.f32 0.0, %v688
    %v690 = vpop.f32.mrb[0].mxu0
    %691 = vmatprep.mubr.bf16.mxu0 0
    %692 = vmatmul.mubr.bf16.gmra.mrb[0].mxu0 %v414
    %v693 = vpop.f32.mrb[0].mxu0
    %v694 = vadd.f32 0.0, %v693
    %v695 = vpop.f32.mrb[0].mxu0
    %v696 = vpop.f32.mrb[0].mxu0
    %v697 = vadd.f32 0.0, %v696
    %v698 = vpop.f32.mrb[0].mxu0
    %699 = vmatprep.mubr.bf16.mxu0 0
    %700 = vmatmul.mubr.bf16.gmra.mrb[0].mxu0 %v415
    %v701 = vpop.f32.mrb[0].mxu0
    %v702 = vadd.f32 0.0, %v701
    %v703 = vpop.f32.mrb[0].mxu0
    %v704 = vpop.f32.mrb[0].mxu0
    %v705 = vadd.f32 0.0, %v704
    %v706 = vpop.f32.mrb[0].mxu0
    %707 = vmatprep.mubr.bf16.mxu0 0
    %708 = vmatmul.mubr.bf16.gmra.mrb[0].mxu0 %v416
    %v709 = vpop.f32.mrb[0].mxu0
    %v710 = vadd.f32 0.0, %v709
    %v711 = vpop.f32.mrb[0].mxu0
    %v712 = vpop.f32.mrb[0].mxu0
    %v713 = vadd.f32 0.0, %v712
    %v714 = vpop.f32.mrb[0].mxu0
    %715 = vmatprep.mubr.bf16.mxu0 0
    %716 = vmatmul.mubr.bf16.gmra.mrb[0].mxu0 %v417
    %v717 = vpop.f32.mrb[0].mxu0
    %v718 = vadd.f32 0.0, %v717
    %v719 = vpop.f32.mrb[0].mxu0
    %v720 = vpop.f32.mrb[0].mxu0
    %v721 = vadd.f32 0.0, %v720
    %v722 = vpop.f32.mrb[0].mxu0
    %723 = vmatprep.mubr.bf16.mxu0 0
    %724 = vmatmul.mubr.bf16.gmra.mrb[0].mxu0 %v418
    %v725 = vpop.f32.mrb[0].mxu0
    %v726 = vadd.f32 0.0, %v725
    %v727 = vpop.f32.mrb[0].mxu0
    %v728 = vpop.f32.mrb[0].mxu0
    %v729 = vadd.f32 0.0, %v728
    %v730 = vpop.f32.mrb[0].mxu0
    %731 = vmatprep.mubr.bf16.mxu0 0
    %732 = vmatmul.mubr.bf16.gmra.mrb[0].mxu0 %v419
    %v733 = vpop.f32.mrb[0].mxu0
    %v734 = vadd.f32 0.0, %v733
    %v735 = vpop.f32.mrb[0].mxu0
    %v736 = vpop.f32.mrb[0].mxu0
    %v737 = vadd.f32 0.0, %v736
    %v738 = vpop.f32.mrb[0].mxu0
    %739 = vmatprep.mubr.bf16.mxu0 0
    %740 = vmatmul.mubr.bf16.gmra.mrb[0].mxu0 %v420
    %v741 = vpop.f32.mrb[0].mxu0
    %v742 = vadd.f32 0.0, %v741
    %v743 = vpop.f32.mrb[0].mxu0
    %v744 = vpop.f32.mrb[0].mxu0
    %v745 = vadd.f32 0.0, %v744
    %v746 = vpop.f32.mrb[0].mxu0
    %747 = vmatprep.mubr.bf16.mxu0 0
    %748 = vmatmul.mubr.bf16.gmra.mrb[0].mxu0 %v421
    %v749 = vpop.f32.mrb[0].mxu0
    %v750 = vadd.f32 0.0, %v749
    %v751 = vpop.f32.mrb[0].mxu0
    %v752 = vpop.f32.mrb[0].mxu0
    %v753 = vadd.f32 0.0, %v752
    %v754 = vpop.f32.mrb[0].mxu0
    %755 = vmatprep.mubr.bf16.mxu0 0
    %756 = vmatmul.mubr.bf16.gmra.mrb[0].mxu0 %v422
    %v757 = vpop.f32.mrb[0].mxu0
    %v758 = vadd.f32 0.0, %v757
    %v759 = vpop.f32.mrb[0].mxu0
    %v760 = vpop.f32.mrb[0].mxu0
    %v761 = vadd.f32 0.0, %v760
    %v762 = vpop.f32.mrb[0].mxu0
    %763 = vmatprep.mubr.bf16.mxu0 0
    %764 = vmatmul.mubr.bf16.gmra.mrb[0].mxu0 %v423
    %v765 = vpop.f32.mrb[0].mxu0
    %v766 = vadd.f32 0.0, %v765
    %v767 = vpop.f32.mrb[0].mxu0
    %v768 = vpop.f32.mrb[0].mxu0
    %v769 = vadd.f32 0.0, %v768
    %v770 = vpop.f32.mrb[0].mxu0
    %771 = vmatprep.mubr.bf16.mxu0 0
    %772 = vmatmul.mubr.bf16.gmra.mrb[0].mxu0 %v424
    %v773 = vpop.f32.mrb[0].mxu0
    %v774 = vadd.f32 0.0, %v773
    %v775 = vpop.f32.mrb[0].mxu0
    %v776 = vpop.f32.mrb[0].mxu0
    %v777 = vadd.f32 0.0, %v776
    %v778 = vpop.f32.mrb[0].mxu0
    %779 = vmatprep.mubr.bf16.mxu0 0
    %780 = vmatmul.mubr.bf16.gmra.mrb[0].mxu0 %v425
    %v781 = vpop.f32.mrb[0].mxu0
    %v782 = vadd.f32 0.0, %v781
    %v783 = vpop.f32.mrb[0].mxu0
    %v784 = vpop.f32.mrb[0].mxu0
    %v785 = vadd.f32 0.0, %v784
    %v786 = vpop.f32.mrb[0].mxu0
    %787 = vmatprep.mubr.bf16.mxu0 0
    %788 = vmatmul.mubr.bf16.gmra.mrb[0].mxu0 %v426
    %v789 = vpop.f32.mrb[0].mxu0
    %v790 = vadd.f32 0.0, %v789
    %v791 = vpop.f32.mrb[0].mxu0
    %v792 = vpop.f32.mrb[0].mxu0
    %v793 = vadd.f32 0.0, %v792
    %v794 = vpop.f32.mrb[0].mxu0
    %795 = vdwg.mxu0
    %v796 = vadd.f32 %v123, %v542
    %v797 = vadd.f32 %v124, %v545
    %v798 = vadd.f32 %v125, %v550
    %v799 = vadd.f32 %v126, %v553
    %v800 = vadd.f32 %v127, %v558
    %v801 = vadd.f32 %v128, %v561
    %v802 = vadd.f32 %v129, %v566
    %v803 = vadd.f32 %v130, %v569
    %v804 = vadd.f32 %v131, %v574
    %v805 = vadd.f32 %v132, %v577
    %v806 = vadd.f32 %v133, %v582
    %v807 = vadd.f32 %v134, %v585
    %v808 = vadd.f32 %v135, %v590
    %v809 = vadd.f32 %v136, %v593
    %v810 = vadd.f32 %v137, %v598
    %v811 = vadd.f32 %v138, %v601
    %v812 = vadd.f32 %v139, %v606
    %v813 = vadd.f32 %v140, %v609
    %v814 = vadd.f32 %v141, %v614
    %v815 = vadd.f32 %v142, %v617
    %v816 = vadd.f32 %v143, %v622
    %v817 = vadd.f32 %v144, %v625
    %v818 = vadd.f32 %v145, %v630
    %v819 = vadd.f32 %v146, %v633
    %v820 = vadd.f32 %v147, %v638
    %v821 = vadd.f32 %v148, %v641
    %v822 = vadd.f32 %v149, %v646
    %v823 = vadd.f32 %v150, %v649
    %v824 = vadd.f32 %v151, %v654
    %v825 = vadd.f32 %v152, %v657
    %v826 = vadd.f32 %v153, %v662
    %v827 = vadd.f32 %v154, %v665
    %v828 = vadd.f32 %v155, %v670
    %v829 = vadd.f32 %v156, %v673
    %v830 = vadd.f32 %v157, %v678
    %v831 = vadd.f32 %v158, %v681
    %v832 = vadd.f32 %v159, %v686
    %v833 = vadd.f32 %v160, %v689
    %v834 = vadd.f32 %v161, %v694
    %v835 = vadd.f32 %v162, %v697
    %v836 = vadd.f32 %v163, %v702
    %v837 = vadd.f32 %v164, %v705
    %v838 = vadd.f32 %v165, %v710
    %v839 = vadd.f32 %v166, %v713
    %v840 = vadd.f32 %v167, %v718
    %v841 = vadd.f32 %v168, %v721
    %v842 = vadd.f32 %v169, %v726
    %v843 = vadd.f32 %v170, %v729
    %v844 = vadd.f32 %v171, %v734
    %v845 = vadd.f32 %v172, %v737
    %v846 = vadd.f32 %v173, %v742
    %v847 = vadd.f32 %v174, %v745
    %v848 = vadd.f32 %v175, %v750
    %v849 = vadd.f32 %v176, %v753
    %v850 = vadd.f32 %v177, %v758
    %v851 = vadd.f32 %v178, %v761
    %v852 = vadd.f32 %v179, %v766
    %v853 = vadd.f32 %v180, %v769
    %v854 = vadd.f32 %v181, %v774
    %v855 = vadd.f32 %v182, %v777
    %v856 = vadd.f32 %v183, %v782
    %v857 = vadd.f32 %v184, %v785
    %v858 = vadd.f32 %v185, %v790
    %v859 = vadd.f32 %v186, %v793
    %860 = vst [vmem:[#allocation2] sm:$0xff] %v796
    %861 = vst [vmem:[#allocation2 + $0x8] sm:$0xff] %v797
    %862 = vst [vmem:[#allocation2 + $0x10] sm:$0xff] %v798
    %863 = vst [vmem:[#allocation2 + $0x18] sm:$0xff] %v799
    %864 = vst [vmem:[#allocation2 + $0x20] sm:$0xff] %v800
    %865 = vst [vmem:[#allocation2 + $0x28] sm:$0xff] %v801
    %866 = vst [vmem:[#allocation2 + $0x30] sm:$0xff] %v802
    %867 = vst [vmem:[#allocation2 + $0x38] sm:$0xff] %v803
    %868 = vst [vmem:[#allocation2 + $0x40] sm:$0xff] %v804
    %869 = vst [vmem:[#allocation2 + $0x48] sm:$0xff] %v805
    %870 = vst [vmem:[#allocation2 + $0x50] sm:$0xff] %v806
    %871 = vst [vmem:[#allocation2 + $0x58] sm:$0xff] %v807
    %872 = vst [vmem:[#allocation2 + $0x60] sm:$0xff] %v808
    %873 = vst [vmem:[#allocation2 + $0x68] sm:$0xff] %v809
    %874 = vst [vmem:[#allocation2 + $0x70] sm:$0xff] %v810
    %875 = vst [vmem:[#allocation2 + $0x78] sm:$0xff] %v811
    %876 = vst [vmem:[#allocation2 + $0x80] sm:$0xff] %v812
    %877 = vst [vmem:[#allocation2 + $0x88] sm:$0xff] %v813
    %878 = vst [vmem:[#allocation2 + $0x90] sm:$0xff] %v814
    %879 = vst [vmem:[#allocation2 + $0x98] sm:$0xff] %v815
    %880 = vst [vmem:[#allocation2 + $0xa0] sm:$0xff] %v816
    %881 = vst [vmem:[#allocation2 + $0xa8] sm:$0xff] %v817
    %882 = vst [vmem:[#allocation2 + $0xb0] sm:$0xff] %v818
    %883 = vst [vmem:[#allocation2 + $0xb8] sm:$0xff] %v819
    %884 = vst [vmem:[#allocation2 + $0xc0] sm:$0xff] %v820
    %885 = vst [vmem:[#allocation2 + $0xc8] sm:$0xff] %v821
    %886 = vst [vmem:[#allocation2 + $0xd0] sm:$0xff] %v822
    %887 = vst [vmem:[#allocation2 + $0xd8] sm:$0xff] %v823
    %888 = vst [vmem:[#allocation2 + $0xe0] sm:$0xff] %v824
    %889 = vst [vmem:[#allocation2 + $0xe8] sm:$0xff] %v825
    %890 = vst [vmem:[#allocation2 + $0xf0] sm:$0xff] %v826
    %891 = vst [vmem:[#allocation2 + $0xf8] sm:$0xff] %v827
    %892 = vst [vmem:[#allocation2 + $0x100] sm:$0xff] %v828
    %893 = vst [vmem:[#allocation2 + $0x108] sm:$0xff] %v829
    %894 = vst [vmem:[#allocation2 + $0x110] sm:$0xff] %v830
    %895 = vst [vmem:[#allocation2 + $0x118] sm:$0xff] %v831
    %896 = vst [vmem:[#allocation2 + $0x120] sm:$0xff] %v832
    %897 = vst [vmem:[#allocation2 + $0x128] sm:$0xff] %v833
    %898 = vst [vmem:[#allocation2 + $0x130] sm:$0xff] %v834
    %899 = vst [vmem:[#allocation2 + $0x138] sm:$0xff] %v835
    %900 = vst [vmem:[#allocation2 + $0x140] sm:$0xff] %v836
    %901 = vst [vmem:[#allocation2 + $0x148] sm:$0xff] %v837
    %902 = vst [vmem:[#allocation2 + $0x150] sm:$0xff] %v838
    %903 = vst [vmem:[#allocation2 + $0x158] sm:$0xff] %v839
    %904 = vst [vmem:[#allocation2 + $0x160] sm:$0xff] %v840
    %905 = vst [vmem:[#allocation2 + $0x168] sm:$0xff] %v841
    %906 = vst [vmem:[#allocation2 + $0x170] sm:$0xff] %v842
    %907 = vst [vmem:[#allocation2 + $0x178] sm:$0xff] %v843
    %908 = vst [vmem:[#allocation2 + $0x180] sm:$0xff] %v844
    %909 = vst [vmem:[#allocation2 + $0x188] sm:$0xff] %v845
    %910 = vst [vmem:[#allocation2 + $0x190] sm:$0xff] %v846
    %911 = vst [vmem:[#allocation2 + $0x198] sm:$0xff] %v847
    %912 = vst [vmem:[#allocation2 + $0x1a0] sm:$0xff] %v848
    %913 = vst [vmem:[#allocation2 + $0x1a8] sm:$0xff] %v849
    %914 = vst [vmem:[#allocation2 + $0x1b0] sm:$0xff] %v850
    %915 = vst [vmem:[#allocation2 + $0x1b8] sm:$0xff] %v851
    %916 = vst [vmem:[#allocation2 + $0x1c0] sm:$0xff] %v852
    %917 = vst [vmem:[#allocation2 + $0x1c8] sm:$0xff] %v853
    %918 = vst [vmem:[#allocation2 + $0x1d0] sm:$0xff] %v854
    %919 = vst [vmem:[#allocation2 + $0x1d8] sm:$0xff] %v855
    %920 = vst [vmem:[#allocation2 + $0x1e0] sm:$0xff] %v856
    %921 = vst [vmem:[#allocation2 + $0x1e8] sm:$0xff] %v857
    %922 = vst [vmem:[#allocation2 + $0x1f0] sm:$0xff] %v858
    %923 = vst [vmem:[#allocation2 + $0x1f8] sm:$0xff] %v859
    // Predicated region
    $region30: #{convstem_forward.5} parent=1 // pred_check
      %p924 = pneg %p55
    $region31: #{convstem_forward.5} parent=1 // pred_check_branch
      %926 = sbr.rel (%p924) target = $region33
    $region32: #{convstem_forward.5} parent=1 // pred_region
      %v927 = vld [vmem:[#allocation2] sm:$0xff]
      %v928 = vld [vmem:[#allocation2 + $0x8] sm:$0xff]
      %v929 = vld [vmem:[#allocation2 + $0x10] sm:$0xff]
      %v930 = vld [vmem:[#allocation2 + $0x18] sm:$0xff]
      %v931 = vld [vmem:[#allocation2 + $0x20] sm:$0xff]
      %v932 = vld [vmem:[#allocation2 + $0x28] sm:$0xff]
      %v933 = vld [vmem:[#allocation2 + $0x30] sm:$0xff]
      %v934 = vld [vmem:[#allocation2 + $0x38] sm:$0xff]
      %v935 = vld [vmem:[#allocation2 + $0x40] sm:$0xff]
      %v936 = vld [vmem:[#allocation2 + $0x48] sm:$0xff]
      %v937 = vld [vmem:[#allocation2 + $0x50] sm:$0xff]
      %v938 = vld [vmem:[#allocation2 + $0x58] sm:$0xff]
      %v939 = vld [vmem:[#allocation2 + $0x60] sm:$0xff]
      %v940 = vld [vmem:[#allocation2 + $0x68] sm:$0xff]
      %v941 = vld [vmem:[#allocation2 + $0x70] sm:$0xff]
      %v942 = vld [vmem:[#allocation2 + $0x78] sm:$0xff]
      %v943 = vld [vmem:[#allocation2 + $0x80] sm:$0xff]
      %v944 = vld [vmem:[#allocation2 + $0x88] sm:$0xff]
      %v945 = vld [vmem:[#allocation2 + $0x90] sm:$0xff]
      %v946 = vld [vmem:[#allocation2 + $0x98] sm:$0xff]
      %v947 = vld [vmem:[#allocation2 + $0xa0] sm:$0xff]
      %v948 = vld [vmem:[#allocation2 + $0xa8] sm:$0xff]
      %v949 = vld [vmem:[#allocation2 + $0xb0] sm:$0xff]
      %v950 = vld [vmem:[#allocation2 + $0xb8] sm:$0xff]
      %v951 = vld [vmem:[#allocation2 + $0xc0] sm:$0xff]
      %v952 = vld [vmem:[#allocation2 + $0xc8] sm:$0xff]
      %v953 = vld [vmem:[#allocation2 + $0xd0] sm:$0xff]
      %v954 = vld [vmem:[#allocation2 + $0xd8] sm:$0xff]
      %v955 = vld [vmem:[#allocation2 + $0xe0] sm:$0xff]
      %v956 = vld [vmem:[#allocation2 + $0xe8] sm:$0xff]
      %v957 = vld [vmem:[#allocation2 + $0xf0] sm:$0xff]
      %v958 = vld [vmem:[#allocation2 + $0xf8] sm:$0xff]
      %v959 = vld [vmem:[#allocation2 + $0x100] sm:$0xff]
      %v960 = vld [vmem:[#allocation2 + $0x108] sm:$0xff]
      %v961 = vld [vmem:[#allocation2 + $0x110] sm:$0xff]
      %v962 = vld [vmem:[#allocation2 + $0x118] sm:$0xff]
      %v963 = vld [vmem:[#allocation2 + $0x120] sm:$0xff]
      %v964 = vld [vmem:[#allocation2 + $0x128] sm:$0xff]
      %v965 = vld [vmem:[#allocation2 + $0x130] sm:$0xff]
      %v966 = vld [vmem:[#allocation2 + $0x138] sm:$0xff]
      %v967 = vld [vmem:[#allocation2 + $0x140] sm:$0xff]
      %v968 = vld [vmem:[#allocation2 + $0x148] sm:$0xff]
      %v969 = vld [vmem:[#allocation2 + $0x150] sm:$0xff]
      %v970 = vld [vmem:[#allocation2 + $0x158] sm:$0xff]
      %v971 = vld [vmem:[#allocation2 + $0x160] sm:$0xff]
      %v972 = vld [vmem:[#allocation2 + $0x168] sm:$0xff]
      %v973 = vld [vmem:[#allocation2 + $0x170] sm:$0xff]
      %v974 = vld [vmem:[#allocation2 + $0x178] sm:$0xff]
      %v975 = vld [vmem:[#allocation2 + $0x180] sm:$0xff]
      %v976 = vld [vmem:[#allocation2 + $0x188] sm:$0xff]
      %v977 = vld [vmem:[#allocation2 + $0x190] sm:$0xff]
      %v978 = vld [vmem:[#allocation2 + $0x198] sm:$0xff]
      %v979 = vld [vmem:[#allocation2 + $0x1a0] sm:$0xff]
      %v980 = vld [vmem:[#allocation2 + $0x1a8] sm:$0xff]
      %v981 = vld [vmem:[#allocation2 + $0x1b0] sm:$0xff]
      %v982 = vld [vmem:[#allocation2 + $0x1b8] sm:$0xff]
      %v983 = vld [vmem:[#allocation2 + $0x1c0] sm:$0xff]
      %v984 = vld [vmem:[#allocation2 + $0x1c8] sm:$0xff]
      %v985 = vld [vmem:[#allocation2 + $0x1d0] sm:$0xff]
      %v986 = vld [vmem:[#allocation2 + $0x1d8] sm:$0xff]
      %v987 = vld [vmem:[#allocation2 + $0x1e0] sm:$0xff]
      %v988 = vld [vmem:[#allocation2 + $0x1e8] sm:$0xff]
      %v989 = vld [vmem:[#allocation2 + $0x1f0] sm:$0xff]
      %v990 = vld [vmem:[#allocation2 + $0x1f8] sm:$0xff]
      %v991 = vld [vmem:[#allocation8] sm:$0x1]
      %v993 = vlaneseq
      %v994 = vshrl.u32 %v993, 7
      %v995 = vsub.s32 0, %v994
      %v996 = vrot.slane %v991, %v995
      %v998 = vadd.f32 %v927, %v996
      %v999 = vadd.f32 %v928, %v996
      %v1000 = vadd.f32 %v929, %v996
      %v1001 = vadd.f32 %v930, %v996
      %v1002 = vadd.f32 %v931, %v996
      %v1003 = vadd.f32 %v932, %v996
      %v1004 = vadd.f32 %v933, %v996
      %v1005 = vadd.f32 %v934, %v996
      %v1006 = vadd.f32 %v935, %v996
      %v1007 = vadd.f32 %v936, %v996
      %v1008 = vadd.f32 %v937, %v996
      %v1009 = vadd.f32 %v938, %v996
      %v1010 = vadd.f32 %v939, %v996
      %v1011 = vadd.f32 %v940, %v996
      %v1012 = vadd.f32 %v941, %v996
      %v1013 = vadd.f32 %v942, %v996
      %v1014 = vadd.f32 %v943, %v996
      %v1015 = vadd.f32 %v944, %v996
      %v1016 = vadd.f32 %v945, %v996
      %v1017 = vadd.f32 %v946, %v996
      %v1018 = vadd.f32 %v947, %v996
      %v1019 = vadd.f32 %v948, %v996
      %v1020 = vadd.f32 %v949, %v996
      %v1021 = vadd.f32 %v950, %v996
      %v1022 = vadd.f32 %v951, %v996
      %v1023 = vadd.f32 %v952, %v996
      %v1024 = vadd.f32 %v953, %v996
      %v1025 = vadd.f32 %v954, %v996
      %v1026 = vadd.f32 %v955, %v996
      %v1027 = vadd.f32 %v956, %v996
      %v1028 = vadd.f32 %v957, %v996
      %v1029 = vadd.f32 %v958, %v996
      %v1030 = vadd.f32 %v959, %v996
      %v1031 = vadd.f32 %v960, %v996
      %v1032 = vadd.f32 %v961, %v996
      %v1033 = vadd.f32 %v962, %v996
      %v1034 = vadd.f32 %v963, %v996
      %v1035 = vadd.f32 %v964, %v996
      %v1036 = vadd.f32 %v965, %v996
      %v1037 = vadd.f32 %v966, %v996
      %v1038 = vadd.f32 %v967, %v996
      %v1039 = vadd.f32 %v968, %v996
      %v1040 = vadd.f32 %v969, %v996
      %v1041 = vadd.f32 %v970, %v996
      %v1042 = vadd.f32 %v971, %v996
      %v1043 = vadd.f32 %v972, %v996
      %v1044 = vadd.f32 %v973, %v996
      %v1045 = vadd.f32 %v974, %v996
      %v1046 = vadd.f32 %v975, %v996
      %v1047 = vadd.f32 %v976, %v996
      %v1048 = vadd.f32 %v977, %v996
      %v1049 = vadd.f32 %v978, %v996
      %v1050 = vadd.f32 %v979, %v996
      %v1051 = vadd.f32 %v980, %v996
      %v1052 = vadd.f32 %v981, %v996
      %v1053 = vadd.f32 %v982, %v996
      %v1054 = vadd.f32 %v983, %v996
      %v1055 = vadd.f32 %v984, %v996
      %v1056 = vadd.f32 %v985, %v996
      %v1057 = vadd.f32 %v986, %v996
      %v1058 = vadd.f32 %v987, %v996
      %v1059 = vadd.f32 %v988, %v996
      %v1060 = vadd.f32 %v989, %v996
      %v1061 = vadd.f32 %v990, %v996
      %v1062 = vmax.f32 %v998, 0.0
      %v1063 = vmax.f32 %v999, 0.0
      %v1064 = vmax.f32 %v1000, 0.0
      %v1065 = vmax.f32 %v1001, 0.0
      %v1066 = vmax.f32 %v1002, 0.0
      %v1067 = vmax.f32 %v1003, 0.0
      %v1068 = vmax.f32 %v1004, 0.0
      %v1069 = vmax.f32 %v1005, 0.0
      %v1070 = vmax.f32 %v1006, 0.0
      %v1071 = vmax.f32 %v1007, 0.0
      %v1072 = vmax.f32 %v1008, 0.0
      %v1073 = vmax.f32 %v1009, 0.0
      %v1074 = vmax.f32 %v1010, 0.0
      %v1075 = vmax.f32 %v1011, 0.0
      %v1076 = vmax.f32 %v1012, 0.0
      %v1077 = vmax.f32 %v1013, 0.0
      %v1078 = vmax.f32 %v1014, 0.0
      %v1079 = vmax.f32 %v1015, 0.0
      %v1080 = vmax.f32 %v1016, 0.0
      %v1081 = vmax.f32 %v1017, 0.0
      %v1082 = vmax.f32 %v1018, 0.0
      %v1083 = vmax.f32 %v1019, 0.0
      %v1084 = vmax.f32 %v1020, 0.0
      %v1085 = vmax.f32 %v1021, 0.0
      %v1086 = vmax.f32 %v1022, 0.0
      %v1087 = vmax.f32 %v1023, 0.0
      %v1088 = vmax.f32 %v1024, 0.0
      %v1089 = vmax.f32 %v1025, 0.0
      %v1090 = vmax.f32 %v1026, 0.0
      %v1091 = vmax.f32 %v1027, 0.0
      %v1092 = vmax.f32 %v1028, 0.0
      %v1093 = vmax.f32 %v1029, 0.0
      %v1094 = vmax.f32 %v1030, 0.0
      %v1095 = vmax.f32 %v1031, 0.0
      %v1096 = vmax.f32 %v1032, 0.0
      %v1097 = vmax.f32 %v1033, 0.0
      %v1098 = vmax.f32 %v1034, 0.0
      %v1099 = vmax.f32 %v1035, 0.0
      %v1100 = vmax.f32 %v1036, 0.0
      %v1101 = vmax.f32 %v1037, 0.0
      %v1102 = vmax.f32 %v1038, 0.0
      %v1103 = vmax.f32 %v1039, 0.0
      %v1104 = vmax.f32 %v1040, 0.0
      %v1105 = vmax.f32 %v1041, 0.0
      %v1106 = vmax.f32 %v1042, 0.0
      %v1107 = vmax.f32 %v1043, 0.0
      %v1108 = vmax.f32 %v1044, 0.0
      %v1109 = vmax.f32 %v1045, 0.0
      %v1110 = vmax.f32 %v1046, 0.0
      %v1111 = vmax.f32 %v1047, 0.0
      %v1112 = vmax.f32 %v1048, 0.0
      %v1113 = vmax.f32 %v1049, 0.0
      %v1114 = vmax.f32 %v1050, 0.0
      %v1115 = vmax.f32 %v1051, 0.0
      %v1116 = vmax.f32 %v1052, 0.0
      %v1117 = vmax.f32 %v1053, 0.0
      %v1118 = vmax.f32 %v1054, 0.0
      %v1119 = vmax.f32 %v1055, 0.0
      %v1120 = vmax.f32 %v1056, 0.0
      %v1121 = vmax.f32 %v1057, 0.0
      %v1122 = vmax.f32 %v1058, 0.0
      %v1123 = vmax.f32 %v1059, 0.0
      %v1124 = vmax.f32 %v1060, 0.0
      %v1125 = vmax.f32 %v1061, 0.0
      %v1126 = vpack.c.bf16 %v1063, %v1062
      %v1127 = vpack.c.bf16 %v1065, %v1064
      %v1128 = vpack.c.bf16 %v1067, %v1066
      %v1129 = vpack.c.bf16 %v1069, %v1068
      %v1130 = vpack.c.bf16 %v1071, %v1070
      %v1131 = vpack.c.bf16 %v1073, %v1072
      %v1132 = vpack.c.bf16 %v1075, %v1074
      %v1133 = vpack.c.bf16 %v1077, %v1076
      %v1134 = vpack.c.bf16 %v1079, %v1078
      %v1135 = vpack.c.bf16 %v1081, %v1080
      %v1136 = vpack.c.bf16 %v1083, %v1082
      %v1137 = vpack.c.bf16 %v1085, %v1084
      %v1138 = vpack.c.bf16 %v1087, %v1086
      %v1139 = vpack.c.bf16 %v1089, %v1088
      %v1140 = vpack.c.bf16 %v1091, %v1090
      %v1141 = vpack.c.bf16 %v1093, %v1092
      %v1142 = vpack.c.bf16 %v1095, %v1094
      %v1143 = vpack.c.bf16 %v1097, %v1096
      %v1144 = vpack.c.bf16 %v1099, %v1098
      %v1145 = vpack.c.bf16 %v1101, %v1100
      %v1146 = vpack.c.bf16 %v1103, %v1102
      %v1147 = vpack.c.bf16 %v1105, %v1104
      %v1148 = vpack.c.bf16 %v1107, %v1106
      %v1149 = vpack.c.bf16 %v1109, %v1108
      %v1150 = vpack.c.bf16 %v1111, %v1110
      %v1151 = vpack.c.bf16 %v1113, %v1112
      %v1152 = vpack.c.bf16 %v1115, %v1114
      %v1153 = vpack.c.bf16 %v1117, %v1116
      %v1154 = vpack.c.bf16 %v1119, %v1118
      %v1155 = vpack.c.bf16 %v1121, %v1120
      %v1156 = vpack.c.bf16 %v1123, %v1122
      %v1157 = vpack.c.bf16 %v1125, %v1124
      %v1190 = vunpack.c.l.b16 %v1126
      %v1191 = vunpack.c.h.b16 %v1126
      %v1192 = vunpack.c.l.b16 %v1127
      %v1193 = vunpack.c.h.b16 %v1127
      %v1194 = vunpack.c.l.b16 %v1128
      %v1195 = vunpack.c.h.b16 %v1128
      %v1196 = vunpack.c.l.b16 %v1129
      %v1197 = vunpack.c.h.b16 %v1129
      %v1198 = vunpack.c.l.b16 %v1130
      %v1199 = vunpack.c.h.b16 %v1130
      %v1200 = vunpack.c.l.b16 %v1131
      %v1201 = vunpack.c.h.b16 %v1131
      %v1202 = vunpack.c.l.b16 %v1132
      %v1203 = vunpack.c.h.b16 %v1132
      %v1204 = vunpack.c.l.b16 %v1133
      %v1205 = vunpack.c.h.b16 %v1133
      %v1206 = vunpack.c.l.b16 %v1134
      %v1207 = vunpack.c.h.b16 %v1134
      %v1208 = vunpack.c.l.b16 %v1135
      %v1209 = vunpack.c.h.b16 %v1135
      %v1210 = vunpack.c.l.b16 %v1136
      %v1211 = vunpack.c.h.b16 %v1136
      %v1212 = vunpack.c.l.b16 %v1137
      %v1213 = vunpack.c.h.b16 %v1137
      %v1214 = vunpack.c.l.b16 %v1138
      %v1215 = vunpack.c.h.b16 %v1138
      %v1216 = vunpack.c.l.b16 %v1139
      %v1217 = vunpack.c.h.b16 %v1139
      %v1218 = vunpack.c.l.b16 %v1140
      %v1219 = vunpack.c.h.b16 %v1140
      %v1220 = vunpack.c.l.b16 %v1141
      %v1221 = vunpack.c.h.b16 %v1141
      %v1222 = vunpack.c.l.b16 %v1142
      %v1223 = vunpack.c.h.b16 %v1142
      %v1224 = vunpack.c.l.b16 %v1143
      %v1225 = vunpack.c.h.b16 %v1143
      %v1226 = vunpack.c.l.b16 %v1144
      %v1227 = vunpack.c.h.b16 %v1144
      %v1228 = vunpack.c.l.b16 %v1145
      %v1229 = vunpack.c.h.b16 %v1145
      %v1230 = vunpack.c.l.b16 %v1146
      %v1231 = vunpack.c.h.b16 %v1146
      %v1232 = vunpack.c.l.b16 %v1147
      %v1233 = vunpack.c.h.b16 %v1147
      %v1234 = vunpack.c.l.b16 %v1148
      %v1235 = vunpack.c.h.b16 %v1148
      %v1236 = vunpack.c.l.b16 %v1149
      %v1237 = vunpack.c.h.b16 %v1149
      %v1238 = vunpack.c.l.b16 %v1150
      %v1239 = vunpack.c.h.b16 %v1150
      %v1240 = vunpack.c.l.b16 %v1151
      %v1241 = vunpack.c.h.b16 %v1151
      %v1242 = vunpack.c.l.b16 %v1152
      %v1243 = vunpack.c.h.b16 %v1152
      %v1244 = vunpack.c.l.b16 %v1153
      %v1245 = vunpack.c.h.b16 %v1153
      %v1246 = vunpack.c.l.b16 %v1154
      %v1247 = vunpack.c.h.b16 %v1154
      %v1248 = vunpack.c.l.b16 %v1155
      %v1249 = vunpack.c.h.b16 %v1155
      %v1250 = vunpack.c.l.b16 %v1156
      %v1251 = vunpack.c.h.b16 %v1156
      %v1252 = vunpack.c.l.b16 %v1157
      %v1253 = vunpack.c.h.b16 %v1157
      %v1254 = vpack.c.b16 %v1190, %v1190
      %v1255 = vpack.c.b16 %v1191, %v1191
      %v1256 = vpack.c.b16 %v1192, %v1192
      %v1257 = vpack.c.b16 %v1193, %v1193
      %v1258 = vpack.c.b16 %v1194, %v1194
      %v1259 = vpack.c.b16 %v1195, %v1195
      %v1260 = vpack.c.b16 %v1196, %v1196
      %v1261 = vpack.c.b16 %v1197, %v1197
      %v1262 = vpack.c.b16 %v1198, %v1198
      %v1263 = vpack.c.b16 %v1199, %v1199
      %v1264 = vpack.c.b16 %v1200, %v1200
      %v1265 = vpack.c.b16 %v1201, %v1201
      %v1266 = vpack.c.b16 %v1202, %v1202
      %v1267 = vpack.c.b16 %v1203, %v1203
      %v1268 = vpack.c.b16 %v1204, %v1204
      %v1269 = vpack.c.b16 %v1205, %v1205
      %v1270 = vpack.c.b16 %v1206, %v1206
      %v1271 = vpack.c.b16 %v1207, %v1207
      %v1272 = vpack.c.b16 %v1208, %v1208
      %v1273 = vpack.c.b16 %v1209, %v1209
      %v1274 = vpack.c.b16 %v1210, %v1210
      %v1275 = vpack.c.b16 %v1211, %v1211
      %v1276 = vpack.c.b16 %v1212, %v1212
      %v1277 = vpack.c.b16 %v1213, %v1213
      %v1278 = vpack.c.b16 %v1214, %v1214
      %v1279 = vpack.c.b16 %v1215, %v1215
      %v1280 = vpack.c.b16 %v1216, %v1216
      %v1281 = vpack.c.b16 %v1217, %v1217
      %v1282 = vpack.c.b16 %v1218, %v1218
      %v1283 = vpack.c.b16 %v1219, %v1219
      %v1284 = vpack.c.b16 %v1220, %v1220
      %v1285 = vpack.c.b16 %v1221, %v1221
      %v1286 = vpack.c.b16 %v1222, %v1222
      %v1287 = vpack.c.b16 %v1223, %v1223
      %v1288 = vpack.c.b16 %v1224, %v1224
      %v1289 = vpack.c.b16 %v1225, %v1225
      %v1290 = vpack.c.b16 %v1226, %v1226
      %v1291 = vpack.c.b16 %v1227, %v1227
      %v1292 = vpack.c.b16 %v1228, %v1228
      %v1293 = vpack.c.b16 %v1229, %v1229
      %v1294 = vpack.c.b16 %v1230, %v1230
      %v1295 = vpack.c.b16 %v1231, %v1231
      %v1296 = vpack.c.b16 %v1232, %v1232
      %v1297 = vpack.c.b16 %v1233, %v1233
      %v1298 = vpack.c.b16 %v1234, %v1234
      %v1299 = vpack.c.b16 %v1235, %v1235
      %v1300 = vpack.c.b16 %v1236, %v1236
      %v1301 = vpack.c.b16 %v1237, %v1237
      %v1302 = vpack.c.b16 %v1238, %v1238
      %v1303 = vpack.c.b16 %v1239, %v1239
      %v1304 = vpack.c.b16 %v1240, %v1240
      %v1305 = vpack.c.b16 %v1241, %v1241
      %v1306 = vpack.c.b16 %v1242, %v1242
      %v1307 = vpack.c.b16 %v1243, %v1243
      %v1308 = vpack.c.b16 %v1244, %v1244
      %v1309 = vpack.c.b16 %v1245, %v1245
      %v1310 = vpack.c.b16 %v1246, %v1246
      %v1311 = vpack.c.b16 %v1247, %v1247
      %v1312 = vpack.c.b16 %v1248, %v1248
      %v1313 = vpack.c.b16 %v1249, %v1249
      %v1314 = vpack.c.b16 %v1250, %v1250
      %v1315 = vpack.c.b16 %v1251, %v1251
      %v1316 = vpack.c.b16 %v1252, %v1252
      %v1317 = vpack.c.b16 %v1253, %v1253
      %1382 = vst [vmem:[#allocation9] sm:$0xf] %v1254
      %1383 = vst [vmem:[#allocation9 + $0x4] sm:$0xf] %v1255
      %1384 = vst [vmem:[#allocation9 + $0x8] sm:$0xf] %v1256
      %1385 = vst [vmem:[#allocation9 + $0xc] sm:$0xf] %v1257
      %1386 = vst [vmem:[#allocation9 + $0x10] sm:$0xf] %v1258
      %1387 = vst [vmem:[#allocation9 + $0x14] sm:$0xf] %v1259
      %1388 = vst [vmem:[#allocation9 + $0x18] sm:$0xf] %v1260
      %1389 = vst [vmem:[#allocation9 + $0x1c] sm:$0xf] %v1261
      %1390 = vst [vmem:[#allocation9 + $0x20] sm:$0xf] %v1262
      %1391 = vst [vmem:[#allocation9 + $0x24] sm:$0xf] %v1263
      %1392 = vst [vmem:[#allocation9 + $0x28] sm:$0xf] %v1264
      %1393 = vst [vmem:[#allocation9 + $0x2c] sm:$0xf] %v1265
      %1394 = vst [vmem:[#allocation9 + $0x30] sm:$0xf] %v1266
      %1395 = vst [vmem:[#allocation9 + $0x34] sm:$0xf] %v1267
      %1396 = vst [vmem:[#allocation9 + $0x38] sm:$0xf] %v1268
      %1397 = vst [vmem:[#allocation9 + $0x3c] sm:$0xf] %v1269
      %1398 = vst [vmem:[#allocation9 + $0x40] sm:$0xf] %v1270
      %1399 = vst [vmem:[#allocation9 + $0x44] sm:$0xf] %v1271
      %1400 = vst [vmem:[#allocation9 + $0x48] sm:$0xf] %v1272
      %1401 = vst [vmem:[#allocation9 + $0x4c] sm:$0xf] %v1273
      %1402 = vst [vmem:[#allocation9 + $0x50] sm:$0xf] %v1274
      %1403 = vst [vmem:[#allocation9 + $0x54] sm:$0xf] %v1275
      %1404 = vst [vmem:[#allocation9 + $0x58] sm:$0xf] %v1276
      %1405 = vst [vmem:[#allocation9 + $0x5c] sm:$0xf] %v1277
      %1406 = vst [vmem:[#allocation9 + $0x60] sm:$0xf] %v1278
      %1407 = vst [vmem:[#allocation9 + $0x64] sm:$0xf] %v1279
      %1408 = vst [vmem:[#allocation9 + $0x68] sm:$0xf] %v1280
      %1409 = vst [vmem:[#allocation9 + $0x6c] sm:$0xf] %v1281
      %1410 = vst [vmem:[#allocation9 + $0x70] sm:$0xf] %v1282
      %1411 = vst [vmem:[#allocation9 + $0x74] sm:$0xf] %v1283
      %1412 = vst [vmem:[#allocation9 + $0x78] sm:$0xf] %v1284
      %1413 = vst [vmem:[#allocation9 + $0x7c] sm:$0xf] %v1285
      %1414 = vst [vmem:[#allocation9 + $0x80] sm:$0xf] %v1286
      %1415 = vst [vmem:[#allocation9 + $0x84] sm:$0xf] %v1287
      %1416 = vst [vmem:[#allocation9 + $0x88] sm:$0xf] %v1288
      %1417 = vst [vmem:[#allocation9 + $0x8c] sm:$0xf] %v1289
      %1418 = vst [vmem:[#allocation9 + $0x90] sm:$0xf] %v1290
      %1419 = vst [vmem:[#allocation9 + $0x94] sm:$0xf] %v1291
      %1420 = vst [vmem:[#allocation9 + $0x98] sm:$0xf] %v1292
      %1421 = vst [vmem:[#allocation9 + $0x9c] sm:$0xf] %v1293
      %1422 = vst [vmem:[#allocation9 + $0xa0] sm:$0xf] %v1294
      %1423 = vst [vmem:[#allocation9 + $0xa4] sm:$0xf] %v1295
      %1424 = vst [vmem:[#allocation9 + $0xa8] sm:$0xf] %v1296
      %1425 = vst [vmem:[#allocation9 + $0xac] sm:$0xf] %v1297
      %1426 = vst [vmem:[#allocation9 + $0xb0] sm:$0xf] %v1298
      %1427 = vst [vmem:[#allocation9 + $0xb4] sm:$0xf] %v1299
      %1428 = vst [vmem:[#allocation9 + $0xb8] sm:$0xf] %v1300
      %1429 = vst [vmem:[#allocation9 + $0xbc] sm:$0xf] %v1301
      %1430 = vst [vmem:[#allocation9 + $0xc0] sm:$0xf] %v1302
      %1431 = vst [vmem:[#allocation9 + $0xc4] sm:$0xf] %v1303
      %1432 = vst [vmem:[#allocation9 + $0xc8] sm:$0xf] %v1304
      %1433 = vst [vmem:[#allocation9 + $0xcc] sm:$0xf] %v1305
      %1434 = vst [vmem:[#allocation9 + $0xd0] sm:$0xf] %v1306
      %1435 = vst [vmem:[#allocation9 + $0xd4] sm:$0xf] %v1307
      %1436 = vst [vmem:[#allocation9 + $0xd8] sm:$0xf] %v1308
      %1437 = vst [vmem:[#allocation9 + $0xdc] sm:$0xf] %v1309
      %1438 = vst [vmem:[#allocation9 + $0xe0] sm:$0xf] %v1310
      %1439 = vst [vmem:[#allocation9 + $0xe4] sm:$0xf] %v1311
      %1440 = vst [vmem:[#allocation9 + $0xe8] sm:$0xf] %v1312
      %1441 = vst [vmem:[#allocation9 + $0xec] sm:$0xf] %v1313
      %1442 = vst [vmem:[#allocation9 + $0xf0] sm:$0xf] %v1314
      %1443 = vst [vmem:[#allocation9 + $0xf4] sm:$0xf] %v1315
      %1444 = vst [vmem:[#allocation9 + $0xf8] sm:$0xf] %v1316
      %1445 = vst [vmem:[#allocation9 + $0xfc] sm:$0xf] %v1317
    $region33: #{convstem_forward.5} parent=1 // pred_fallthru
      _
    // Predicated region
    $region34: #{convstem_forward.5} parent=1 // pred_check
      _
    $region35: #{convstem_forward.5} parent=1 // pred_check_branch
      %1447 = sbr.rel (0) target = $region37
    $region36: #{convstem_forward.5} parent=1 // pred_region
      %s1449 = ssub.s32 4096, 4096
      %1450 = vsyncadd [#allocation5], %s1449
      %s1451 = sshll.u32 [#allocation9], 4
      %s1452 = int_to_ptr.vmem [resolvable:$true] %s1451
      %1457 = dma.vmem_to_hbm [thread:$0]  %s1452, 4096, %s3, [#allocation5], 64, 64, 4
    $region37: #{convstem_forward.5} parent=1 // pred_fallthru
      _
    // Predicated region
    $region38: #{convstem_forward.5} parent=1 // pred_check
      _
    $region39: #{convstem_forward.5} parent=1 // pred_check_branch
      %1459 = sbr.rel (0) target = $region41
    $region40: #{convstem_forward.5} parent=1 // pred_region
      %1460 = dma.done [#allocation5], 4096
    $region41: #{convstem_forward.5} parent=1 // pred_fallthru
      _
    %1461 = vsyncpa [#allocation4], 1
    %1462 = vsyncpa [#allocation7], 1
    %1463 = vsyncpa [#allocation5], 1

// kernel: convstem_forward.6
$region0: #{convstem_forward.6}
  #allocation0 [shape = 'u32[]', space=smem, size = 0x4, offset = 0x4, fixed_abs, tag = 'smem constant byte address 0x4 - core index']
  #allocation1 [shape = 'u32[144,128]{1,0:T(1,128)}', space=vmem, size = 0x12000, scoped, tag = 'internal scratch']
  #allocation2 [shape = 'f32[128,128]{1,0:T(8,128)}', space=vmem, size = 0x10000, scoped, tag = 'scratch operand']
  %s0 = inlined_call_operand.hbm [shape: bf16[128,128], index: 0, kind: input, shape index: {}]
  %s1 = inlined_call_operand.hbm [shape: bf16[128,128], index: 1, kind: input, shape index: {}]
  %s2 = inlined_call_operand.hbm [shape: f32[1,128], index: 2, kind: input, shape index: {}]
  %s3 = inlined_call_operand.hbm [shape: bf16[128,128], index: 3, kind: output, shape index: {}]
  %s4 = sld [smem:[#allocation0]]
  $region42: #{convstem_forward.6} parent=0
    _
  %s6 = ssub.s32 1, %s4
  %s7 = scalar_select 0, %s6, %s4
  $region1: #{convstem_forward.6} parent=0
    #allocation3 [shape = 'u8[32768]{0}', space=vmem, size = 0x8000, scoped, tag = 'input window, operand 0, single buffered']
    #allocation4 [shape = 's32[1]{0}', space=sflag, size = 0x4, scoped, tag = 'scoped memory for convstem_forward.6']
    #allocation5 [shape = 's32[1]{0}', space=sflag, size = 0x4, scoped, tag = 'scoped memory for convstem_forward.6']
    #allocation6 [shape = 'u8[32768]{0}', space=vmem, size = 0x8000, scoped, tag = 'input window, operand 1, single buffered']
    #allocation7 [shape = 's32[1]{0}', space=sflag, size = 0x4, scoped, tag = 'scoped memory for convstem_forward.6']
    #allocation8 [shape = 'u8[512]{0}', space=vmem, size = 0x400, scoped, tag = 'input window, operand 2, single buffered']
    #allocation9 [shape = 'u8[32768]{0}', space=vmem, size = 0x8000, scoped, tag = 'output window, operand 0, single buffered']
    %8 = vsyncpa [#allocation4], 0
    %9 = vsyncpa [#allocation7], 0
    %10 = vsyncpa [#allocation5], 0
    // Predicated region
    $region2: #{convstem_forward.6} parent=1 // pred_check
      _
    $region3: #{convstem_forward.6} parent=1 // pred_check_branch
      %12 = sbr.rel (0) target = $region5
    $region4: #{convstem_forward.6} parent=1 // pred_region
      %s14 = ssub.s32 1024, 1024
      %15 = vsyncadd [#allocation4], %s14
      %s16 = sshll.u32 [#allocation3], 4
      %s17 = int_to_ptr.vmem [resolvable:$true] %s16
      %22 = dma.hbm_to_vmem [thread:$0]  %s0, 1024, %s17, [#allocation4], 64, 64, 4
    $region5: #{convstem_forward.6} parent=1 // pred_fallthru
      _
    // Predicated region
    $region6: #{convstem_forward.6} parent=1 // pred_check
      _
    $region7: #{convstem_forward.6} parent=1 // pred_check_branch
      %24 = sbr.rel (0) target = $region9
    $region8: #{convstem_forward.6} parent=1 // pred_region
      %s26 = ssub.s32 1024, 1024
      %27 = vsyncadd [#allocation7], %s26
      %s28 = sshll.u32 [#allocation6], 4
      %s29 = int_to_ptr.vmem [resolvable:$true] %s28
      %34 = dma.hbm_to_vmem [thread:$0]  %s1, 1024, %s29, [#allocation7], 64, 64, 4
    $region9: #{convstem_forward.6} parent=1 // pred_fallthru
      _
    // Predicated region
    $region10: #{convstem_forward.6} parent=1 // pred_check
      _
    $region11: #{convstem_forward.6} parent=1 // pred_check_branch
      %36 = sbr.rel (0) target = $region13
    $region12: #{convstem_forward.6} parent=1 // pred_region
      %s38 = ssub.s32 16, 16
      %39 = vsyncadd [#allocation7], %s38
      %s41 = sshll.u32 [#allocation8], 4
      %s42 = int_to_ptr.vmem [resolvable:$true] %s41
      %44 = dma.hbm_to_vmem [thread:$0]  %s2, 16, %s42, [#allocation7]
    $region13: #{convstem_forward.6} parent=1 // pred_fallthru
      _
    // Predicated region
    $region14: #{convstem_forward.6} parent=1 // pred_check
      _
    $region15: #{convstem_forward.6} parent=1 // pred_check_branch
      %46 = sbr.rel (0) target = $region17
    $region16: #{convstem_forward.6} parent=1 // pred_region
      %47 = dma.done [#allocation4], 1024
    $region17: #{convstem_forward.6} parent=1 // pred_fallthru
      _
    // Predicated region
    $region18: #{convstem_forward.6} parent=1 // pred_check
      _
    $region19: #{convstem_forward.6} parent=1 // pred_check_branch
      %49 = sbr.rel (0) target = $region21
    $region20: #{convstem_forward.6} parent=1 // pred_region
      %50 = dma.done [#allocation7], 1024
    $region21: #{convstem_forward.6} parent=1 // pred_fallthru
      _
    // Predicated region
    $region22: #{convstem_forward.6} parent=1 // pred_check
      _
    $region23: #{convstem_forward.6} parent=1 // pred_check_branch
      %52 = sbr.rel (0) target = $region25
    $region24: #{convstem_forward.6} parent=1 // pred_region
      %53 = dma.done [#allocation7], 16
    $region25: #{convstem_forward.6} parent=1 // pred_fallthru
      _
    %p55 = scmp.eq.s32.totalorder 0, 0
    // Predicated region
    $region26: #{convstem_forward.6} parent=1 // pred_check
      %p56 = pneg %p55
    $region27: #{convstem_forward.6} parent=1 // pred_check_branch
      %58 = sbr.rel (%p56) target = $region29
    $region28: #{convstem_forward.6} parent=1 // pred_region
      %59 = vst [vmem:[#allocation2] sm:$0xff] 0.0
      %60 = vst [vmem:[#allocation2 + $0x8] sm:$0xff] 0.0
      %61 = vst [vmem:[#allocation2 + $0x10] sm:$0xff] 0.0
      %62 = vst [vmem:[#allocation2 + $0x18] sm:$0xff] 0.0
      %63 = vst [vmem:[#allocation2 + $0x20] sm:$0xff] 0.0
      %64 = vst [vmem:[#allocation2 + $0x28] sm:$0xff] 0.0
      %65 = vst [vmem:[#allocation2 + $0x30] sm:$0xff] 0.0
      %66 = vst [vmem:[#allocation2 + $0x38] sm:$0xff] 0.0
      %67 = vst [vmem:[#allocation2 + $0x40] sm:$0xff] 0.0
      %68 = vst [vmem:[#allocation2 + $0x48] sm:$0xff] 0.0
      %69 = vst [vmem:[#allocation2 + $0x50] sm:$0xff] 0.0
      %70 = vst [vmem:[#allocation2 + $0x58] sm:$0xff] 0.0
      %71 = vst [vmem:[#allocation2 + $0x60] sm:$0xff] 0.0
      %72 = vst [vmem:[#allocation2 + $0x68] sm:$0xff] 0.0
      %73 = vst [vmem:[#allocation2 + $0x70] sm:$0xff] 0.0
      %74 = vst [vmem:[#allocation2 + $0x78] sm:$0xff] 0.0
    $region29: #{convstem_forward.6} parent=1 // pred_fallthru
      _
    %v75 = vld [vmem:[#allocation2] sm:$0xff]
    %v76 = vld [vmem:[#allocation2 + $0x8] sm:$0xff]
    %v77 = vld [vmem:[#allocation2 + $0x10] sm:$0xff]
    %v78 = vld [vmem:[#allocation2 + $0x18] sm:$0xff]
    %v79 = vld [vmem:[#allocation2 + $0x20] sm:$0xff]
    %v80 = vld [vmem:[#allocation2 + $0x28] sm:$0xff]
    %v81 = vld [vmem:[#allocation2 + $0x30] sm:$0xff]
    %v82 = vld [vmem:[#allocation2 + $0x38] sm:$0xff]
    %v83 = vld [vmem:[#allocation2 + $0x40] sm:$0xff]
    %v84 = vld [vmem:[#allocation2 + $0x48] sm:$0xff]
    %v85 = vld [vmem:[#allocation2 + $0x50] sm:$0xff]
    %v86 = vld [vmem:[#allocation2 + $0x58] sm:$0xff]
    %v87 = vld [vmem:[#allocation2 + $0x60] sm:$0xff]
    %v88 = vld [vmem:[#allocation2 + $0x68] sm:$0xff]
    %v89 = vld [vmem:[#allocation2 + $0x70] sm:$0xff]
    %v90 = vld [vmem:[#allocation2 + $0x78] sm:$0xff]
    %v91 = vld [vmem:[#allocation3] sm:$0xf]
    %v92 = vld [vmem:[#allocation3 + $0x4] sm:$0xf]
    %v93 = vld [vmem:[#allocation3 + $0x8] sm:$0xf]
    %v94 = vld [vmem:[#allocation3 + $0xc] sm:$0xf]
    %v95 = vld [vmem:[#allocation3 + $0x10] sm:$0xf]
    %v96 = vld [vmem:[#allocation3 + $0x14] sm:$0xf]
    %v97 = vld [vmem:[#allocation3 + $0x18] sm:$0xf]
    %v98 = vld [vmem:[#allocation3 + $0x1c] sm:$0xf]
    %v99 = vld [vmem:[#allocation3 + $0x20] sm:$0xf]
    %v100 = vld [vmem:[#allocation3 + $0x24] sm:$0xf]
    %v101 = vld [vmem:[#allocation3 + $0x28] sm:$0xf]
    %v102 = vld [vmem:[#allocation3 + $0x2c] sm:$0xf]
    %v103 = vld [vmem:[#allocation3 + $0x30] sm:$0xf]
    %v104 = vld [vmem:[#allocation3 + $0x34] sm:$0xf]
    %v105 = vld [vmem:[#allocation3 + $0x38] sm:$0xf]
    %v106 = vld [vmem:[#allocation3 + $0x3c] sm:$0xf]
    %v107 = vld [vmem:[#allocation6] sm:$0xf]
    %v108 = vld [vmem:[#allocation6 + $0x4] sm:$0xf]
    %v109 = vld [vmem:[#allocation6 + $0x8] sm:$0xf]
    %v110 = vld [vmem:[#allocation6 + $0xc] sm:$0xf]
    %v111 = vld [vmem:[#allocation6 + $0x10] sm:$0xf]
    %v112 = vld [vmem:[#allocation6 + $0x14] sm:$0xf]
    %v113 = vld [vmem:[#allocation6 + $0x18] sm:$0xf]
    %v114 = vld [vmem:[#allocation6 + $0x1c] sm:$0xf]
    %v115 = vld [vmem:[#allocation6 + $0x20] sm:$0xf]
    %v116 = vld [vmem:[#allocation6 + $0x24] sm:$0xf]
    %v117 = vld [vmem:[#allocation6 + $0x28] sm:$0xf]
    %v118 = vld [vmem:[#allocation6 + $0x2c] sm:$0xf]
    %v119 = vld [vmem:[#allocation6 + $0x30] sm:$0xf]
    %v120 = vld [vmem:[#allocation6 + $0x34] sm:$0xf]
    %v121 = vld [vmem:[#allocation6 + $0x38] sm:$0xf]
    %v122 = vld [vmem:[#allocation6 + $0x3c] sm:$0xf]
    %v139 = vunpack.c.l.b16 %v91
    %v140 = vunpack.c.l.b16 %v92
    %v141 = vunpack.c.l.b16 %v93
    %v142 = vunpack.c.l.b16 %v94
    %v143 = vunpack.c.l.b16 %v95
    %v144 = vunpack.c.l.b16 %v96
    %v145 = vunpack.c.l.b16 %v97
    %v146 = vunpack.c.l.b16 %v98
    %v147 = vunpack.c.l.b16 %v99
    %v148 = vunpack.c.l.b16 %v100
    %v149 = vunpack.c.l.b16 %v101
    %v150 = vunpack.c.l.b16 %v102
    %v151 = vunpack.c.l.b16 %v103
    %v152 = vunpack.c.l.b16 %v104
    %v153 = vunpack.c.l.b16 %v105
    %v154 = vunpack.c.l.b16 %v106
    %v155 = vpack.c.b16 %v140, %v139
    %v156 = vpack.c.b16 %v142, %v141
    %v157 = vpack.c.b16 %v144, %v143
    %v158 = vpack.c.b16 %v146, %v145
    %v159 = vpack.c.b16 %v148, %v147
    %v160 = vpack.c.b16 %v150, %v149
    %v161 = vpack.c.b16 %v152, %v151
    %v162 = vpack.c.b16 %v154, %v153
    %v187 = vunpack.c.l.b16 %v107
    %v188 = vunpack.c.l.b16 %v108
    %v189 = vunpack.c.l.b16 %v109
    %v190 = vunpack.c.l.b16 %v110
    %v191 = vunpack.c.l.b16 %v111
    %v192 = vunpack.c.l.b16 %v112
    %v193 = vunpack.c.l.b16 %v113
    %v194 = vunpack.c.l.b16 %v114
    %v195 = vunpack.c.l.b16 %v115
    %v196 = vunpack.c.l.b16 %v116
    %v197 = vunpack.c.l.b16 %v117
    %v198 = vunpack.c.l.b16 %v118
    %v199 = vunpack.c.l.b16 %v119
    %v200 = vunpack.c.l.b16 %v120
    %v201 = vunpack.c.l.b16 %v121
    %v202 = vunpack.c.l.b16 %v122
    %v203 = vpack.c.b16 %v188, %v187
    %v204 = vpack.c.b16 %v190, %v189
    %v205 = vpack.c.b16 %v192, %v191
    %v206 = vpack.c.b16 %v194, %v193
    %v207 = vpack.c.b16 %v196, %v195
    %v208 = vpack.c.b16 %v198, %v197
    %v209 = vpack.c.b16 %v200, %v199
    %v210 = vpack.c.b16 %v202, %v201
    %219 = vmatprep.subr.bf16.mxu0 0
    %220 = vmatpush1.bf16.msra.mxu0 %v203
    %221 = vmatprep.subr.bf16.mxu0 0
    %222 = vmatpush1.bf16.msra.mxu0 %v204
    %223 = vmatprep.subr.bf16.mxu0 0
    %224 = vmatpush1.bf16.msra.mxu0 %v205
    %225 = vmatprep.subr.bf16.mxu0 0
    %226 = vmatpush1.bf16.msra.mxu0 %v206
    %227 = vmatprep.subr.bf16.mxu0 0
    %228 = vmatpush1.bf16.msra.mxu0 %v207
    %229 = vmatprep.subr.bf16.mxu0 0
    %230 = vmatpush1.bf16.msra.mxu0 %v208
    %231 = vmatprep.subr.bf16.mxu0 0
    %232 = vmatpush1.bf16.msra.mxu0 %v209
    %233 = vmatprep.subr.bf16.mxu0 0
    %234 = vmatpush1.bf16.msra.mxu0 %v210
    %235 = vmatprep.subr.bf16.mxu0 0
    %236 = vmatpush1.bf16.msra.mxu0 0
    %237 = vmatprep.subr.bf16.mxu0 0
    %238 = vmatpush1.bf16.msra.mxu0 0
    %239 = vmatprep.subr.bf16.mxu0 0
    %240 = vmatpush1.bf16.msra.mxu0 0
    %241 = vmatprep.subr.bf16.mxu0 0
    %242 = vmatpush1.bf16.msra.mxu0 0
    %243 = vmatprep.subr.bf16.mxu0 0
    %244 = vmatpush1.bf16.msra.mxu0 0
    %245 = vmatprep.subr.bf16.mxu0 0
    %246 = vmatpush1.bf16.msra.mxu0 0
    %247 = vmatprep.subr.bf16.mxu0 0
    %248 = vmatpush1.bf16.msra.mxu0 0
    %249 = vmatprep.subr.bf16.mxu0 0
    %250 = vmatpush1.bf16.msra.mxu0 0
    %251 = vmatprep.mubr.bf16.mxu0 0
    %252 = vmatmul.mubr.bf16.gmra.mrb[0].mxu0 %v155
    %v253 = vpop.f32.mrb[0].mxu0
    %v254 = vadd.f32 0.0, %v253
    %v255 = vpop.f32.mrb[0].mxu0
    %v256 = vpop.f32.mrb[0].mxu0
    %v257 = vadd.f32 0.0, %v256
    %v258 = vpop.f32.mrb[0].mxu0
    %259 = vmatprep.mubr.bf16.mxu0 0
    %260 = vmatmul.mubr.bf16.gmra.mrb[0].mxu0 %v156
    %v261 = vpop.f32.mrb[0].mxu0
    %v262 = vadd.f32 0.0, %v261
    %v263 = vpop.f32.mrb[0].mxu0
    %v264 = vpop.f32.mrb[0].mxu0
    %v265 = vadd.f32 0.0, %v264
    %v266 = vpop.f32.mrb[0].mxu0
    %267 = vmatprep.mubr.bf16.mxu0 0
    %268 = vmatmul.mubr.bf16.gmra.mrb[0].mxu0 %v157
    %v269 = vpop.f32.mrb[0].mxu0
    %v270 = vadd.f32 0.0, %v269
    %v271 = vpop.f32.mrb[0].mxu0
    %v272 = vpop.f32.mrb[0].mxu0
    %v273 = vadd.f32 0.0, %v272
    %v274 = vpop.f32.mrb[0].mxu0
    %275 = vmatprep.mubr.bf16.mxu0 0
    %276 = vmatmul.mubr.bf16.gmra.mrb[0].mxu0 %v158
    %v277 = vpop.f32.mrb[0].mxu0
    %v278 = vadd.f32 0.0, %v277
    %v279 = vpop.f32.mrb[0].mxu0
    %v280 = vpop.f32.mrb[0].mxu0
    %v281 = vadd.f32 0.0, %v280
    %v282 = vpop.f32.mrb[0].mxu0
    %283 = vmatprep.mubr.bf16.mxu0 0
    %284 = vmatmul.mubr.bf16.gmra.mrb[0].mxu0 %v159
    %v285 = vpop.f32.mrb[0].mxu0
    %v286 = vadd.f32 0.0, %v285
    %v287 = vpop.f32.mrb[0].mxu0
    %v288 = vpop.f32.mrb[0].mxu0
    %v289 = vadd.f32 0.0, %v288
    %v290 = vpop.f32.mrb[0].mxu0
    %291 = vmatprep.mubr.bf16.mxu0 0
    %292 = vmatmul.mubr.bf16.gmra.mrb[0].mxu0 %v160
    %v293 = vpop.f32.mrb[0].mxu0
    %v294 = vadd.f32 0.0, %v293
    %v295 = vpop.f32.mrb[0].mxu0
    %v296 = vpop.f32.mrb[0].mxu0
    %v297 = vadd.f32 0.0, %v296
    %v298 = vpop.f32.mrb[0].mxu0
    %299 = vmatprep.mubr.bf16.mxu0 0
    %300 = vmatmul.mubr.bf16.gmra.mrb[0].mxu0 %v161
    %v301 = vpop.f32.mrb[0].mxu0
    %v302 = vadd.f32 0.0, %v301
    %v303 = vpop.f32.mrb[0].mxu0
    %v304 = vpop.f32.mrb[0].mxu0
    %v305 = vadd.f32 0.0, %v304
    %v306 = vpop.f32.mrb[0].mxu0
    %307 = vmatprep.mubr.bf16.mxu0 0
    %308 = vmatmul.mubr.bf16.gmra.mrb[0].mxu0 %v162
    %v309 = vpop.f32.mrb[0].mxu0
    %v310 = vadd.f32 0.0, %v309
    %v311 = vpop.f32.mrb[0].mxu0
    %v312 = vpop.f32.mrb[0].mxu0
    %v313 = vadd.f32 0.0, %v312
    %v314 = vpop.f32.mrb[0].mxu0
    %315 = vdwg.mxu0
    %v316 = vadd.f32 %v75, %v254
    %v317 = vadd.f32 %v76, %v257
    %v318 = vadd.f32 %v77, %v262
    %v319 = vadd.f32 %v78, %v265
    %v320 = vadd.f32 %v79, %v270
    %v321 = vadd.f32 %v80, %v273
    %v322 = vadd.f32 %v81, %v278
    %v323 = vadd.f32 %v82, %v281
    %v324 = vadd.f32 %v83, %v286
    %v325 = vadd.f32 %v84, %v289
    %v326 = vadd.f32 %v85, %v294
    %v327 = vadd.f32 %v86, %v297
    %v328 = vadd.f32 %v87, %v302
    %v329 = vadd.f32 %v88, %v305
    %v330 = vadd.f32 %v89, %v310
    %v331 = vadd.f32 %v90, %v313
    %332 = vst [vmem:[#allocation2] sm:$0xff] %v316
    %333 = vst [vmem:[#allocation2 + $0x8] sm:$0xff] %v317
    %334 = vst [vmem:[#allocation2 + $0x10] sm:$0xff] %v318
    %335 = vst [vmem:[#allocation2 + $0x18] sm:$0xff] %v319
    %336 = vst [vmem:[#allocation2 + $0x20] sm:$0xff] %v320
    %337 = vst [vmem:[#allocation2 + $0x28] sm:$0xff] %v321
    %338 = vst [vmem:[#allocation2 + $0x30] sm:$0xff] %v322
    %339 = vst [vmem:[#allocation2 + $0x38] sm:$0xff] %v323
    %340 = vst [vmem:[#allocation2 + $0x40] sm:$0xff] %v324
    %341 = vst [vmem:[#allocation2 + $0x48] sm:$0xff] %v325
    %342 = vst [vmem:[#allocation2 + $0x50] sm:$0xff] %v326
    %343 = vst [vmem:[#allocation2 + $0x58] sm:$0xff] %v327
    %344 = vst [vmem:[#allocation2 + $0x60] sm:$0xff] %v328
    %345 = vst [vmem:[#allocation2 + $0x68] sm:$0xff] %v329
    %346 = vst [vmem:[#allocation2 + $0x70] sm:$0xff] %v330
    %347 = vst [vmem:[#allocation2 + $0x78] sm:$0xff] %v331
    // Predicated region
    $region30: #{convstem_forward.6} parent=1 // pred_check
      %p348 = pneg %p55
    $region31: #{convstem_forward.6} parent=1 // pred_check_branch
      %350 = sbr.rel (%p348) target = $region33
    $region32: #{convstem_forward.6} parent=1 // pred_region
      %v351 = vld [vmem:[#allocation2] sm:$0xff]
      %v352 = vld [vmem:[#allocation2 + $0x8] sm:$0xff]
      %v353 = vld [vmem:[#allocation2 + $0x10] sm:$0xff]
      %v354 = vld [vmem:[#allocation2 + $0x18] sm:$0xff]
      %v355 = vld [vmem:[#allocation2 + $0x20] sm:$0xff]
      %v356 = vld [vmem:[#allocation2 + $0x28] sm:$0xff]
      %v357 = vld [vmem:[#allocation2 + $0x30] sm:$0xff]
      %v358 = vld [vmem:[#allocation2 + $0x38] sm:$0xff]
      %v359 = vld [vmem:[#allocation2 + $0x40] sm:$0xff]
      %v360 = vld [vmem:[#allocation2 + $0x48] sm:$0xff]
      %v361 = vld [vmem:[#allocation2 + $0x50] sm:$0xff]
      %v362 = vld [vmem:[#allocation2 + $0x58] sm:$0xff]
      %v363 = vld [vmem:[#allocation2 + $0x60] sm:$0xff]
      %v364 = vld [vmem:[#allocation2 + $0x68] sm:$0xff]
      %v365 = vld [vmem:[#allocation2 + $0x70] sm:$0xff]
      %v366 = vld [vmem:[#allocation2 + $0x78] sm:$0xff]
      %v367 = vld [vmem:[#allocation8] sm:$0x1]
      %v369 = vlaneseq
      %v370 = vshrl.u32 %v369, 7
      %v371 = vsub.s32 0, %v370
      %v372 = vrot.slane %v367, %v371
      %v374 = vadd.f32 %v351, %v372
      %v375 = vadd.f32 %v352, %v372
      %v376 = vadd.f32 %v353, %v372
      %v377 = vadd.f32 %v354, %v372
      %v378 = vadd.f32 %v355, %v372
      %v379 = vadd.f32 %v356, %v372
      %v380 = vadd.f32 %v357, %v372
      %v381 = vadd.f32 %v358, %v372
      %v382 = vadd.f32 %v359, %v372
      %v383 = vadd.f32 %v360, %v372
      %v384 = vadd.f32 %v361, %v372
      %v385 = vadd.f32 %v362, %v372
      %v386 = vadd.f32 %v363, %v372
      %v387 = vadd.f32 %v364, %v372
      %v388 = vadd.f32 %v365, %v372
      %v389 = vadd.f32 %v366, %v372
      %v390 = vmax.f32 %v374, 0.0
      %v391 = vmax.f32 %v375, 0.0
      %v392 = vmax.f32 %v376, 0.0
      %v393 = vmax.f32 %v377, 0.0
      %v394 = vmax.f32 %v378, 0.0
      %v395 = vmax.f32 %v379, 0.0
      %v396 = vmax.f32 %v380, 0.0
      %v397 = vmax.f32 %v381, 0.0
      %v398 = vmax.f32 %v382, 0.0
      %v399 = vmax.f32 %v383, 0.0
      %v400 = vmax.f32 %v384, 0.0
      %v401 = vmax.f32 %v385, 0.0
      %v402 = vmax.f32 %v386, 0.0
      %v403 = vmax.f32 %v387, 0.0
      %v404 = vmax.f32 %v388, 0.0
      %v405 = vmax.f32 %v389, 0.0
      %v406 = vpack.c.bf16 %v391, %v390
      %v407 = vpack.c.bf16 %v393, %v392
      %v408 = vpack.c.bf16 %v395, %v394
      %v409 = vpack.c.bf16 %v397, %v396
      %v410 = vpack.c.bf16 %v399, %v398
      %v411 = vpack.c.bf16 %v401, %v400
      %v412 = vpack.c.bf16 %v403, %v402
      %v413 = vpack.c.bf16 %v405, %v404
      %v422 = vunpack.c.l.b16 %v406
      %v423 = vunpack.c.h.b16 %v406
      %v424 = vunpack.c.l.b16 %v407
      %v425 = vunpack.c.h.b16 %v407
      %v426 = vunpack.c.l.b16 %v408
      %v427 = vunpack.c.h.b16 %v408
      %v428 = vunpack.c.l.b16 %v409
      %v429 = vunpack.c.h.b16 %v409
      %v430 = vunpack.c.l.b16 %v410
      %v431 = vunpack.c.h.b16 %v410
      %v432 = vunpack.c.l.b16 %v411
      %v433 = vunpack.c.h.b16 %v411
      %v434 = vunpack.c.l.b16 %v412
      %v435 = vunpack.c.h.b16 %v412
      %v436 = vunpack.c.l.b16 %v413
      %v437 = vunpack.c.h.b16 %v413
      %v438 = vpack.c.b16 %v422, %v422
      %v439 = vpack.c.b16 %v423, %v423
      %v440 = vpack.c.b16 %v424, %v424
      %v441 = vpack.c.b16 %v425, %v425
      %v442 = vpack.c.b16 %v426, %v426
      %v443 = vpack.c.b16 %v427, %v427
      %v444 = vpack.c.b16 %v428, %v428
      %v445 = vpack.c.b16 %v429, %v429
      %v446 = vpack.c.b16 %v430, %v430
      %v447 = vpack.c.b16 %v431, %v431
      %v448 = vpack.c.b16 %v432, %v432
      %v449 = vpack.c.b16 %v433, %v433
      %v450 = vpack.c.b16 %v434, %v434
      %v451 = vpack.c.b16 %v435, %v435
      %v452 = vpack.c.b16 %v436, %v436
      %v453 = vpack.c.b16 %v437, %v437
      %470 = vst [vmem:[#allocation9] sm:$0xf] %v438
      %471 = vst [vmem:[#allocation9 + $0x4] sm:$0xf] %v439
      %472 = vst [vmem:[#allocation9 + $0x8] sm:$0xf] %v440
      %473 = vst [vmem:[#allocation9 + $0xc] sm:$0xf] %v441
      %474 = vst [vmem:[#allocation9 + $0x10] sm:$0xf] %v442
      %475 = vst [vmem:[#allocation9 + $0x14] sm:$0xf] %v443
      %476 = vst [vmem:[#allocation9 + $0x18] sm:$0xf] %v444
      %477 = vst [vmem:[#allocation9 + $0x1c] sm:$0xf] %v445
      %478 = vst [vmem:[#allocation9 + $0x20] sm:$0xf] %v446
      %479 = vst [vmem:[#allocation9 + $0x24] sm:$0xf] %v447
      %480 = vst [vmem:[#allocation9 + $0x28] sm:$0xf] %v448
      %481 = vst [vmem:[#allocation9 + $0x2c] sm:$0xf] %v449
      %482 = vst [vmem:[#allocation9 + $0x30] sm:$0xf] %v450
      %483 = vst [vmem:[#allocation9 + $0x34] sm:$0xf] %v451
      %484 = vst [vmem:[#allocation9 + $0x38] sm:$0xf] %v452
      %485 = vst [vmem:[#allocation9 + $0x3c] sm:$0xf] %v453
    $region33: #{convstem_forward.6} parent=1 // pred_fallthru
      _
    // Predicated region
    $region34: #{convstem_forward.6} parent=1 // pred_check
      _
    $region35: #{convstem_forward.6} parent=1 // pred_check_branch
      %487 = sbr.rel (0) target = $region37
    $region36: #{convstem_forward.6} parent=1 // pred_region
      %s489 = ssub.s32 1024, 1024
      %490 = vsyncadd [#allocation5], %s489
      %s491 = sshll.u32 [#allocation9], 4
      %s492 = int_to_ptr.vmem [resolvable:$true] %s491
      %497 = dma.vmem_to_hbm [thread:$0]  %s492, 1024, %s3, [#allocation5], 64, 64, 4
    $region37: #{convstem_forward.6} parent=1 // pred_fallthru
      _
    // Predicated region
    $region38: #{convstem_forward.6} parent=1 // pred_check
      _
    $region39: #{convstem_forward.6} parent=1 // pred_check_branch
      %499 = sbr.rel (0) target = $region41
    $region40: #{convstem_forward.6} parent=1 // pred_region
      %500 = dma.done [#allocation5], 1024
    $region41: #{convstem_forward.6} parent=1 // pred_fallthru
      _
    %501 = vsyncpa [#allocation4], 1
    %502 = vsyncpa [#allocation7], 1
    %503 = vsyncpa [#allocation5], 1

// kernel: convstem_forward.7
$region0: #{convstem_forward.7}
  #allocation0 [shape = 'u32[]', space=smem, size = 0x4, offset = 0x4, fixed_abs, tag = 'smem constant byte address 0x4 - core index']
  #allocation1 [shape = 'u32[144,128]{1,0:T(1,128)}', space=vmem, size = 0x12000, scoped, tag = 'internal scratch']
  #allocation2 [shape = 'f32[128,128]{1,0:T(8,128)}', space=vmem, size = 0x10000, scoped, tag = 'scratch operand']
  %s0 = inlined_call_operand.hbm [shape: bf16[128,256], index: 0, kind: input, shape index: {}]
  %s1 = inlined_call_operand.hbm [shape: bf16[256,128], index: 1, kind: input, shape index: {}]
  %s2 = inlined_call_operand.hbm [shape: f32[1,128], index: 2, kind: input, shape index: {}]
  %s3 = inlined_call_operand.hbm [shape: bf16[128,128], index: 3, kind: output, shape index: {}]
  %s4 = sld [smem:[#allocation0]]
  $region42: #{convstem_forward.7} parent=0
    _
  %s6 = ssub.s32 1, %s4
  %s7 = scalar_select 0, %s6, %s4
  $region1: #{convstem_forward.7} parent=0
    #allocation3 [shape = 'u8[65536]{0}', space=vmem, size = 0x10000, scoped, tag = 'input window, operand 0, single buffered']
    #allocation4 [shape = 's32[1]{0}', space=sflag, size = 0x4, scoped, tag = 'scoped memory for convstem_forward.7']
    #allocation5 [shape = 's32[1]{0}', space=sflag, size = 0x4, scoped, tag = 'scoped memory for convstem_forward.7']
    #allocation6 [shape = 'u8[65536]{0}', space=vmem, size = 0x10000, scoped, tag = 'input window, operand 1, single buffered']
    #allocation7 [shape = 's32[1]{0}', space=sflag, size = 0x4, scoped, tag = 'scoped memory for convstem_forward.7']
    #allocation8 [shape = 'u8[512]{0}', space=vmem, size = 0x400, scoped, tag = 'input window, operand 2, single buffered']
    #allocation9 [shape = 'u8[32768]{0}', space=vmem, size = 0x8000, scoped, tag = 'output window, operand 0, single buffered']
    %8 = vsyncpa [#allocation4], 0
    %9 = vsyncpa [#allocation7], 0
    %10 = vsyncpa [#allocation5], 0
    // Predicated region
    $region2: #{convstem_forward.7} parent=1 // pred_check
      _
    $region3: #{convstem_forward.7} parent=1 // pred_check_branch
      %12 = sbr.rel (0) target = $region5
    $region4: #{convstem_forward.7} parent=1 // pred_region
      %s14 = ssub.s32 2048, 2048
      %15 = vsyncadd [#allocation4], %s14
      %s16 = sshll.u32 [#allocation3], 4
      %s17 = int_to_ptr.vmem [resolvable:$true] %s16
      %22 = dma.hbm_to_vmem [thread:$0]  %s0, 2048, %s17, [#allocation4], 128, 128, 8
    $region5: #{convstem_forward.7} parent=1 // pred_fallthru
      _
    // Predicated region
    $region6: #{convstem_forward.7} parent=1 // pred_check
      _
    $region7: #{convstem_forward.7} parent=1 // pred_check_branch
      %24 = sbr.rel (0) target = $region9
    $region8: #{convstem_forward.7} parent=1 // pred_region
      %s26 = ssub.s32 2048, 2048
      %27 = vsyncadd [#allocation7], %s26
      %s28 = sshll.u32 [#allocation6], 4
      %s29 = int_to_ptr.vmem [resolvable:$true] %s28
      %34 = dma.hbm_to_vmem [thread:$0]  %s1, 2048, %s29, [#allocation7], 64, 64, 4
    $region9: #{convstem_forward.7} parent=1 // pred_fallthru
      _
    // Predicated region
    $region10: #{convstem_forward.7} parent=1 // pred_check
      _
    $region11: #{convstem_forward.7} parent=1 // pred_check_branch
      %36 = sbr.rel (0) target = $region13
    $region12: #{convstem_forward.7} parent=1 // pred_region
      %s38 = ssub.s32 16, 16
      %39 = vsyncadd [#allocation7], %s38
      %s41 = sshll.u32 [#allocation8], 4
      %s42 = int_to_ptr.vmem [resolvable:$true] %s41
      %44 = dma.hbm_to_vmem [thread:$0]  %s2, 16, %s42, [#allocation7]
    $region13: #{convstem_forward.7} parent=1 // pred_fallthru
      _
    // Predicated region
    $region14: #{convstem_forward.7} parent=1 // pred_check
      _
    $region15: #{convstem_forward.7} parent=1 // pred_check_branch
      %46 = sbr.rel (0) target = $region17
    $region16: #{convstem_forward.7} parent=1 // pred_region
      %47 = dma.done [#allocation4], 2048
    $region17: #{convstem_forward.7} parent=1 // pred_fallthru
      _
    // Predicated region
    $region18: #{convstem_forward.7} parent=1 // pred_check
      _
    $region19: #{convstem_forward.7} parent=1 // pred_check_branch
      %49 = sbr.rel (0) target = $region21
    $region20: #{convstem_forward.7} parent=1 // pred_region
      %50 = dma.done [#allocation7], 2048
    $region21: #{convstem_forward.7} parent=1 // pred_fallthru
      _
    // Predicated region
    $region22: #{convstem_forward.7} parent=1 // pred_check
      _
    $region23: #{convstem_forward.7} parent=1 // pred_check_branch
      %52 = sbr.rel (0) target = $region25
    $region24: #{convstem_forward.7} parent=1 // pred_region
      %53 = dma.done [#allocation7], 16
    $region25: #{convstem_forward.7} parent=1 // pred_fallthru
      _
    %p55 = scmp.eq.s32.totalorder 0, 0
    // Predicated region
    $region26: #{convstem_forward.7} parent=1 // pred_check
      %p56 = pneg %p55
    $region27: #{convstem_forward.7} parent=1 // pred_check_branch
      %58 = sbr.rel (%p56) target = $region29
    $region28: #{convstem_forward.7} parent=1 // pred_region
      %59 = vst [vmem:[#allocation2] sm:$0xff] 0.0
      %60 = vst [vmem:[#allocation2 + $0x8] sm:$0xff] 0.0
      %61 = vst [vmem:[#allocation2 + $0x10] sm:$0xff] 0.0
      %62 = vst [vmem:[#allocation2 + $0x18] sm:$0xff] 0.0
      %63 = vst [vmem:[#allocation2 + $0x20] sm:$0xff] 0.0
      %64 = vst [vmem:[#allocation2 + $0x28] sm:$0xff] 0.0
      %65 = vst [vmem:[#allocation2 + $0x30] sm:$0xff] 0.0
      %66 = vst [vmem:[#allocation2 + $0x38] sm:$0xff] 0.0
      %67 = vst [vmem:[#allocation2 + $0x40] sm:$0xff] 0.0
      %68 = vst [vmem:[#allocation2 + $0x48] sm:$0xff] 0.0
      %69 = vst [vmem:[#allocation2 + $0x50] sm:$0xff] 0.0
      %70 = vst [vmem:[#allocation2 + $0x58] sm:$0xff] 0.0
      %71 = vst [vmem:[#allocation2 + $0x60] sm:$0xff] 0.0
      %72 = vst [vmem:[#allocation2 + $0x68] sm:$0xff] 0.0
      %73 = vst [vmem:[#allocation2 + $0x70] sm:$0xff] 0.0
      %74 = vst [vmem:[#allocation2 + $0x78] sm:$0xff] 0.0
    $region29: #{convstem_forward.7} parent=1 // pred_fallthru
      _
    %v75 = vld [vmem:[#allocation2] sm:$0xff]
    %v76 = vld [vmem:[#allocation2 + $0x8] sm:$0xff]
    %v77 = vld [vmem:[#allocation2 + $0x10] sm:$0xff]
    %v78 = vld [vmem:[#allocation2 + $0x18] sm:$0xff]
    %v79 = vld [vmem:[#allocation2 + $0x20] sm:$0xff]
    %v80 = vld [vmem:[#allocation2 + $0x28] sm:$0xff]
    %v81 = vld [vmem:[#allocation2 + $0x30] sm:$0xff]
    %v82 = vld [vmem:[#allocation2 + $0x38] sm:$0xff]
    %v83 = vld [vmem:[#allocation2 + $0x40] sm:$0xff]
    %v84 = vld [vmem:[#allocation2 + $0x48] sm:$0xff]
    %v85 = vld [vmem:[#allocation2 + $0x50] sm:$0xff]
    %v86 = vld [vmem:[#allocation2 + $0x58] sm:$0xff]
    %v87 = vld [vmem:[#allocation2 + $0x60] sm:$0xff]
    %v88 = vld [vmem:[#allocation2 + $0x68] sm:$0xff]
    %v89 = vld [vmem:[#allocation2 + $0x70] sm:$0xff]
    %v90 = vld [vmem:[#allocation2 + $0x78] sm:$0xff]
    %v91 = vld [vmem:[#allocation3] sm:$0xff]
    %v92 = vld [vmem:[#allocation3 + $0x8] sm:$0xff]
    %v93 = vld [vmem:[#allocation3 + $0x10] sm:$0xff]
    %v94 = vld [vmem:[#allocation3 + $0x18] sm:$0xff]
    %v95 = vld [vmem:[#allocation3 + $0x20] sm:$0xff]
    %v96 = vld [vmem:[#allocation3 + $0x28] sm:$0xff]
    %v97 = vld [vmem:[#allocation3 + $0x30] sm:$0xff]
    %v98 = vld [vmem:[#allocation3 + $0x38] sm:$0xff]
    %v99 = vld [vmem:[#allocation3 + $0x40] sm:$0xff]
    %v100 = vld [vmem:[#allocation3 + $0x48] sm:$0xff]
    %v101 = vld [vmem:[#allocation3 + $0x50] sm:$0xff]
    %v102 = vld [vmem:[#allocation3 + $0x58] sm:$0xff]
    %v103 = vld [vmem:[#allocation3 + $0x60] sm:$0xff]
    %v104 = vld [vmem:[#allocation3 + $0x68] sm:$0xff]
    %v105 = vld [vmem:[#allocation3 + $0x70] sm:$0xff]
    %v106 = vld [vmem:[#allocation3 + $0x78] sm:$0xff]
    %v107 = vld [vmem:[#allocation6] sm:$0xf]
    %v108 = vld [vmem:[#allocation6 + $0x4] sm:$0xf]
    %v109 = vld [vmem:[#allocation6 + $0x8] sm:$0xf]
    %v110 = vld [vmem:[#allocation6 + $0xc] sm:$0xf]
    %v111 = vld [vmem:[#allocation6 + $0x10] sm:$0xf]
    %v112 = vld [vmem:[#allocation6 + $0x14] sm:$0xf]
    %v113 = vld [vmem:[#allocation6 + $0x18] sm:$0xf]
    %v114 = vld [vmem:[#allocation6 + $0x1c] sm:$0xf]
    %v115 = vld [vmem:[#allocation6 + $0x20] sm:$0xf]
    %v116 = vld [vmem:[#allocation6 + $0x24] sm:$0xf]
    %v117 = vld [vmem:[#allocation6 + $0x28] sm:$0xf]
    %v118 = vld [vmem:[#allocation6 + $0x2c] sm:$0xf]
    %v119 = vld [vmem:[#allocation6 + $0x30] sm:$0xf]
    %v120 = vld [vmem:[#allocation6 + $0x34] sm:$0xf]
    %v121 = vld [vmem:[#allocation6 + $0x38] sm:$0xf]
    %v122 = vld [vmem:[#allocation6 + $0x3c] sm:$0xf]
    %v123 = vld [vmem:[#allocation6 + $0x40] sm:$0xf]
    %v124 = vld [vmem:[#allocation6 + $0x44] sm:$0xf]
    %v125 = vld [vmem:[#allocation6 + $0x48] sm:$0xf]
    %v126 = vld [vmem:[#allocation6 + $0x4c] sm:$0xf]
    %v127 = vld [vmem:[#allocation6 + $0x50] sm:$0xf]
    %v128 = vld [vmem:[#allocation6 + $0x54] sm:$0xf]
    %v129 = vld [vmem:[#allocation6 + $0x58] sm:$0xf]
    %v130 = vld [vmem:[#allocation6 + $0x5c] sm:$0xf]
    %v131 = vld [vmem:[#allocation6 + $0x60] sm:$0xf]
    %v132 = vld [vmem:[#allocation6 + $0x64] sm:$0xf]
    %v133 = vld [vmem:[#allocation6 + $0x68] sm:$0xf]
    %v134 = vld [vmem:[#allocation6 + $0x6c] sm:$0xf]
    %v135 = vld [vmem:[#allocation6 + $0x70] sm:$0xf]
    %v136 = vld [vmem:[#allocation6 + $0x74] sm:$0xf]
    %v137 = vld [vmem:[#allocation6 + $0x78] sm:$0xf]
    %v138 = vld [vmem:[#allocation6 + $0x7c] sm:$0xf]
    %v155 = vunpack.c.l.b16 %v91
    %v156 = vunpack.c.h.b16 %v91
    %v157 = vunpack.c.l.b16 %v92
    %v158 = vunpack.c.h.b16 %v92
    %v159 = vunpack.c.l.b16 %v93
    %v160 = vunpack.c.h.b16 %v93
    %v161 = vunpack.c.l.b16 %v94
    %v162 = vunpack.c.h.b16 %v94
    %v163 = vunpack.c.l.b16 %v95
    %v164 = vunpack.c.h.b16 %v95
    %v165 = vunpack.c.l.b16 %v96
    %v166 = vunpack.c.h.b16 %v96
    %v167 = vunpack.c.l.b16 %v97
    %v168 = vunpack.c.h.b16 %v97
    %v169 = vunpack.c.l.b16 %v98
    %v170 = vunpack.c.h.b16 %v98
    %v171 = vunpack.c.l.b16 %v99
    %v172 = vunpack.c.h.b16 %v99
    %v173 = vunpack.c.l.b16 %v100
    %v174 = vunpack.c.h.b16 %v100
    %v175 = vunpack.c.l.b16 %v101
    %v176 = vunpack.c.h.b16 %v101
    %v177 = vunpack.c.l.b16 %v102
    %v178 = vunpack.c.h.b16 %v102
    %v179 = vunpack.c.l.b16 %v103
    %v180 = vunpack.c.h.b16 %v103
    %v181 = vunpack.c.l.b16 %v104
    %v182 = vunpack.c.h.b16 %v104
    %v183 = vunpack.c.l.b16 %v105
    %v184 = vunpack.c.h.b16 %v105
    %v185 = vunpack.c.l.b16 %v106
    %v186 = vunpack.c.h.b16 %v106
    %v187 = vpack.c.b16 %v157, %v155
    %v188 = vpack.c.b16 %v158, %v156
    %v189 = vpack.c.b16 %v161, %v159
    %v190 = vpack.c.b16 %v162, %v160
    %v191 = vpack.c.b16 %v165, %v163
    %v192 = vpack.c.b16 %v166, %v164
    %v193 = vpack.c.b16 %v169, %v167
    %v194 = vpack.c.b16 %v170, %v168
    %v195 = vpack.c.b16 %v173, %v171
    %v196 = vpack.c.b16 %v174, %v172
    %v197 = vpack.c.b16 %v177, %v175
    %v198 = vpack.c.b16 %v178, %v176
    %v199 = vpack.c.b16 %v181, %v179
    %v200 = vpack.c.b16 %v182, %v180
    %v201 = vpack.c.b16 %v185, %v183
    %v202 = vpack.c.b16 %v186, %v184
    %v251 = vunpack.c.l.b16 %v107
    %v252 = vunpack.c.l.b16 %v108
    %v253 = vunpack.c.l.b16 %v109
    %v254 = vunpack.c.l.b16 %v110
    %v255 = vunpack.c.l.b16 %v111
    %v256 = vunpack.c.l.b16 %v112
    %v257 = vunpack.c.l.b16 %v113
    %v258 = vunpack.c.l.b16 %v114
    %v259 = vunpack.c.l.b16 %v115
    %v260 = vunpack.c.l.b16 %v116
    %v261 = vunpack.c.l.b16 %v117
    %v262 = vunpack.c.l.b16 %v118
    %v263 = vunpack.c.l.b16 %v119
    %v264 = vunpack.c.l.b16 %v120
    %v265 = vunpack.c.l.b16 %v121
    %v266 = vunpack.c.l.b16 %v122
    %v267 = vunpack.c.l.b16 %v123
    %v268 = vunpack.c.l.b16 %v124
    %v269 = vunpack.c.l.b16 %v125
    %v270 = vunpack.c.l.b16 %v126
    %v271 = vunpack.c.l.b16 %v127
    %v272 = vunpack.c.l.b16 %v128
    %v273 = vunpack.c.l.b16 %v129
    %v274 = vunpack.c.l.b16 %v130
    %v275 = vunpack.c.l.b16 %v131
    %v276 = vunpack.c.l.b16 %v132
    %v277 = vunpack.c.l.b16 %v133
    %v278 = vunpack.c.l.b16 %v134
    %v279 = vunpack.c.l.b16 %v135
    %v280 = vunpack.c.l.b16 %v136
    %v281 = vunpack.c.l.b16 %v137
    %v282 = vunpack.c.l.b16 %v138
    %v283 = vpack.c.b16 %v252, %v251
    %v284 = vpack.c.b16 %v254, %v253
    %v285 = vpack.c.b16 %v256, %v255
    %v286 = vpack.c.b16 %v258, %v257
    %v287 = vpack.c.b16 %v260, %v259
    %v288 = vpack.c.b16 %v262, %v261
    %v289 = vpack.c.b16 %v264, %v263
    %v290 = vpack.c.b16 %v266, %v265
    %v291 = vpack.c.b16 %v268, %v267
    %v292 = vpack.c.b16 %v270, %v269
    %v293 = vpack.c.b16 %v272, %v271
    %v294 = vpack.c.b16 %v274, %v273
    %v295 = vpack.c.b16 %v276, %v275
    %v296 = vpack.c.b16 %v278, %v277
    %v297 = vpack.c.b16 %v280, %v279
    %v298 = vpack.c.b16 %v282, %v281
    %315 = vmatprep.subr.bf16.mxu0 0
    %316 = vmatpush1.bf16.msra.mxu0 %v283
    %317 = vmatprep.subr.bf16.mxu0 0
    %318 = vmatpush1.bf16.msra.mxu0 %v284
    %319 = vmatprep.subr.bf16.mxu0 0
    %320 = vmatpush1.bf16.msra.mxu0 %v285
    %321 = vmatprep.subr.bf16.mxu0 0
    %322 = vmatpush1.bf16.msra.mxu0 %v286
    %323 = vmatprep.subr.bf16.mxu0 0
    %324 = vmatpush1.bf16.msra.mxu0 %v287
    %325 = vmatprep.subr.bf16.mxu0 0
    %326 = vmatpush1.bf16.msra.mxu0 %v288
    %327 = vmatprep.subr.bf16.mxu0 0
    %328 = vmatpush1.bf16.msra.mxu0 %v289
    %329 = vmatprep.subr.bf16.mxu0 0
    %330 = vmatpush1.bf16.msra.mxu0 %v290
    %331 = vmatprep.subr.bf16.mxu0 0
    %332 = vmatpush1.bf16.msra.mxu0 %v291
    %333 = vmatprep.subr.bf16.mxu0 0
    %334 = vmatpush1.bf16.msra.mxu0 %v292
    %335 = vmatprep.subr.bf16.mxu0 0
    %336 = vmatpush1.bf16.msra.mxu0 %v293
    %337 = vmatprep.subr.bf16.mxu0 0
    %338 = vmatpush1.bf16.msra.mxu0 %v294
    %339 = vmatprep.subr.bf16.mxu0 0
    %340 = vmatpush1.bf16.msra.mxu0 %v295
    %341 = vmatprep.subr.bf16.mxu0 0
    %342 = vmatpush1.bf16.msra.mxu0 %v296
    %343 = vmatprep.subr.bf16.mxu0 0
    %344 = vmatpush1.bf16.msra.mxu0 %v297
    %345 = vmatprep.subr.bf16.mxu0 0
    %346 = vmatpush1.bf16.msra.mxu0 %v298
    %347 = vmatprep.mubr.bf16.mxu0 %v188
    %348 = vmatmul.mubr.bf16.gmra.mrb[0].mxu0 %v187
    %v349 = vpop.f32.mrb[0].mxu0
    %v350 = vadd.f32 0.0, %v349
    %v351 = vpop.f32.mrb[0].mxu0
    %v352 = vpop.f32.mrb[0].mxu0
    %v353 = vadd.f32 0.0, %v352
    %v354 = vpop.f32.mrb[0].mxu0
    %355 = vmatprep.mubr.bf16.mxu0 %v190
    %356 = vmatmul.mubr.bf16.gmra.mrb[0].mxu0 %v189
    %v357 = vpop.f32.mrb[0].mxu0
    %v358 = vadd.f32 0.0, %v357
    %v359 = vpop.f32.mrb[0].mxu0
    %v360 = vpop.f32.mrb[0].mxu0
    %v361 = vadd.f32 0.0, %v360
    %v362 = vpop.f32.mrb[0].mxu0
    %363 = vmatprep.mubr.bf16.mxu0 %v192
    %364 = vmatmul.mubr.bf16.gmra.mrb[0].mxu0 %v191
    %v365 = vpop.f32.mrb[0].mxu0
    %v366 = vadd.f32 0.0, %v365
    %v367 = vpop.f32.mrb[0].mxu0
    %v368 = vpop.f32.mrb[0].mxu0
    %v369 = vadd.f32 0.0, %v368
    %v370 = vpop.f32.mrb[0].mxu0
    %371 = vmatprep.mubr.bf16.mxu0 %v194
    %372 = vmatmul.mubr.bf16.gmra.mrb[0].mxu0 %v193
    %v373 = vpop.f32.mrb[0].mxu0
    %v374 = vadd.f32 0.0, %v373
    %v375 = vpop.f32.mrb[0].mxu0
    %v376 = vpop.f32.mrb[0].mxu0
    %v377 = vadd.f32 0.0, %v376
    %v378 = vpop.f32.mrb[0].mxu0
    %379 = vmatprep.mubr.bf16.mxu0 %v196
    %380 = vmatmul.mubr.bf16.gmra.mrb[0].mxu0 %v195
    %v381 = vpop.f32.mrb[0].mxu0
    %v382 = vadd.f32 0.0, %v381
    %v383 = vpop.f32.mrb[0].mxu0
    %v384 = vpop.f32.mrb[0].mxu0
    %v385 = vadd.f32 0.0, %v384
    %v386 = vpop.f32.mrb[0].mxu0
    %387 = vmatprep.mubr.bf16.mxu0 %v198
    %388 = vmatmul.mubr.bf16.gmra.mrb[0].mxu0 %v197
    %v389 = vpop.f32.mrb[0].mxu0
    %v390 = vadd.f32 0.0, %v389
    %v391 = vpop.f32.mrb[0].mxu0
    %v392 = vpop.f32.mrb[0].mxu0
    %v393 = vadd.f32 0.0, %v392
    %v394 = vpop.f32.mrb[0].mxu0
    %395 = vmatprep.mubr.bf16.mxu0 %v200
    %396 = vmatmul.mubr.bf16.gmra.mrb[0].mxu0 %v199
    %v397 = vpop.f32.mrb[0].mxu0
    %v398 = vadd.f32 0.0, %v397
    %v399 = vpop.f32.mrb[0].mxu0
    %v400 = vpop.f32.mrb[0].mxu0
    %v401 = vadd.f32 0.0, %v400
    %v402 = vpop.f32.mrb[0].mxu0
    %403 = vmatprep.mubr.bf16.mxu0 %v202
    %404 = vmatmul.mubr.bf16.gmra.mrb[0].mxu0 %v201
    %v405 = vpop.f32.mrb[0].mxu0
    %v406 = vadd.f32 0.0, %v405
    %v407 = vpop.f32.mrb[0].mxu0
    %v408 = vpop.f32.mrb[0].mxu0
    %v409 = vadd.f32 0.0, %v408
    %v410 = vpop.f32.mrb[0].mxu0
    %411 = vdwg.mxu0
    %v412 = vadd.f32 %v75, %v350
    %v413 = vadd.f32 %v76, %v353
    %v414 = vadd.f32 %v77, %v358
    %v415 = vadd.f32 %v78, %v361
    %v416 = vadd.f32 %v79, %v366
    %v417 = vadd.f32 %v80, %v369
    %v418 = vadd.f32 %v81, %v374
    %v419 = vadd.f32 %v82, %v377
    %v420 = vadd.f32 %v83, %v382
    %v421 = vadd.f32 %v84, %v385
    %v422 = vadd.f32 %v85, %v390
    %v423 = vadd.f32 %v86, %v393
    %v424 = vadd.f32 %v87, %v398
    %v425 = vadd.f32 %v88, %v401
    %v426 = vadd.f32 %v89, %v406
    %v427 = vadd.f32 %v90, %v409
    %428 = vst [vmem:[#allocation2] sm:$0xff] %v412
    %429 = vst [vmem:[#allocation2 + $0x8] sm:$0xff] %v413
    %430 = vst [vmem:[#allocation2 + $0x10] sm:$0xff] %v414
    %431 = vst [vmem:[#allocation2 + $0x18] sm:$0xff] %v415
    %432 = vst [vmem:[#allocation2 + $0x20] sm:$0xff] %v416
    %433 = vst [vmem:[#allocation2 + $0x28] sm:$0xff] %v417
    %434 = vst [vmem:[#allocation2 + $0x30] sm:$0xff] %v418
    %435 = vst [vmem:[#allocation2 + $0x38] sm:$0xff] %v419
    %436 = vst [vmem:[#allocation2 + $0x40] sm:$0xff] %v420
    %437 = vst [vmem:[#allocation2 + $0x48] sm:$0xff] %v421
    %438 = vst [vmem:[#allocation2 + $0x50] sm:$0xff] %v422
    %439 = vst [vmem:[#allocation2 + $0x58] sm:$0xff] %v423
    %440 = vst [vmem:[#allocation2 + $0x60] sm:$0xff] %v424
    %441 = vst [vmem:[#allocation2 + $0x68] sm:$0xff] %v425
    %442 = vst [vmem:[#allocation2 + $0x70] sm:$0xff] %v426
    %443 = vst [vmem:[#allocation2 + $0x78] sm:$0xff] %v427
    // Predicated region
    $region30: #{convstem_forward.7} parent=1 // pred_check
      %p444 = pneg %p55
    $region31: #{convstem_forward.7} parent=1 // pred_check_branch
      %446 = sbr.rel (%p444) target = $region33
    $region32: #{convstem_forward.7} parent=1 // pred_region
      %v447 = vld [vmem:[#allocation2] sm:$0xff]
      %v448 = vld [vmem:[#allocation2 + $0x8] sm:$0xff]
      %v449 = vld [vmem:[#allocation2 + $0x10] sm:$0xff]
      %v450 = vld [vmem:[#allocation2 + $0x18] sm:$0xff]
      %v451 = vld [vmem:[#allocation2 + $0x20] sm:$0xff]
      %v452 = vld [vmem:[#allocation2 + $0x28] sm:$0xff]
      %v453 = vld [vmem:[#allocation2 + $0x30] sm:$0xff]
      %v454 = vld [vmem:[#allocation2 + $0x38] sm:$0xff]
      %v455 = vld [vmem:[#allocation2 + $0x40] sm:$0xff]
      %v456 = vld [vmem:[#allocation2 + $0x48] sm:$0xff]
      %v457 = vld [vmem:[#allocation2 + $0x50] sm:$0xff]
      %v458 = vld [vmem:[#allocation2 + $0x58] sm:$0xff]
      %v459 = vld [vmem:[#allocation2 + $0x60] sm:$0xff]
      %v460 = vld [vmem:[#allocation2 + $0x68] sm:$0xff]
      %v461 = vld [vmem:[#allocation2 + $0x70] sm:$0xff]
      %v462 = vld [vmem:[#allocation2 + $0x78] sm:$0xff]
      %v463 = vld [vmem:[#allocation8] sm:$0x1]
      %v465 = vlaneseq
      %v466 = vshrl.u32 %v465, 7
      %v467 = vsub.s32 0, %v466
      %v468 = vrot.slane %v463, %v467
      %v470 = vadd.f32 %v447, %v468
      %v471 = vadd.f32 %v448, %v468
      %v472 = vadd.f32 %v449, %v468
      %v473 = vadd.f32 %v450, %v468
      %v474 = vadd.f32 %v451, %v468
      %v475 = vadd.f32 %v452, %v468
      %v476 = vadd.f32 %v453, %v468
      %v477 = vadd.f32 %v454, %v468
      %v478 = vadd.f32 %v455, %v468
      %v479 = vadd.f32 %v456, %v468
      %v480 = vadd.f32 %v457, %v468
      %v481 = vadd.f32 %v458, %v468
      %v482 = vadd.f32 %v459, %v468
      %v483 = vadd.f32 %v460, %v468
      %v484 = vadd.f32 %v461, %v468
      %v485 = vadd.f32 %v462, %v468
      %v486 = vmax.f32 %v470, 0.0
      %v487 = vmax.f32 %v471, 0.0
      %v488 = vmax.f32 %v472, 0.0
      %v489 = vmax.f32 %v473, 0.0
      %v490 = vmax.f32 %v474, 0.0
      %v491 = vmax.f32 %v475, 0.0
      %v492 = vmax.f32 %v476, 0.0
      %v493 = vmax.f32 %v477, 0.0
      %v494 = vmax.f32 %v478, 0.0
      %v495 = vmax.f32 %v479, 0.0
      %v496 = vmax.f32 %v480, 0.0
      %v497 = vmax.f32 %v481, 0.0
      %v498 = vmax.f32 %v482, 0.0
      %v499 = vmax.f32 %v483, 0.0
      %v500 = vmax.f32 %v484, 0.0
      %v501 = vmax.f32 %v485, 0.0
      %v502 = vpack.c.bf16 %v487, %v486
      %v503 = vpack.c.bf16 %v489, %v488
      %v504 = vpack.c.bf16 %v491, %v490
      %v505 = vpack.c.bf16 %v493, %v492
      %v506 = vpack.c.bf16 %v495, %v494
      %v507 = vpack.c.bf16 %v497, %v496
      %v508 = vpack.c.bf16 %v499, %v498
      %v509 = vpack.c.bf16 %v501, %v500
      %v518 = vunpack.c.l.b16 %v502
      %v519 = vunpack.c.h.b16 %v502
      %v520 = vunpack.c.l.b16 %v503
      %v521 = vunpack.c.h.b16 %v503
      %v522 = vunpack.c.l.b16 %v504
      %v523 = vunpack.c.h.b16 %v504
      %v524 = vunpack.c.l.b16 %v505
      %v525 = vunpack.c.h.b16 %v505
      %v526 = vunpack.c.l.b16 %v506
      %v527 = vunpack.c.h.b16 %v506
      %v528 = vunpack.c.l.b16 %v507
      %v529 = vunpack.c.h.b16 %v507
      %v530 = vunpack.c.l.b16 %v508
      %v531 = vunpack.c.h.b16 %v508
      %v532 = vunpack.c.l.b16 %v509
      %v533 = vunpack.c.h.b16 %v509
      %v534 = vpack.c.b16 %v518, %v518
      %v535 = vpack.c.b16 %v519, %v519
      %v536 = vpack.c.b16 %v520, %v520
      %v537 = vpack.c.b16 %v521, %v521
      %v538 = vpack.c.b16 %v522, %v522
      %v539 = vpack.c.b16 %v523, %v523
      %v540 = vpack.c.b16 %v524, %v524
      %v541 = vpack.c.b16 %v525, %v525
      %v542 = vpack.c.b16 %v526, %v526
      %v543 = vpack.c.b16 %v527, %v527
      %v544 = vpack.c.b16 %v528, %v528
      %v545 = vpack.c.b16 %v529, %v529
      %v546 = vpack.c.b16 %v530, %v530
      %v547 = vpack.c.b16 %v531, %v531
      %v548 = vpack.c.b16 %v532, %v532
      %v549 = vpack.c.b16 %v533, %v533
      %566 = vst [vmem:[#allocation9] sm:$0xf] %v534
      %567 = vst [vmem:[#allocation9 + $0x4] sm:$0xf] %v535
      %568 = vst [vmem:[#allocation9 + $0x8] sm:$0xf] %v536
      %569 = vst [vmem:[#allocation9 + $0xc] sm:$0xf] %v537
      %570 = vst [vmem:[#allocation9 + $0x10] sm:$0xf] %v538
      %571 = vst [vmem:[#allocation9 + $0x14] sm:$0xf] %v539
      %572 = vst [vmem:[#allocation9 + $0x18] sm:$0xf] %v540
      %573 = vst [vmem:[#allocation9 + $0x1c] sm:$0xf] %v541
      %574 = vst [vmem:[#allocation9 + $0x20] sm:$0xf] %v542
      %575 = vst [vmem:[#allocation9 + $0x24] sm:$0xf] %v543
      %576 = vst [vmem:[#allocation9 + $0x28] sm:$0xf] %v544
      %577 = vst [vmem:[#allocation9 + $0x2c] sm:$0xf] %v545
      %578 = vst [vmem:[#allocation9 + $0x30] sm:$0xf] %v546
      %579 = vst [vmem:[#allocation9 + $0x34] sm:$0xf] %v547
      %580 = vst [vmem:[#allocation9 + $0x38] sm:$0xf] %v548
      %581 = vst [vmem:[#allocation9 + $0x3c] sm:$0xf] %v549
    $region33: #{convstem_forward.7} parent=1 // pred_fallthru
      _
    // Predicated region
    $region34: #{convstem_forward.7} parent=1 // pred_check
      _
    $region35: #{convstem_forward.7} parent=1 // pred_check_branch
      %583 = sbr.rel (0) target = $region37
    $region36: #{convstem_forward.7} parent=1 // pred_region
      %s585 = ssub.s32 1024, 1024
      %586 = vsyncadd [#allocation5], %s585
      %s587 = sshll.u32 [#allocation9], 4
      %s588 = int_to_ptr.vmem [resolvable:$true] %s587
      %593 = dma.vmem_to_hbm [thread:$0]  %s588, 1024, %s3, [#allocation5], 64, 64, 4
    $region37: #{convstem_forward.7} parent=1 // pred_fallthru
      _
    // Predicated region
    $region38: #{convstem_forward.7} parent=1 // pred_check
      _
    $region39: #{convstem_forward.7} parent=1 // pred_check_branch
      %595 = sbr.rel (0) target = $region41
    $region40: #{convstem_forward.7} parent=1 // pred_region
      %596 = dma.done [#allocation5], 1024
    $region41: #{convstem_forward.7} parent=1 // pred_fallthru
      _
    %597 = vsyncpa [#allocation4], 1
    %598 = vsyncpa [#allocation7], 1
    %599 = vsyncpa [#allocation5], 1

// kernel: convstem_forward.8
$region0: #{convstem_forward.8}
  #allocation0 [shape = 'u32[]', space=smem, size = 0x4, offset = 0x4, fixed_abs, tag = 'smem constant byte address 0x4 - core index']
  #allocation1 [shape = 'u32[144,128]{1,0:T(1,128)}', space=vmem, size = 0x12000, scoped, tag = 'internal scratch']
  #allocation2 [shape = 'f32[128,128]{1,0:T(8,128)}', space=vmem, size = 0x10000, scoped, tag = 'scratch operand']
  %s0 = inlined_call_operand.hbm [shape: bf16[128,384], index: 0, kind: input, shape index: {}]
  %s1 = inlined_call_operand.hbm [shape: bf16[384,128], index: 1, kind: input, shape index: {}]
  %s2 = inlined_call_operand.hbm [shape: f32[1,128], index: 2, kind: input, shape index: {}]
  %s3 = inlined_call_operand.hbm [shape: bf16[128,128], index: 3, kind: output, shape index: {}]
  %s4 = sld [smem:[#allocation0]]
  $region65: #{convstem_forward.8} parent=0
    _
  %s6 = ssub.s32 1, %s4
  %s7 = scalar_select 0, %s6, %s4
  $region1: #{convstem_forward.8} parent=0
    #allocation3 [shape = 'u8[65536]{0}', space=vmem, size = 0x10000, scoped, tag = 'input window, operand 0']
    #allocation4 [shape = 's32[2]{0}', space=sflag, size = 0x8, scoped, tag = 'scoped memory for convstem_forward.8']
    #allocation5 [shape = 's32[2]{0}', space=sflag, size = 0x8, scoped, tag = 'scoped memory for convstem_forward.8']
    #allocation6 [shape = 'u8[65536]{0}', space=vmem, size = 0x10000, scoped, tag = 'input window, operand 1']
    #allocation7 [shape = 's32[2]{0}', space=sflag, size = 0x8, scoped, tag = 'scoped memory for convstem_forward.8']
    #allocation8 [shape = 'u8[512]{0}', space=vmem, size = 0x400, scoped, tag = 'input window, operand 2, single buffered']
    #allocation9 [shape = 'u8[32768]{0}', space=vmem, size = 0x8000, scoped, tag = 'output window, operand 0, single buffered']
    %8 = vsyncpa [#allocation4], 0
    %s9 = scalar_lea.sflag [#allocation4], 1
    %10 = vsyncpa %s9, 0
    %11 = vsyncpa [#allocation7], 0
    %s12 = scalar_lea.sflag [#allocation7], 1
    %13 = vsyncpa %s12, 0
    %14 = vsyncpa [#allocation5], 0
    loop: start=0, step=1, limit=5
    $region2: #{convstem_forward.8} parent=1 // loop_pre_header
      _
    $region3: #{convstem_forward.8} parent=1 // loop_header
      %s16 = sphi 0, %s20
      %p17 = scmp.ge.s32.totalorder %s16, 5
      %s23 = sphi 0, %s42
      %s24 = sphi 0, %s38
      %s25 = sphi 0, %s34
      %s26 = sphi 0, %s23
      %s27 = sphi 0, %s24
      %s28 = sphi 0, %s25
      %s29 = sphi 0, %s26
      %s30 = sphi 0, %s27
      %s31 = sphi 0, %s28
      %s47 = sphi 0, %s49
      %s50 = sphi 0, %s47
      %s51 = sphi 0, %s50
      %s67 = sphi 0, %s51
      %s75 = sphi 0, %s77
      %s78 = sphi 0, %s75
      %s79 = sphi 0, %s78
      %s95 = sphi 0, %s79
      %s101 = sphi 0, %s103
      %s104 = sphi 0, %s101
      %s105 = sphi 0, %s104
      %s121 = sphi 0, %s105
      %s129 = sphi 0, %s131
      %s132 = sphi 0, %s129
      %s133 = sphi 0, %s132
      %s149 = sphi 0, %s133
    $region4: #{convstem_forward.8} parent=1 // loop_header_branch
      %19 = sbr.rel (%p17) target = $region8
    $region5: #{convstem_forward.8} parent=1 // loop_body
      %s21 = ssub.s32 %s16, 1
      %s22 = ssub.s32 %s16, 2
      %s32 = sadd.s32 1, %s25
      %p33 = scmp.ge.s32.totalorder %s32, 3
      %s34 = scalar_select %p33, 0, %s32
      %s35 = sadd.s32 1, %s24
      %s36 = scalar_select %p33, %s35, %s24
      %p37 = scmp.ge.s32.totalorder %s36, 1
      %s38 = scalar_select %p37, 0, %s36
      %s39 = sadd.s32 1, %s23
      %s40 = scalar_select %p37, %s39, %s23
      %p41 = scmp.ge.s32.totalorder %s40, 1
      %s42 = scalar_select %p41, 0, %s40
      %s43 = ssub.s32 %s23, %s42
      %s44 = ssub.s32 %s25, %s34
      %s45 = sor.u32 %s43, %s44
      %p46 = scmp.eq.s32.totalorder %s45, 0
      %s48 = sadd.s32 %s47, 1
      %s49 = scalar_select %p46, %s47, %s48
      %p52 = pneg %p46
      %p53 = scmp.eq.s32.totalorder %s16, 2
      %p54 = por %p52, %p53
      %p55 = scmp.ne.s32.totalorder %s47, %s50
      %p56 = scmp.eq.s32.totalorder %s16, 0
      %p57 = por %p55, %p56
      %p58 = scmp.ne.s32.totalorder %s47, %s50
      %p59 = scmp.eq.s32.totalorder %s21, 2
      %p60 = por %p58, %p59
      %p61 = scmp.ne.s32.totalorder %s50, %s51
      %p62 = scmp.eq.s32.totalorder %s21, 0
      %p63 = por %p61, %p62
      %p64 = scmp.ne.s32.totalorder %s50, %s51
      %p65 = scmp.eq.s32.totalorder %s22, 2
      %p66 = por %p64, %p65
      %p68 = scmp.ne.s32.totalorder %s51, %s67
      %p69 = scmp.eq.s32.totalorder %s22, 0
      %p70 = por %p68, %p69
      %s71 = ssub.s32 %s25, %s34
      %s72 = ssub.s32 %s24, %s38
      %s73 = sor.u32 %s71, %s72
      %p74 = scmp.eq.s32.totalorder %s73, 0
      %s76 = sadd.s32 %s75, 1
      %s77 = scalar_select %p74, %s75, %s76
      %p80 = pneg %p74
      %p81 = scmp.eq.s32.totalorder %s16, 2
      %p82 = por %p80, %p81
      %p83 = scmp.ne.s32.totalorder %s75, %s78
      %p84 = scmp.eq.s32.totalorder %s16, 0
      %p85 = por %p83, %p84
      %p86 = scmp.ne.s32.totalorder %s75, %s78
      %p87 = scmp.eq.s32.totalorder %s21, 2
      %p88 = por %p86, %p87
      %p89 = scmp.ne.s32.totalorder %s78, %s79
      %p90 = scmp.eq.s32.totalorder %s21, 0
      %p91 = por %p89, %p90
      %p92 = scmp.ne.s32.totalorder %s78, %s79
      %p93 = scmp.eq.s32.totalorder %s22, 2
      %p94 = por %p92, %p93
      %p96 = scmp.ne.s32.totalorder %s79, %s95
      %p97 = scmp.eq.s32.totalorder %s22, 0
      %p98 = por %p96, %p97
      %s99 = ssub.s32 %s24, %s38
      %p100 = scmp.eq.s32.totalorder %s99, 0
      %s102 = sadd.s32 %s101, 1
      %s103 = scalar_select %p100, %s101, %s102
      %p106 = pneg %p100
      %p107 = scmp.eq.s32.totalorder %s16, 2
      %p108 = por %p106, %p107
      %p109 = scmp.ne.s32.totalorder %s101, %s104
      %p110 = scmp.eq.s32.totalorder %s16, 0
      %p111 = por %p109, %p110
      %p112 = scmp.ne.s32.totalorder %s101, %s104
      %p113 = scmp.eq.s32.totalorder %s21, 2
      %p114 = por %p112, %p113
      %p115 = scmp.ne.s32.totalorder %s104, %s105
      %p116 = scmp.eq.s32.totalorder %s21, 0
      %p117 = por %p115, %p116
      %p118 = scmp.ne.s32.totalorder %s104, %s105
      %p119 = scmp.eq.s32.totalorder %s22, 2
      %p120 = por %p118, %p119
      %p122 = scmp.ne.s32.totalorder %s105, %s121
      %p123 = scmp.eq.s32.totalorder %s22, 0
      %p124 = por %p122, %p123
      %s125 = ssub.s32 %s23, %s42
      %s126 = ssub.s32 %s24, %s38
      %s127 = sor.u32 %s125, %s126
      %p128 = scmp.eq.s32.totalorder %s127, 0
      %s130 = sadd.s32 %s129, 1
      %s131 = scalar_select %p128, %s129, %s130
      %p134 = pneg %p128
      %p135 = scmp.eq.s32.totalorder %s16, 2
      %p136 = por %p134, %p135
      %p137 = scmp.ne.s32.totalorder %s129, %s132
      %p138 = scmp.eq.s32.totalorder %s16, 0
      %p139 = por %p137, %p138
      %p140 = scmp.ne.s32.totalorder %s129, %s132
      %p141 = scmp.eq.s32.totalorder %s21, 2
      %p142 = por %p140, %p141
      %p143 = scmp.ne.s32.totalorder %s132, %s133
      %p144 = scmp.eq.s32.totalorder %s21, 0
      %p145 = por %p143, %p144
      %p146 = scmp.ne.s32.totalorder %s132, %s133
      %p147 = scmp.eq.s32.totalorder %s22, 2
      %p148 = por %p146, %p147
      %p150 = scmp.ne.s32.totalorder %s133, %s149
      %p151 = scmp.eq.s32.totalorder %s22, 0
      %p152 = por %p150, %p151
      %p153 = scmp.le.s32.totalorder 1, %s16
      %p154 = scmp.lt.s32.totalorder %s16, 4
      %p155 = pnand %p153, %p154
      %p156 = pneg %p155
      // Predicated region
      $region9: #{convstem_forward.8} parent=5 // pred_check
        _
      $region10: #{convstem_forward.8} parent=5 // pred_check_branch
        %158 = sbr.rel (%p155) target = $region12
      $region11: #{convstem_forward.8} parent=5 // pred_region
        %s159 = ssub.s32 %s16, 1
        // Predicated region
        $region13: #{convstem_forward.8} parent=11 // pred_check
          %p160 = pneg %p117
        $region14: #{convstem_forward.8} parent=11 // pred_check_branch
          %162 = sbr.rel (%p160) target = $region16
        $region15: #{convstem_forward.8} parent=11 // pred_region
          %s164 = ssub.s32 16, 16
          %165 = vsyncadd [#allocation7], %s164
          %s166 = smul.addr %s27, 16
          %s167 = scalar_lea.hbm %s2, %s166
          %s169 = sshll.u32 [#allocation8], 4
          %s170 = int_to_ptr.vmem [resolvable:$true] %s169
          %172 = dma.hbm_to_vmem [thread:$0]  %s167, 16, %s170, [#allocation7]
        $region16: #{convstem_forward.8} parent=11 // pred_fallthru
          _
      $region12: #{convstem_forward.8} parent=5 // pred_fallthru
        _
      %p173 = scmp.lt.s32.totalorder %s16, 3
      // Predicated region
      $region17: #{convstem_forward.8} parent=5 // pred_check
        %p174 = pneg %p173
      $region18: #{convstem_forward.8} parent=5 // pred_check_branch
        %176 = sbr.rel (%p174) target = $region20
      $region19: #{convstem_forward.8} parent=5 // pred_region
        // Predicated region
        $region21: #{convstem_forward.8} parent=19 // pred_check
          %p177 = pneg %p57
        $region22: #{convstem_forward.8} parent=19 // pred_check_branch
          %179 = sbr.rel (%p177) target = $region24
        $region23: #{convstem_forward.8} parent=19 // pred_region
          %s180 = sand.u32 %s47, 1
          %s181 = scalar_lea.sflag [#allocation4], %s180
          %s182 = sand.u32 %s47, 1
          %s183 = smul.addr %s182, 64
          %s184 = scalar_lea.vmem [#allocation3], %s183
          %s185 = smul.u32 16, %s23
          %s187 = ssub.s32 1024, 1024
          %188 = vsyncadd %s181, %s187
          %s189 = smul.addr %s185, 3
          %s190 = sadd.s32 %s25, %s189
          %s191 = smul.addr %s190, 64
          %s192 = scalar_lea.hbm %s0, %s191
          %s193 = sshll.u32 %s184, 4
          %s194 = int_to_ptr.vmem [resolvable:$true] %s193
          %199 = dma.hbm_to_vmem [thread:$0]  %s192, 1024, %s194, %s181, 192, 64, 4
        $region24: #{convstem_forward.8} parent=19 // pred_fallthru
          _
        // Predicated region
        $region25: #{convstem_forward.8} parent=19 // pred_check
          %p200 = pneg %p85
        $region26: #{convstem_forward.8} parent=19 // pred_check_branch
          %202 = sbr.rel (%p200) target = $region28
        $region27: #{convstem_forward.8} parent=19 // pred_region
          %s203 = sand.u32 %s16, 1
          %s204 = scalar_lea.sflag [#allocation7], %s203
          %s205 = sand.u32 %s75, 1
          %s206 = smul.addr %s205, 64
          %s207 = scalar_lea.vmem [#allocation6], %s206
          %s208 = smul.u32 16, %s25
          %s210 = ssub.s32 1024, 1024
          %211 = vsyncadd %s204, %s210
          %s212 = sadd.s32 %s24, %s208
          %s213 = smul.addr %s212, 64
          %s214 = scalar_lea.hbm %s1, %s213
          %s215 = sshll.u32 %s207, 4
          %s216 = int_to_ptr.vmem [resolvable:$true] %s215
          %221 = dma.hbm_to_vmem [thread:$0]  %s214, 1024, %s216, %s204, 64, 64, 4
        $region28: #{convstem_forward.8} parent=19 // pred_fallthru
          _
      $region20: #{convstem_forward.8} parent=5 // pred_fallthru
        _
      %p222 = scmp.le.s32.totalorder 1, %s16
      %p223 = scmp.lt.s32.totalorder %s16, 4
      %p224 = pnand %p222, %p223
      %p225 = pneg %p224
      // Predicated region
      $region29: #{convstem_forward.8} parent=5 // pred_check
        _
      $region30: #{convstem_forward.8} parent=5 // pred_check_branch
        %227 = sbr.rel (%p224) target = $region32
      $region31: #{convstem_forward.8} parent=5 // pred_region
        %s228 = ssub.s32 %s16, 1
        %s229 = sand.u32 %s50, 1
        %s230 = scalar_lea.sflag [#allocation4], %s229
        %s231 = sand.u32 %s50, 1
        %s232 = smul.addr %s231, 64
        %s233 = scalar_lea.vmem [#allocation3], %s232
        // Predicated region
        $region33: #{convstem_forward.8} parent=31 // pred_check
          %p234 = pneg %p63
        $region34: #{convstem_forward.8} parent=31 // pred_check_branch
          %236 = sbr.rel (%p234) target = $region36
        $region35: #{convstem_forward.8} parent=31 // pred_region
          %237 = dma.done %s230, 1024
        $region36: #{convstem_forward.8} parent=31 // pred_fallthru
          _
        %s238 = sand.u32 %s21, 1
        %s239 = scalar_lea.sflag [#allocation7], %s238
        %s240 = sand.u32 %s78, 1
        %s241 = smul.addr %s240, 64
        %s242 = scalar_lea.vmem [#allocation6], %s241
        // Predicated region
        $region37: #{convstem_forward.8} parent=31 // pred_check
          %p243 = pneg %p91
        $region38: #{convstem_forward.8} parent=31 // pred_check_branch
          %245 = sbr.rel (%p243) target = $region40
        $region39: #{convstem_forward.8} parent=31 // pred_region
          %246 = dma.done %s239, 1024
        $region40: #{convstem_forward.8} parent=31 // pred_fallthru
          _
        // Predicated region
        $region41: #{convstem_forward.8} parent=31 // pred_check
          %p247 = pneg %p117
        $region42: #{convstem_forward.8} parent=31 // pred_check_branch
          %249 = sbr.rel (%p247) target = $region44
        $region43: #{convstem_forward.8} parent=31 // pred_region
          %250 = dma.done [#allocation7], 16
        $region44: #{convstem_forward.8} parent=31 // pred_fallthru
          _
        %s251 = sand.u32 %s50, 1
        %s252 = scalar_lea.sflag [#allocation4], %s251
        %s253 = sand.u32 %s50, 1
        %s254 = smul.addr %s253, 64
        %s255 = scalar_lea.vmem [#allocation3], %s254
        %p256 = pneg %p63
        %p257 = pneg %p60
        %s258 = sand.u32 %s21, 1
        %s259 = scalar_lea.sflag [#allocation7], %s258
        %s260 = sand.u32 %s78, 1
        %s261 = smul.addr %s260, 64
        %s262 = scalar_lea.vmem [#allocation6], %s261
        %p263 = pneg %p91
        %p264 = pneg %p88
        %p265 = pneg %p117
        %p266 = pneg %p114
        %p267 = pneg %p145
        %p268 = pneg %p142
        %s269 = smul.u32 16, %s26
        %s270 = smul.u32 16, %s28
        %s271 = smul.u32 16, %s26
        %p273 = scmp.eq.s32.totalorder %s28, 0
        // Predicated region
        $region45: #{convstem_forward.8} parent=31 // pred_check
          %p274 = pneg %p273
        $region46: #{convstem_forward.8} parent=31 // pred_check_branch
          %276 = sbr.rel (%p274) target = $region48
        $region47: #{convstem_forward.8} parent=31 // pred_region
          %277 = vst [vmem:[#allocation2] sm:$0xff] 0.0
          %278 = vst [vmem:[#allocation2 + $0x8] sm:$0xff] 0.0
          %279 = vst [vmem:[#allocation2 + $0x10] sm:$0xff] 0.0
          %280 = vst [vmem:[#allocation2 + $0x18] sm:$0xff] 0.0
          %281 = vst [vmem:[#allocation2 + $0x20] sm:$0xff] 0.0
          %282 = vst [vmem:[#allocation2 + $0x28] sm:$0xff] 0.0
          %283 = vst [vmem:[#allocation2 + $0x30] sm:$0xff] 0.0
          %284 = vst [vmem:[#allocation2 + $0x38] sm:$0xff] 0.0
          %285 = vst [vmem:[#allocation2 + $0x40] sm:$0xff] 0.0
          %286 = vst [vmem:[#allocation2 + $0x48] sm:$0xff] 0.0
          %287 = vst [vmem:[#allocation2 + $0x50] sm:$0xff] 0.0
          %288 = vst [vmem:[#allocation2 + $0x58] sm:$0xff] 0.0
          %289 = vst [vmem:[#allocation2 + $0x60] sm:$0xff] 0.0
          %290 = vst [vmem:[#allocation2 + $0x68] sm:$0xff] 0.0
          %291 = vst [vmem:[#allocation2 + $0x70] sm:$0xff] 0.0
          %292 = vst [vmem:[#allocation2 + $0x78] sm:$0xff] 0.0
        $region48: #{convstem_forward.8} parent=31 // pred_fallthru
          _
        %v293 = vld [vmem:[#allocation2] sm:$0xff]
        %v294 = vld [vmem:[#allocation2 + $0x8] sm:$0xff]
        %v295 = vld [vmem:[#allocation2 + $0x10] sm:$0xff]
        %v296 = vld [vmem:[#allocation2 + $0x18] sm:$0xff]
        %v297 = vld [vmem:[#allocation2 + $0x20] sm:$0xff]
        %v298 = vld [vmem:[#allocation2 + $0x28] sm:$0xff]
        %v299 = vld [vmem:[#allocation2 + $0x30] sm:$0xff]
        %v300 = vld [vmem:[#allocation2 + $0x38] sm:$0xff]
        %v301 = vld [vmem:[#allocation2 + $0x40] sm:$0xff]
        %v302 = vld [vmem:[#allocation2 + $0x48] sm:$0xff]
        %v303 = vld [vmem:[#allocation2 + $0x50] sm:$0xff]
        %v304 = vld [vmem:[#allocation2 + $0x58] sm:$0xff]
        %v305 = vld [vmem:[#allocation2 + $0x60] sm:$0xff]
        %v306 = vld [vmem:[#allocation2 + $0x68] sm:$0xff]
        %v307 = vld [vmem:[#allocation2 + $0x70] sm:$0xff]
        %v308 = vld [vmem:[#allocation2 + $0x78] sm:$0xff]
        %v309 = vld [vmem:[%s233] sm:$0xf]
        %v310 = vld [vmem:[%s233 + $0x4] sm:$0xf]
        %v311 = vld [vmem:[%s233 + $0x8] sm:$0xf]
        %v312 = vld [vmem:[%s233 + $0xc] sm:$0xf]
        %v313 = vld [vmem:[%s233 + $0x10] sm:$0xf]
        %v314 = vld [vmem:[%s233 + $0x14] sm:$0xf]
        %v315 = vld [vmem:[%s233 + $0x18] sm:$0xf]
        %v316 = vld [vmem:[%s233 + $0x1c] sm:$0xf]
        %v317 = vld [vmem:[%s233 + $0x20] sm:$0xf]
        %v318 = vld [vmem:[%s233 + $0x24] sm:$0xf]
        %v319 = vld [vmem:[%s233 + $0x28] sm:$0xf]
        %v320 = vld [vmem:[%s233 + $0x2c] sm:$0xf]
        %v321 = vld [vmem:[%s233 + $0x30] sm:$0xf]
        %v322 = vld [vmem:[%s233 + $0x34] sm:$0xf]
        %v323 = vld [vmem:[%s233 + $0x38] sm:$0xf]
        %v324 = vld [vmem:[%s233 + $0x3c] sm:$0xf]
        %v325 = vld [vmem:[%s242] sm:$0xf]
        %v326 = vld [vmem:[%s242 + $0x4] sm:$0xf]
        %v327 = vld [vmem:[%s242 + $0x8] sm:$0xf]
        %v328 = vld [vmem:[%s242 + $0xc] sm:$0xf]
        %v329 = vld [vmem:[%s242 + $0x10] sm:$0xf]
        %v330 = vld [vmem:[%s242 + $0x14] sm:$0xf]
        %v331 = vld [vmem:[%s242 + $0x18] sm:$0xf]
        %v332 = vld [vmem:[%s242 + $0x1c] sm:$0xf]
        %v333 = vld [vmem:[%s242 + $0x20] sm:$0xf]
        %v334 = vld [vmem:[%s242 + $0x24] sm:$0xf]
        %v335 = vld [vmem:[%s242 + $0x28] sm:$0xf]
        %v336 = vld [vmem:[%s242 + $0x2c] sm:$0xf]
        %v337 = vld [vmem:[%s242 + $0x30] sm:$0xf]
        %v338 = vld [vmem:[%s242 + $0x34] sm:$0xf]
        %v339 = vld [vmem:[%s242 + $0x38] sm:$0xf]
        %v340 = vld [vmem:[%s242 + $0x3c] sm:$0xf]
        %v357 = vunpack.c.l.b16 %v309
        %v358 = vunpack.c.l.b16 %v310
        %v359 = vunpack.c.l.b16 %v311
        %v360 = vunpack.c.l.b16 %v312
        %v361 = vunpack.c.l.b16 %v313
        %v362 = vunpack.c.l.b16 %v314
        %v363 = vunpack.c.l.b16 %v315
        %v364 = vunpack.c.l.b16 %v316
        %v365 = vunpack.c.l.b16 %v317
        %v366 = vunpack.c.l.b16 %v318
        %v367 = vunpack.c.l.b16 %v319
        %v368 = vunpack.c.l.b16 %v320
        %v369 = vunpack.c.l.b16 %v321
        %v370 = vunpack.c.l.b16 %v322
        %v371 = vunpack.c.l.b16 %v323
        %v372 = vunpack.c.l.b16 %v324
        %v373 = vpack.c.b16 %v358, %v357
        %v374 = vpack.c.b16 %v360, %v359
        %v375 = vpack.c.b16 %v362, %v361
        %v376 = vpack.c.b16 %v364, %v363
        %v377 = vpack.c.b16 %v366, %v365
        %v378 = vpack.c.b16 %v368, %v367
        %v379 = vpack.c.b16 %v370, %v369
        %v380 = vpack.c.b16 %v372, %v371
        %v405 = vunpack.c.l.b16 %v325
        %v406 = vunpack.c.l.b16 %v326
        %v407 = vunpack.c.l.b16 %v327
        %v408 = vunpack.c.l.b16 %v328
        %v409 = vunpack.c.l.b16 %v329
        %v410 = vunpack.c.l.b16 %v330
        %v411 = vunpack.c.l.b16 %v331
        %v412 = vunpack.c.l.b16 %v332
        %v413 = vunpack.c.l.b16 %v333
        %v414 = vunpack.c.l.b16 %v334
        %v415 = vunpack.c.l.b16 %v335
        %v416 = vunpack.c.l.b16 %v336
        %v417 = vunpack.c.l.b16 %v337
        %v418 = vunpack.c.l.b16 %v338
        %v419 = vunpack.c.l.b16 %v339
        %v420 = vunpack.c.l.b16 %v340
        %v421 = vpack.c.b16 %v406, %v405
        %v422 = vpack.c.b16 %v408, %v407
        %v423 = vpack.c.b16 %v410, %v409
        %v424 = vpack.c.b16 %v412, %v411
        %v425 = vpack.c.b16 %v414, %v413
        %v426 = vpack.c.b16 %v416, %v415
        %v427 = vpack.c.b16 %v418, %v417
        %v428 = vpack.c.b16 %v420, %v419
        %437 = vmatprep.subr.bf16.mxu0 0
        %438 = vmatpush1.bf16.msra.mxu0 %v421
        %439 = vmatprep.subr.bf16.mxu0 0
        %440 = vmatpush1.bf16.msra.mxu0 %v422
        %441 = vmatprep.subr.bf16.mxu0 0
        %442 = vmatpush1.bf16.msra.mxu0 %v423
        %443 = vmatprep.subr.bf16.mxu0 0
        %444 = vmatpush1.bf16.msra.mxu0 %v424
        %445 = vmatprep.subr.bf16.mxu0 0
        %446 = vmatpush1.bf16.msra.mxu0 %v425
        %447 = vmatprep.subr.bf16.mxu0 0
        %448 = vmatpush1.bf16.msra.mxu0 %v426
        %449 = vmatprep.subr.bf16.mxu0 0
        %450 = vmatpush1.bf16.msra.mxu0 %v427
        %451 = vmatprep.subr.bf16.mxu0 0
        %452 = vmatpush1.bf16.msra.mxu0 %v428
        %453 = vmatprep.subr.bf16.mxu0 0
        %454 = vmatpush1.bf16.msra.mxu0 0
        %455 = vmatprep.subr.bf16.mxu0 0
        %456 = vmatpush1.bf16.msra.mxu0 0
        %457 = vmatprep.subr.bf16.mxu0 0
        %458 = vmatpush1.bf16.msra.mxu0 0
        %459 = vmatprep.subr.bf16.mxu0 0
        %460 = vmatpush1.bf16.msra.mxu0 0
        %461 = vmatprep.subr.bf16.mxu0 0
        %462 = vmatpush1.bf16.msra.mxu0 0
        %463 = vmatprep.subr.bf16.mxu0 0
        %464 = vmatpush1.bf16.msra.mxu0 0
        %465 = vmatprep.subr.bf16.mxu0 0
        %466 = vmatpush1.bf16.msra.mxu0 0
        %467 = vmatprep.subr.bf16.mxu0 0
        %468 = vmatpush1.bf16.msra.mxu0 0
        %469 = vmatprep.mubr.bf16.mxu0 0
        %470 = vmatmul.mubr.bf16.gmra.mrb[0].mxu0 %v373
        %v471 = vpop.f32.mrb[0].mxu0
        %v472 = vadd.f32 0.0, %v471
        %v473 = vpop.f32.mrb[0].mxu0
        %v474 = vpop.f32.mrb[0].mxu0
        %v475 = vadd.f32 0.0, %v474
        %v476 = vpop.f32.mrb[0].mxu0
        %477 = vmatprep.mubr.bf16.mxu0 0
        %478 = vmatmul.mubr.bf16.gmra.mrb[0].mxu0 %v374
        %v479 = vpop.f32.mrb[0].mxu0
        %v480 = vadd.f32 0.0, %v479
        %v481 = vpop.f32.mrb[0].mxu0
        %v482 = vpop.f32.mrb[0].mxu0
        %v483 = vadd.f32 0.0, %v482
        %v484 = vpop.f32.mrb[0].mxu0
        %485 = vmatprep.mubr.bf16.mxu0 0
        %486 = vmatmul.mubr.bf16.gmra.mrb[0].mxu0 %v375
        %v487 = vpop.f32.mrb[0].mxu0
        %v488 = vadd.f32 0.0, %v487
        %v489 = vpop.f32.mrb[0].mxu0
        %v490 = vpop.f32.mrb[0].mxu0
        %v491 = vadd.f32 0.0, %v490
        %v492 = vpop.f32.mrb[0].mxu0
        %493 = vmatprep.mubr.bf16.mxu0 0
        %494 = vmatmul.mubr.bf16.gmra.mrb[0].mxu0 %v376
        %v495 = vpop.f32.mrb[0].mxu0
        %v496 = vadd.f32 0.0, %v495
        %v497 = vpop.f32.mrb[0].mxu0
        %v498 = vpop.f32.mrb[0].mxu0
        %v499 = vadd.f32 0.0, %v498
        %v500 = vpop.f32.mrb[0].mxu0
        %501 = vmatprep.mubr.bf16.mxu0 0
        %502 = vmatmul.mubr.bf16.gmra.mrb[0].mxu0 %v377
        %v503 = vpop.f32.mrb[0].mxu0
        %v504 = vadd.f32 0.0, %v503
        %v505 = vpop.f32.mrb[0].mxu0
        %v506 = vpop.f32.mrb[0].mxu0
        %v507 = vadd.f32 0.0, %v506
        %v508 = vpop.f32.mrb[0].mxu0
        %509 = vmatprep.mubr.bf16.mxu0 0
        %510 = vmatmul.mubr.bf16.gmra.mrb[0].mxu0 %v378
        %v511 = vpop.f32.mrb[0].mxu0
        %v512 = vadd.f32 0.0, %v511
        %v513 = vpop.f32.mrb[0].mxu0
        %v514 = vpop.f32.mrb[0].mxu0
        %v515 = vadd.f32 0.0, %v514
        %v516 = vpop.f32.mrb[0].mxu0
        %517 = vmatprep.mubr.bf16.mxu0 0
        %518 = vmatmul.mubr.bf16.gmra.mrb[0].mxu0 %v379
        %v519 = vpop.f32.mrb[0].mxu0
        %v520 = vadd.f32 0.0, %v519
        %v521 = vpop.f32.mrb[0].mxu0
        %v522 = vpop.f32.mrb[0].mxu0
        %v523 = vadd.f32 0.0, %v522
        %v524 = vpop.f32.mrb[0].mxu0
        %525 = vmatprep.mubr.bf16.mxu0 0
        %526 = vmatmul.mubr.bf16.gmra.mrb[0].mxu0 %v380
        %v527 = vpop.f32.mrb[0].mxu0
        %v528 = vadd.f32 0.0, %v527
        %v529 = vpop.f32.mrb[0].mxu0
        %v530 = vpop.f32.mrb[0].mxu0
        %v531 = vadd.f32 0.0, %v530
        %v532 = vpop.f32.mrb[0].mxu0
        %533 = vdwg.mxu0
        %v534 = vadd.f32 %v293, %v472
        %v535 = vadd.f32 %v294, %v475
        %v536 = vadd.f32 %v295, %v480
        %v537 = vadd.f32 %v296, %v483
        %v538 = vadd.f32 %v297, %v488
        %v539 = vadd.f32 %v298, %v491
        %v540 = vadd.f32 %v299, %v496
        %v541 = vadd.f32 %v300, %v499
        %v542 = vadd.f32 %v301, %v504
        %v543 = vadd.f32 %v302, %v507
        %v544 = vadd.f32 %v303, %v512
        %v545 = vadd.f32 %v304, %v515
        %v546 = vadd.f32 %v305, %v520
        %v547 = vadd.f32 %v306, %v523
        %v548 = vadd.f32 %v307, %v528
        %v549 = vadd.f32 %v308, %v531
        %550 = vst [vmem:[#allocation2] sm:$0xff] %v534
        %551 = vst [vmem:[#allocation2 + $0x8] sm:$0xff] %v535
        %552 = vst [vmem:[#allocation2 + $0x10] sm:$0xff] %v536
        %553 = vst [vmem:[#allocation2 + $0x18] sm:$0xff] %v537
        %554 = vst [vmem:[#allocation2 + $0x20] sm:$0xff] %v538
        %555 = vst [vmem:[#allocation2 + $0x28] sm:$0xff] %v539
        %556 = vst [vmem:[#allocation2 + $0x30] sm:$0xff] %v540
        %557 = vst [vmem:[#allocation2 + $0x38] sm:$0xff] %v541
        %558 = vst [vmem:[#allocation2 + $0x40] sm:$0xff] %v542
        %559 = vst [vmem:[#allocation2 + $0x48] sm:$0xff] %v543
        %560 = vst [vmem:[#allocation2 + $0x50] sm:$0xff] %v544
        %561 = vst [vmem:[#allocation2 + $0x58] sm:$0xff] %v545
        %562 = vst [vmem:[#allocation2 + $0x60] sm:$0xff] %v546
        %563 = vst [vmem:[#allocation2 + $0x68] sm:$0xff] %v547
        %564 = vst [vmem:[#allocation2 + $0x70] sm:$0xff] %v548
        %565 = vst [vmem:[#allocation2 + $0x78] sm:$0xff] %v549
        %p566 = scmp.eq.s32.totalorder %s28, 2
        // Predicated region
        $region49: #{convstem_forward.8} parent=31 // pred_check
          %p567 = pneg %p566
        $region50: #{convstem_forward.8} parent=31 // pred_check_branch
          %569 = sbr.rel (%p567) target = $region52
        $region51: #{convstem_forward.8} parent=31 // pred_region
          %v570 = vld [vmem:[#allocation2] sm:$0xff]
          %v571 = vld [vmem:[#allocation2 + $0x8] sm:$0xff]
          %v572 = vld [vmem:[#allocation2 + $0x10] sm:$0xff]
          %v573 = vld [vmem:[#allocation2 + $0x18] sm:$0xff]
          %v574 = vld [vmem:[#allocation2 + $0x20] sm:$0xff]
          %v575 = vld [vmem:[#allocation2 + $0x28] sm:$0xff]
          %v576 = vld [vmem:[#allocation2 + $0x30] sm:$0xff]
          %v577 = vld [vmem:[#allocation2 + $0x38] sm:$0xff]
          %v578 = vld [vmem:[#allocation2 + $0x40] sm:$0xff]
          %v579 = vld [vmem:[#allocation2 + $0x48] sm:$0xff]
          %v580 = vld [vmem:[#allocation2 + $0x50] sm:$0xff]
          %v581 = vld [vmem:[#allocation2 + $0x58] sm:$0xff]
          %v582 = vld [vmem:[#allocation2 + $0x60] sm:$0xff]
          %v583 = vld [vmem:[#allocation2 + $0x68] sm:$0xff]
          %v584 = vld [vmem:[#allocation2 + $0x70] sm:$0xff]
          %v585 = vld [vmem:[#allocation2 + $0x78] sm:$0xff]
          %v586 = vld [vmem:[#allocation8] sm:$0x1]
          %v588 = vlaneseq
          %v589 = vshrl.u32 %v588, 7
          %v590 = vsub.s32 0, %v589
          %v591 = vrot.slane %v586, %v590
          %v593 = vadd.f32 %v570, %v591
          %v594 = vadd.f32 %v571, %v591
          %v595 = vadd.f32 %v572, %v591
          %v596 = vadd.f32 %v573, %v591
          %v597 = vadd.f32 %v574, %v591
          %v598 = vadd.f32 %v575, %v591
          %v599 = vadd.f32 %v576, %v591
          %v600 = vadd.f32 %v577, %v591
          %v601 = vadd.f32 %v578, %v591
          %v602 = vadd.f32 %v579, %v591
          %v603 = vadd.f32 %v580, %v591
          %v604 = vadd.f32 %v581, %v591
          %v605 = vadd.f32 %v582, %v591
          %v606 = vadd.f32 %v583, %v591
          %v607 = vadd.f32 %v584, %v591
          %v608 = vadd.f32 %v585, %v591
          %v609 = vmax.f32 %v593, 0.0
          %v610 = vmax.f32 %v594, 0.0
          %v611 = vmax.f32 %v595, 0.0
          %v612 = vmax.f32 %v596, 0.0
          %v613 = vmax.f32 %v597, 0.0
          %v614 = vmax.f32 %v598, 0.0
          %v615 = vmax.f32 %v599, 0.0
          %v616 = vmax.f32 %v600, 0.0
          %v617 = vmax.f32 %v601, 0.0
          %v618 = vmax.f32 %v602, 0.0
          %v619 = vmax.f32 %v603, 0.0
          %v620 = vmax.f32 %v604, 0.0
          %v621 = vmax.f32 %v605, 0.0
          %v622 = vmax.f32 %v606, 0.0
          %v623 = vmax.f32 %v607, 0.0
          %v624 = vmax.f32 %v608, 0.0
          %v625 = vpack.c.bf16 %v610, %v609
          %v626 = vpack.c.bf16 %v612, %v611
          %v627 = vpack.c.bf16 %v614, %v613
          %v628 = vpack.c.bf16 %v616, %v615
          %v629 = vpack.c.bf16 %v618, %v617
          %v630 = vpack.c.bf16 %v620, %v619
          %v631 = vpack.c.bf16 %v622, %v621
          %v632 = vpack.c.bf16 %v624, %v623
          %v641 = vunpack.c.l.b16 %v625
          %v642 = vunpack.c.h.b16 %v625
          %v643 = vunpack.c.l.b16 %v626
          %v644 = vunpack.c.h.b16 %v626
          %v645 = vunpack.c.l.b16 %v627
          %v646 = vunpack.c.h.b16 %v627
          %v647 = vunpack.c.l.b16 %v628
          %v648 = vunpack.c.h.b16 %v628
          %v649 = vunpack.c.l.b16 %v629
          %v650 = vunpack.c.h.b16 %v629
          %v651 = vunpack.c.l.b16 %v630
          %v652 = vunpack.c.h.b16 %v630
          %v653 = vunpack.c.l.b16 %v631
          %v654 = vunpack.c.h.b16 %v631
          %v655 = vunpack.c.l.b16 %v632
          %v656 = vunpack.c.h.b16 %v632
          %v657 = vpack.c.b16 %v641, %v641
          %v658 = vpack.c.b16 %v642, %v642
          %v659 = vpack.c.b16 %v643, %v643
          %v660 = vpack.c.b16 %v644, %v644
          %v661 = vpack.c.b16 %v645, %v645
          %v662 = vpack.c.b16 %v646, %v646
          %v663 = vpack.c.b16 %v647, %v647
          %v664 = vpack.c.b16 %v648, %v648
          %v665 = vpack.c.b16 %v649, %v649
          %v666 = vpack.c.b16 %v650, %v650
          %v667 = vpack.c.b16 %v651, %v651
          %v668 = vpack.c.b16 %v652, %v652
          %v669 = vpack.c.b16 %v653, %v653
          %v670 = vpack.c.b16 %v654, %v654
          %v671 = vpack.c.b16 %v655, %v655
          %v672 = vpack.c.b16 %v656, %v656
          %689 = vst [vmem:[#allocation9] sm:$0xf] %v657
          %690 = vst [vmem:[#allocation9 + $0x4] sm:$0xf] %v658
          %691 = vst [vmem:[#allocation9 + $0x8] sm:$0xf] %v659
          %692 = vst [vmem:[#allocation9 + $0xc] sm:$0xf] %v660
          %693 = vst [vmem:[#allocation9 + $0x10] sm:$0xf] %v661
          %694 = vst [vmem:[#allocation9 + $0x14] sm:$0xf] %v662
          %695 = vst [vmem:[#allocation9 + $0x18] sm:$0xf] %v663
          %696 = vst [vmem:[#allocation9 + $0x1c] sm:$0xf] %v664
          %697 = vst [vmem:[#allocation9 + $0x20] sm:$0xf] %v665
          %698 = vst [vmem:[#allocation9 + $0x24] sm:$0xf] %v666
          %699 = vst [vmem:[#allocation9 + $0x28] sm:$0xf] %v667
          %700 = vst [vmem:[#allocation9 + $0x2c] sm:$0xf] %v668
          %701 = vst [vmem:[#allocation9 + $0x30] sm:$0xf] %v669
          %702 = vst [vmem:[#allocation9 + $0x34] sm:$0xf] %v670
          %703 = vst [vmem:[#allocation9 + $0x38] sm:$0xf] %v671
          %704 = vst [vmem:[#allocation9 + $0x3c] sm:$0xf] %v672
        $region52: #{convstem_forward.8} parent=31 // pred_fallthru
          _
        // Predicated region
        $region53: #{convstem_forward.8} parent=31 // pred_check
          %p705 = pneg %p142
        $region54: #{convstem_forward.8} parent=31 // pred_check_branch
          %707 = sbr.rel (%p705) target = $region56
        $region55: #{convstem_forward.8} parent=31 // pred_region
          %s708 = smul.u32 16, %s26
          %s710 = ssub.s32 1024, 1024
          %711 = vsyncadd [#allocation5], %s710
          %s712 = sadd.s32 %s27, %s708
          %s713 = smul.addr %s712, 64
          %s714 = scalar_lea.hbm %s3, %s713
          %s715 = sshll.u32 [#allocation9], 4
          %s716 = int_to_ptr.vmem [resolvable:$true] %s715
          %721 = dma.vmem_to_hbm [thread:$0]  %s716, 1024, %s714, [#allocation5], 64, 64, 4
        $region56: #{convstem_forward.8} parent=31 // pred_fallthru
          _
        // Predicated region
        $region57: #{convstem_forward.8} parent=31 // pred_check
          %p722 = pneg %p142
        $region58: #{convstem_forward.8} parent=31 // pred_check_branch
          %724 = sbr.rel (%p722) target = $region60
        $region59: #{convstem_forward.8} parent=31 // pred_region
          %725 = dma.done [#allocation5], 1024
        $region60: #{convstem_forward.8} parent=31 // pred_fallthru
          _
      $region32: #{convstem_forward.8} parent=5 // pred_fallthru
        _
      %p726 = scmp.le.s32.totalorder 2, %s16
      // Predicated region
      $region61: #{convstem_forward.8} parent=5 // pred_check
        %p727 = pneg %p726
      $region62: #{convstem_forward.8} parent=5 // pred_check_branch
        %729 = sbr.rel (%p727) target = $region64
      $region63: #{convstem_forward.8} parent=5 // pred_region
        %s730 = ssub.s32 %s16, 2
      $region64: #{convstem_forward.8} parent=5 // pred_fallthru
        _
    $region6: #{convstem_forward.8} parent=1 // loop_footer
      %s20 = sadd.s32 1, %s16
    $region7: #{convstem_forward.8} parent=1 // loop_footer_branch
      %15 = sbr.rel target = $region3
    $region8: #{convstem_forward.8} parent=1 // loop_exit
      _
    %731 = vsyncpa [#allocation4], 1
    %s732 = scalar_lea.sflag [#allocation4], 1
    %733 = vsyncpa %s732, 1
    %734 = vsyncpa [#allocation7], 1
    %s735 = scalar_lea.sflag [#allocation7], 1
    %736 = vsyncpa %s735, 1
    %737 = vsyncpa [#allocation5], 1
    %s738 = scalar_lea.sflag [#allocation5], 1
    %739 = vsyncpa %s738, 1

// kernel: convstem_forward.9
$region0: #{convstem_forward.9}
  #allocation0 [shape = 'u32[]', space=smem, size = 0x4, offset = 0x4, fixed_abs, tag = 'smem constant byte address 0x4 - core index']
  #allocation1 [shape = 'u32[144,128]{1,0:T(1,128)}', space=vmem, size = 0x12000, scoped, tag = 'internal scratch']
  #allocation2 [shape = 'f32[128,128]{1,0:T(8,128)}', space=vmem, size = 0x10000, scoped, tag = 'scratch operand']
  %s0 = inlined_call_operand.hbm [shape: bf16[128,128], index: 0, kind: input, shape index: {}]
  %s1 = inlined_call_operand.hbm [shape: bf16[128,128], index: 1, kind: input, shape index: {}]
  %s2 = inlined_call_operand.hbm [shape: f32[1,128], index: 2, kind: input, shape index: {}]
  %s3 = inlined_call_operand.hbm [shape: f32[128,128], index: 3, kind: output, shape index: {}]
  %s4 = sld [smem:[#allocation0]]
  $region42: #{convstem_forward.9} parent=0
    _
  %s6 = ssub.s32 1, %s4
  %s7 = scalar_select 0, %s6, %s4
  $region1: #{convstem_forward.9} parent=0
    #allocation3 [shape = 'u8[32768]{0}', space=vmem, size = 0x8000, scoped, tag = 'input window, operand 0, single buffered']
    #allocation4 [shape = 's32[1]{0}', space=sflag, size = 0x4, scoped, tag = 'scoped memory for convstem_forward.9']
    #allocation5 [shape = 's32[1]{0}', space=sflag, size = 0x4, scoped, tag = 'scoped memory for convstem_forward.9']
    #allocation6 [shape = 'u8[32768]{0}', space=vmem, size = 0x8000, scoped, tag = 'input window, operand 1, single buffered']
    #allocation7 [shape = 's32[1]{0}', space=sflag, size = 0x4, scoped, tag = 'scoped memory for convstem_forward.9']
    #allocation8 [shape = 'u8[512]{0}', space=vmem, size = 0x400, scoped, tag = 'input window, operand 2, single buffered']
    #allocation9 [shape = 'u8[65536]{0}', space=vmem, size = 0x10000, scoped, tag = 'output window, operand 0, single buffered']
    %8 = vsyncpa [#allocation4], 0
    %9 = vsyncpa [#allocation7], 0
    %10 = vsyncpa [#allocation5], 0
    // Predicated region
    $region2: #{convstem_forward.9} parent=1 // pred_check
      _
    $region3: #{convstem_forward.9} parent=1 // pred_check_branch
      %12 = sbr.rel (0) target = $region5
    $region4: #{convstem_forward.9} parent=1 // pred_region
      %s14 = ssub.s32 1024, 1024
      %15 = vsyncadd [#allocation4], %s14
      %s16 = sshll.u32 [#allocation3], 4
      %s17 = int_to_ptr.vmem [resolvable:$true] %s16
      %22 = dma.hbm_to_vmem [thread:$0]  %s0, 1024, %s17, [#allocation4], 64, 64, 4
    $region5: #{convstem_forward.9} parent=1 // pred_fallthru
      _
    // Predicated region
    $region6: #{convstem_forward.9} parent=1 // pred_check
      _
    $region7: #{convstem_forward.9} parent=1 // pred_check_branch
      %24 = sbr.rel (0) target = $region9
    $region8: #{convstem_forward.9} parent=1 // pred_region
      %s26 = ssub.s32 1024, 1024
      %27 = vsyncadd [#allocation7], %s26
      %s28 = sshll.u32 [#allocation6], 4
      %s29 = int_to_ptr.vmem [resolvable:$true] %s28
      %34 = dma.hbm_to_vmem [thread:$0]  %s1, 1024, %s29, [#allocation7], 64, 64, 4
    $region9: #{convstem_forward.9} parent=1 // pred_fallthru
      _
    // Predicated region
    $region10: #{convstem_forward.9} parent=1 // pred_check
      _
    $region11: #{convstem_forward.9} parent=1 // pred_check_branch
      %36 = sbr.rel (0) target = $region13
    $region12: #{convstem_forward.9} parent=1 // pred_region
      %s38 = ssub.s32 16, 16
      %39 = vsyncadd [#allocation7], %s38
      %s41 = sshll.u32 [#allocation8], 4
      %s42 = int_to_ptr.vmem [resolvable:$true] %s41
      %44 = dma.hbm_to_vmem [thread:$0]  %s2, 16, %s42, [#allocation7]
    $region13: #{convstem_forward.9} parent=1 // pred_fallthru
      _
    // Predicated region
    $region14: #{convstem_forward.9} parent=1 // pred_check
      _
    $region15: #{convstem_forward.9} parent=1 // pred_check_branch
      %46 = sbr.rel (0) target = $region17
    $region16: #{convstem_forward.9} parent=1 // pred_region
      %47 = dma.done [#allocation4], 1024
    $region17: #{convstem_forward.9} parent=1 // pred_fallthru
      _
    // Predicated region
    $region18: #{convstem_forward.9} parent=1 // pred_check
      _
    $region19: #{convstem_forward.9} parent=1 // pred_check_branch
      %49 = sbr.rel (0) target = $region21
    $region20: #{convstem_forward.9} parent=1 // pred_region
      %50 = dma.done [#allocation7], 1024
    $region21: #{convstem_forward.9} parent=1 // pred_fallthru
      _
    // Predicated region
    $region22: #{convstem_forward.9} parent=1 // pred_check
      _
    $region23: #{convstem_forward.9} parent=1 // pred_check_branch
      %52 = sbr.rel (0) target = $region25
    $region24: #{convstem_forward.9} parent=1 // pred_region
      %53 = dma.done [#allocation7], 16
    $region25: #{convstem_forward.9} parent=1 // pred_fallthru
      _
    %p55 = scmp.eq.s32.totalorder 0, 0
    // Predicated region
    $region26: #{convstem_forward.9} parent=1 // pred_check
      %p56 = pneg %p55
    $region27: #{convstem_forward.9} parent=1 // pred_check_branch
      %58 = sbr.rel (%p56) target = $region29
    $region28: #{convstem_forward.9} parent=1 // pred_region
      %59 = vst [vmem:[#allocation2] sm:$0xff] 0.0
      %60 = vst [vmem:[#allocation2 + $0x8] sm:$0xff] 0.0
      %61 = vst [vmem:[#allocation2 + $0x10] sm:$0xff] 0.0
      %62 = vst [vmem:[#allocation2 + $0x18] sm:$0xff] 0.0
      %63 = vst [vmem:[#allocation2 + $0x20] sm:$0xff] 0.0
      %64 = vst [vmem:[#allocation2 + $0x28] sm:$0xff] 0.0
      %65 = vst [vmem:[#allocation2 + $0x30] sm:$0xff] 0.0
      %66 = vst [vmem:[#allocation2 + $0x38] sm:$0xff] 0.0
      %67 = vst [vmem:[#allocation2 + $0x40] sm:$0xff] 0.0
      %68 = vst [vmem:[#allocation2 + $0x48] sm:$0xff] 0.0
      %69 = vst [vmem:[#allocation2 + $0x50] sm:$0xff] 0.0
      %70 = vst [vmem:[#allocation2 + $0x58] sm:$0xff] 0.0
      %71 = vst [vmem:[#allocation2 + $0x60] sm:$0xff] 0.0
      %72 = vst [vmem:[#allocation2 + $0x68] sm:$0xff] 0.0
      %73 = vst [vmem:[#allocation2 + $0x70] sm:$0xff] 0.0
      %74 = vst [vmem:[#allocation2 + $0x78] sm:$0xff] 0.0
    $region29: #{convstem_forward.9} parent=1 // pred_fallthru
      _
    %v75 = vld [vmem:[#allocation2] sm:$0xff]
    %v76 = vld [vmem:[#allocation2 + $0x8] sm:$0xff]
    %v77 = vld [vmem:[#allocation2 + $0x10] sm:$0xff]
    %v78 = vld [vmem:[#allocation2 + $0x18] sm:$0xff]
    %v79 = vld [vmem:[#allocation2 + $0x20] sm:$0xff]
    %v80 = vld [vmem:[#allocation2 + $0x28] sm:$0xff]
    %v81 = vld [vmem:[#allocation2 + $0x30] sm:$0xff]
    %v82 = vld [vmem:[#allocation2 + $0x38] sm:$0xff]
    %v83 = vld [vmem:[#allocation2 + $0x40] sm:$0xff]
    %v84 = vld [vmem:[#allocation2 + $0x48] sm:$0xff]
    %v85 = vld [vmem:[#allocation2 + $0x50] sm:$0xff]
    %v86 = vld [vmem:[#allocation2 + $0x58] sm:$0xff]
    %v87 = vld [vmem:[#allocation2 + $0x60] sm:$0xff]
    %v88 = vld [vmem:[#allocation2 + $0x68] sm:$0xff]
    %v89 = vld [vmem:[#allocation2 + $0x70] sm:$0xff]
    %v90 = vld [vmem:[#allocation2 + $0x78] sm:$0xff]
    %v91 = vld [vmem:[#allocation3] sm:$0xf]
    %v92 = vld [vmem:[#allocation3 + $0x4] sm:$0xf]
    %v93 = vld [vmem:[#allocation3 + $0x8] sm:$0xf]
    %v94 = vld [vmem:[#allocation3 + $0xc] sm:$0xf]
    %v95 = vld [vmem:[#allocation3 + $0x10] sm:$0xf]
    %v96 = vld [vmem:[#allocation3 + $0x14] sm:$0xf]
    %v97 = vld [vmem:[#allocation3 + $0x18] sm:$0xf]
    %v98 = vld [vmem:[#allocation3 + $0x1c] sm:$0xf]
    %v99 = vld [vmem:[#allocation3 + $0x20] sm:$0xf]
    %v100 = vld [vmem:[#allocation3 + $0x24] sm:$0xf]
    %v101 = vld [vmem:[#allocation3 + $0x28] sm:$0xf]
    %v102 = vld [vmem:[#allocation3 + $0x2c] sm:$0xf]
    %v103 = vld [vmem:[#allocation3 + $0x30] sm:$0xf]
    %v104 = vld [vmem:[#allocation3 + $0x34] sm:$0xf]
    %v105 = vld [vmem:[#allocation3 + $0x38] sm:$0xf]
    %v106 = vld [vmem:[#allocation3 + $0x3c] sm:$0xf]
    %v107 = vld [vmem:[#allocation6] sm:$0xf]
    %v108 = vld [vmem:[#allocation6 + $0x4] sm:$0xf]
    %v109 = vld [vmem:[#allocation6 + $0x8] sm:$0xf]
    %v110 = vld [vmem:[#allocation6 + $0xc] sm:$0xf]
    %v111 = vld [vmem:[#allocation6 + $0x10] sm:$0xf]
    %v112 = vld [vmem:[#allocation6 + $0x14] sm:$0xf]
    %v113 = vld [vmem:[#allocation6 + $0x18] sm:$0xf]
    %v114 = vld [vmem:[#allocation6 + $0x1c] sm:$0xf]
    %v115 = vld [vmem:[#allocation6 + $0x20] sm:$0xf]
    %v116 = vld [vmem:[#allocation6 + $0x24] sm:$0xf]
    %v117 = vld [vmem:[#allocation6 + $0x28] sm:$0xf]
    %v118 = vld [vmem:[#allocation6 + $0x2c] sm:$0xf]
    %v119 = vld [vmem:[#allocation6 + $0x30] sm:$0xf]
    %v120 = vld [vmem:[#allocation6 + $0x34] sm:$0xf]
    %v121 = vld [vmem:[#allocation6 + $0x38] sm:$0xf]
    %v122 = vld [vmem:[#allocation6 + $0x3c] sm:$0xf]
    %v139 = vunpack.c.l.b16 %v91
    %v140 = vunpack.c.l.b16 %v92
    %v141 = vunpack.c.l.b16 %v93
    %v142 = vunpack.c.l.b16 %v94
    %v143 = vunpack.c.l.b16 %v95
    %v144 = vunpack.c.l.b16 %v96
    %v145 = vunpack.c.l.b16 %v97
    %v146 = vunpack.c.l.b16 %v98
    %v147 = vunpack.c.l.b16 %v99
    %v148 = vunpack.c.l.b16 %v100
    %v149 = vunpack.c.l.b16 %v101
    %v150 = vunpack.c.l.b16 %v102
    %v151 = vunpack.c.l.b16 %v103
    %v152 = vunpack.c.l.b16 %v104
    %v153 = vunpack.c.l.b16 %v105
    %v154 = vunpack.c.l.b16 %v106
    %v155 = vpack.c.b16 %v140, %v139
    %v156 = vpack.c.b16 %v142, %v141
    %v157 = vpack.c.b16 %v144, %v143
    %v158 = vpack.c.b16 %v146, %v145
    %v159 = vpack.c.b16 %v148, %v147
    %v160 = vpack.c.b16 %v150, %v149
    %v161 = vpack.c.b16 %v152, %v151
    %v162 = vpack.c.b16 %v154, %v153
    %v187 = vunpack.c.l.b16 %v107
    %v188 = vunpack.c.l.b16 %v108
    %v189 = vunpack.c.l.b16 %v109
    %v190 = vunpack.c.l.b16 %v110
    %v191 = vunpack.c.l.b16 %v111
    %v192 = vunpack.c.l.b16 %v112
    %v193 = vunpack.c.l.b16 %v113
    %v194 = vunpack.c.l.b16 %v114
    %v195 = vunpack.c.l.b16 %v115
    %v196 = vunpack.c.l.b16 %v116
    %v197 = vunpack.c.l.b16 %v117
    %v198 = vunpack.c.l.b16 %v118
    %v199 = vunpack.c.l.b16 %v119
    %v200 = vunpack.c.l.b16 %v120
    %v201 = vunpack.c.l.b16 %v121
    %v202 = vunpack.c.l.b16 %v122
    %v203 = vpack.c.b16 %v188, %v187
    %v204 = vpack.c.b16 %v190, %v189
    %v205 = vpack.c.b16 %v192, %v191
    %v206 = vpack.c.b16 %v194, %v193
    %v207 = vpack.c.b16 %v196, %v195
    %v208 = vpack.c.b16 %v198, %v197
    %v209 = vpack.c.b16 %v200, %v199
    %v210 = vpack.c.b16 %v202, %v201
    %219 = vmatprep.subr.bf16.mxu0 0
    %220 = vmatpush1.bf16.msra.mxu0 %v203
    %221 = vmatprep.subr.bf16.mxu0 0
    %222 = vmatpush1.bf16.msra.mxu0 %v204
    %223 = vmatprep.subr.bf16.mxu0 0
    %224 = vmatpush1.bf16.msra.mxu0 %v205
    %225 = vmatprep.subr.bf16.mxu0 0
    %226 = vmatpush1.bf16.msra.mxu0 %v206
    %227 = vmatprep.subr.bf16.mxu0 0
    %228 = vmatpush1.bf16.msra.mxu0 %v207
    %229 = vmatprep.subr.bf16.mxu0 0
    %230 = vmatpush1.bf16.msra.mxu0 %v208
    %231 = vmatprep.subr.bf16.mxu0 0
    %232 = vmatpush1.bf16.msra.mxu0 %v209
    %233 = vmatprep.subr.bf16.mxu0 0
    %234 = vmatpush1.bf16.msra.mxu0 %v210
    %235 = vmatprep.subr.bf16.mxu0 0
    %236 = vmatpush1.bf16.msra.mxu0 0
    %237 = vmatprep.subr.bf16.mxu0 0
    %238 = vmatpush1.bf16.msra.mxu0 0
    %239 = vmatprep.subr.bf16.mxu0 0
    %240 = vmatpush1.bf16.msra.mxu0 0
    %241 = vmatprep.subr.bf16.mxu0 0
    %242 = vmatpush1.bf16.msra.mxu0 0
    %243 = vmatprep.subr.bf16.mxu0 0
    %244 = vmatpush1.bf16.msra.mxu0 0
    %245 = vmatprep.subr.bf16.mxu0 0
    %246 = vmatpush1.bf16.msra.mxu0 0
    %247 = vmatprep.subr.bf16.mxu0 0
    %248 = vmatpush1.bf16.msra.mxu0 0
    %249 = vmatprep.subr.bf16.mxu0 0
    %250 = vmatpush1.bf16.msra.mxu0 0
    %251 = vmatprep.mubr.bf16.mxu0 0
    %252 = vmatmul.mubr.bf16.gmra.mrb[0].mxu0 %v155
    %v253 = vpop.f32.mrb[0].mxu0
    %v254 = vadd.f32 0.0, %v253
    %v255 = vpop.f32.mrb[0].mxu0
    %v256 = vpop.f32.mrb[0].mxu0
    %v257 = vadd.f32 0.0, %v256
    %v258 = vpop.f32.mrb[0].mxu0
    %259 = vmatprep.mubr.bf16.mxu0 0
    %260 = vmatmul.mubr.bf16.gmra.mrb[0].mxu0 %v156
    %v261 = vpop.f32.mrb[0].mxu0
    %v262 = vadd.f32 0.0, %v261
    %v263 = vpop.f32.mrb[0].mxu0
    %v264 = vpop.f32.mrb[0].mxu0
    %v265 = vadd.f32 0.0, %v264
    %v266 = vpop.f32.mrb[0].mxu0
    %267 = vmatprep.mubr.bf16.mxu0 0
    %268 = vmatmul.mubr.bf16.gmra.mrb[0].mxu0 %v157
    %v269 = vpop.f32.mrb[0].mxu0
    %v270 = vadd.f32 0.0, %v269
    %v271 = vpop.f32.mrb[0].mxu0
    %v272 = vpop.f32.mrb[0].mxu0
    %v273 = vadd.f32 0.0, %v272
    %v274 = vpop.f32.mrb[0].mxu0
    %275 = vmatprep.mubr.bf16.mxu0 0
    %276 = vmatmul.mubr.bf16.gmra.mrb[0].mxu0 %v158
    %v277 = vpop.f32.mrb[0].mxu0
    %v278 = vadd.f32 0.0, %v277
    %v279 = vpop.f32.mrb[0].mxu0
    %v280 = vpop.f32.mrb[0].mxu0
    %v281 = vadd.f32 0.0, %v280
    %v282 = vpop.f32.mrb[0].mxu0
    %283 = vmatprep.mubr.bf16.mxu0 0
    %284 = vmatmul.mubr.bf16.gmra.mrb[0].mxu0 %v159
    %v285 = vpop.f32.mrb[0].mxu0
    %v286 = vadd.f32 0.0, %v285
    %v287 = vpop.f32.mrb[0].mxu0
    %v288 = vpop.f32.mrb[0].mxu0
    %v289 = vadd.f32 0.0, %v288
    %v290 = vpop.f32.mrb[0].mxu0
    %291 = vmatprep.mubr.bf16.mxu0 0
    %292 = vmatmul.mubr.bf16.gmra.mrb[0].mxu0 %v160
    %v293 = vpop.f32.mrb[0].mxu0
    %v294 = vadd.f32 0.0, %v293
    %v295 = vpop.f32.mrb[0].mxu0
    %v296 = vpop.f32.mrb[0].mxu0
    %v297 = vadd.f32 0.0, %v296
    %v298 = vpop.f32.mrb[0].mxu0
    %299 = vmatprep.mubr.bf16.mxu0 0
    %300 = vmatmul.mubr.bf16.gmra.mrb[0].mxu0 %v161
    %v301 = vpop.f32.mrb[0].mxu0
    %v302 = vadd.f32 0.0, %v301
    %v303 = vpop.f32.mrb[0].mxu0
    %v304 = vpop.f32.mrb[0].mxu0
    %v305 = vadd.f32 0.0, %v304
    %v306 = vpop.f32.mrb[0].mxu0
    %307 = vmatprep.mubr.bf16.mxu0 0
    %308 = vmatmul.mubr.bf16.gmra.mrb[0].mxu0 %v162
    %v309 = vpop.f32.mrb[0].mxu0
    %v310 = vadd.f32 0.0, %v309
    %v311 = vpop.f32.mrb[0].mxu0
    %v312 = vpop.f32.mrb[0].mxu0
    %v313 = vadd.f32 0.0, %v312
    %v314 = vpop.f32.mrb[0].mxu0
    %315 = vdwg.mxu0
    %v316 = vadd.f32 %v75, %v254
    %v317 = vadd.f32 %v76, %v257
    %v318 = vadd.f32 %v77, %v262
    %v319 = vadd.f32 %v78, %v265
    %v320 = vadd.f32 %v79, %v270
    %v321 = vadd.f32 %v80, %v273
    %v322 = vadd.f32 %v81, %v278
    %v323 = vadd.f32 %v82, %v281
    %v324 = vadd.f32 %v83, %v286
    %v325 = vadd.f32 %v84, %v289
    %v326 = vadd.f32 %v85, %v294
    %v327 = vadd.f32 %v86, %v297
    %v328 = vadd.f32 %v87, %v302
    %v329 = vadd.f32 %v88, %v305
    %v330 = vadd.f32 %v89, %v310
    %v331 = vadd.f32 %v90, %v313
    %332 = vst [vmem:[#allocation2] sm:$0xff] %v316
    %333 = vst [vmem:[#allocation2 + $0x8] sm:$0xff] %v317
    %334 = vst [vmem:[#allocation2 + $0x10] sm:$0xff] %v318
    %335 = vst [vmem:[#allocation2 + $0x18] sm:$0xff] %v319
    %336 = vst [vmem:[#allocation2 + $0x20] sm:$0xff] %v320
    %337 = vst [vmem:[#allocation2 + $0x28] sm:$0xff] %v321
    %338 = vst [vmem:[#allocation2 + $0x30] sm:$0xff] %v322
    %339 = vst [vmem:[#allocation2 + $0x38] sm:$0xff] %v323
    %340 = vst [vmem:[#allocation2 + $0x40] sm:$0xff] %v324
    %341 = vst [vmem:[#allocation2 + $0x48] sm:$0xff] %v325
    %342 = vst [vmem:[#allocation2 + $0x50] sm:$0xff] %v326
    %343 = vst [vmem:[#allocation2 + $0x58] sm:$0xff] %v327
    %344 = vst [vmem:[#allocation2 + $0x60] sm:$0xff] %v328
    %345 = vst [vmem:[#allocation2 + $0x68] sm:$0xff] %v329
    %346 = vst [vmem:[#allocation2 + $0x70] sm:$0xff] %v330
    %347 = vst [vmem:[#allocation2 + $0x78] sm:$0xff] %v331
    // Predicated region
    $region30: #{convstem_forward.9} parent=1 // pred_check
      %p348 = pneg %p55
    $region31: #{convstem_forward.9} parent=1 // pred_check_branch
      %350 = sbr.rel (%p348) target = $region33
    $region32: #{convstem_forward.9} parent=1 // pred_region
      %v351 = vld [vmem:[#allocation2] sm:$0xff]
      %v352 = vld [vmem:[#allocation2 + $0x8] sm:$0xff]
      %v353 = vld [vmem:[#allocation2 + $0x10] sm:$0xff]
      %v354 = vld [vmem:[#allocation2 + $0x18] sm:$0xff]
      %v355 = vld [vmem:[#allocation2 + $0x20] sm:$0xff]
      %v356 = vld [vmem:[#allocation2 + $0x28] sm:$0xff]
      %v357 = vld [vmem:[#allocation2 + $0x30] sm:$0xff]
      %v358 = vld [vmem:[#allocation2 + $0x38] sm:$0xff]
      %v359 = vld [vmem:[#allocation2 + $0x40] sm:$0xff]
      %v360 = vld [vmem:[#allocation2 + $0x48] sm:$0xff]
      %v361 = vld [vmem:[#allocation2 + $0x50] sm:$0xff]
      %v362 = vld [vmem:[#allocation2 + $0x58] sm:$0xff]
      %v363 = vld [vmem:[#allocation2 + $0x60] sm:$0xff]
      %v364 = vld [vmem:[#allocation2 + $0x68] sm:$0xff]
      %v365 = vld [vmem:[#allocation2 + $0x70] sm:$0xff]
      %v366 = vld [vmem:[#allocation2 + $0x78] sm:$0xff]
      %v367 = vld [vmem:[#allocation8] sm:$0x1]
      %v369 = vlaneseq
      %v370 = vshrl.u32 %v369, 7
      %v371 = vsub.s32 0, %v370
      %v372 = vrot.slane %v367, %v371
      %v374 = vadd.f32 %v351, %v372
      %v375 = vadd.f32 %v352, %v372
      %v376 = vadd.f32 %v353, %v372
      %v377 = vadd.f32 %v354, %v372
      %v378 = vadd.f32 %v355, %v372
      %v379 = vadd.f32 %v356, %v372
      %v380 = vadd.f32 %v357, %v372
      %v381 = vadd.f32 %v358, %v372
      %v382 = vadd.f32 %v359, %v372
      %v383 = vadd.f32 %v360, %v372
      %v384 = vadd.f32 %v361, %v372
      %v385 = vadd.f32 %v362, %v372
      %v386 = vadd.f32 %v363, %v372
      %v387 = vadd.f32 %v364, %v372
      %v388 = vadd.f32 %v365, %v372
      %v389 = vadd.f32 %v366, %v372
      %390 = vst [vmem:[#allocation9] sm:$0xff] %v374
      %391 = vst [vmem:[#allocation9 + $0x8] sm:$0xff] %v375
      %392 = vst [vmem:[#allocation9 + $0x10] sm:$0xff] %v376
      %393 = vst [vmem:[#allocation9 + $0x18] sm:$0xff] %v377
      %394 = vst [vmem:[#allocation9 + $0x20] sm:$0xff] %v378
      %395 = vst [vmem:[#allocation9 + $0x28] sm:$0xff] %v379
      %396 = vst [vmem:[#allocation9 + $0x30] sm:$0xff] %v380
      %397 = vst [vmem:[#allocation9 + $0x38] sm:$0xff] %v381
      %398 = vst [vmem:[#allocation9 + $0x40] sm:$0xff] %v382
      %399 = vst [vmem:[#allocation9 + $0x48] sm:$0xff] %v383
      %400 = vst [vmem:[#allocation9 + $0x50] sm:$0xff] %v384
      %401 = vst [vmem:[#allocation9 + $0x58] sm:$0xff] %v385
      %402 = vst [vmem:[#allocation9 + $0x60] sm:$0xff] %v386
      %403 = vst [vmem:[#allocation9 + $0x68] sm:$0xff] %v387
      %404 = vst [vmem:[#allocation9 + $0x70] sm:$0xff] %v388
      %405 = vst [vmem:[#allocation9 + $0x78] sm:$0xff] %v389
    $region33: #{convstem_forward.9} parent=1 // pred_fallthru
      _
    // Predicated region
    $region34: #{convstem_forward.9} parent=1 // pred_check
      _
    $region35: #{convstem_forward.9} parent=1 // pred_check_branch
      %407 = sbr.rel (0) target = $region37
    $region36: #{convstem_forward.9} parent=1 // pred_region
      %s409 = ssub.s32 2048, 2048
      %410 = vsyncadd [#allocation5], %s409
      %s411 = sshll.u32 [#allocation9], 4
      %s412 = int_to_ptr.vmem [resolvable:$true] %s411
      %417 = dma.vmem_to_hbm [thread:$0]  %s412, 2048, %s3, [#allocation5], 128, 128, 8
    $region37: #{convstem_forward.9} parent=1 // pred_fallthru
      _
    // Predicated region
    $region38: #{convstem_forward.9} parent=1 // pred_check
      _
    $region39: #{convstem_forward.9} parent=1 // pred_check_branch
      %419 = sbr.rel (0) target = $region41
    $region40: #{convstem_forward.9} parent=1 // pred_region
      %420 = dma.done [#allocation5], 2048
    $region41: #{convstem_forward.9} parent=1 // pred_fallthru
      _
    %421 = vsyncpa [#allocation4], 1
    %422 = vsyncpa [#allocation7], 1
    %423 = vsyncpa [#allocation5], 1

</llo_original>
